<compile_context>
chip_gen: v6e
topology: v6e:2x2x1
jax: 0.10.0
libtpu: 0.0.40
codegen_flags: <defaults>
</compile_context>

<pallas_src>
import functools

import jax
import jax.numpy as jnp
from jax.experimental import pallas as pl
from jax.experimental.pallas import tpu as pltpu

# ----------------------------------------------------------------------------
# Tiny yolov3-like cfg (exercises conv / shortcut / route / upsample / yolo).
# TODO(synk): the original code reads yolov3.cfg from disk; we embed a small
# structurally-equivalent cfg here instead (no file I/O allowed).
# ----------------------------------------------------------------------------
CFG = """
[net]
height=16
width=16
channels=4

[convolutional]
batch_normalize=1
filters=8
size=3
stride=1
pad=1
activation=leaky

[convolutional]
batch_normalize=1
filters=16
size=3
stride=2
pad=1
activation=leaky

[convolutional]
batch_normalize=1
filters=16
size=3
stride=1
pad=1
activation=leaky

[shortcut]
from=-2
activation=linear

[convolutional]
batch_normalize=1
filters=32
size=3
stride=2
pad=1
activation=leaky

[convolutional]
size=1
stride=1
pad=1
filters=21
activation=linear

[yolo]
mask=0,1,2
anchors=2,3, 4,5, 6,8, 9,10, 12,14, 16,18
classes=2
num=6

[route]
layers=-3

[convolutional]
batch_normalize=1
filters=16
size=1
stride=1
pad=1
activation=leaky

[upsample]
stride=2

[route]
layers=-1, 3

[convolutional]
size=1
stride=1
pad=1
filters=21
activation=linear

[yolo]
mask=3,4,5
anchors=2,3, 4,5, 6,8, 9,10, 12,14, 16,18
classes=2
num=6
"""


def parse_cfg_string(cfg):
    lines = cfg.split("\n")
    lines = [x for x in lines if len(x) > 0]
    lines = [x for x in lines if x.lstrip()[0] != "#"]
    lines = [x.rstrip().lstrip() for x in lines]
    block = {}
    blocks = []
    for line in lines:
        if line[0] == "[":
            if len(block) != 0:
                blocks.append(block)
                block = {}
            block["type"] = line[1:-1].rstrip()
        else:
            key, value = line.split("=")
            block[key.rstrip()] = value.lstrip()
    blocks.append(block)
    return blocks


# ----------------------------------------------------------------------------
# Pallas kernels
# ----------------------------------------------------------------------------
LANES = 128  # lane width; K and Cout are zero-padded up to a multiple of this


def _round_up(n, m):
    return ((n + m - 1) // m) * m


def _conv_mm_kernel(leaky, has_res, *refs):
    # (Mpad, Kpad) bf16 @ (Kpad, Cpad) bf16 on the MXU with f32 accumulation.
    # BN scale is folded into the weights; bias + LeakyReLU (+ optional fused
    # residual add) happen here in the epilogue, then store in o_ref's dtype.
    if has_res:
        p_ref, w_ref, b_ref, r_ref, o_ref = refs
    else:
        p_ref, w_ref, b_ref, o_ref = refs
        r_ref = None
    acc = jnp.dot(p_ref[...], w_ref[...], preferred_element_type=jnp.float32)
    acc = acc + b_ref[...]
    if leaky:
        acc = jnp.where(acc > 0.0, acc, 0.1 * acc)
    if has_res:
        acc = acc + r_ref[...].astype(jnp.float32)
    o_ref[...] = acc.astype(o_ref.dtype)


def prepare_conv_weights(w, scale, bias):
    """Hoisted (build-time) weight prep: transpose, BN fold, pad, bf16 cast.

    (Cout, Cin, kh, kw) -> (kh, kw, Cin, Cout) -> (K, Cout), matching the im2col
    K-ordering (kh, kw, cin); fold BN scale; zero-pad K and Cout to multiples of
    128 so both matmul operands are lane/sublane dense.
    """
    Cout, Cin, k, _ = w.shape
    K = Cin * k * k
    wmat = jnp.transpose(w, (2, 3, 1, 0)).reshape(K, Cout)
    wmat = wmat * scale.reshape(1, Cout).astype(jnp.float32)
    bias2 = bias.reshape(1, Cout).astype(jnp.float32)
    Kpad = _round_up(K, LANES)
    Cpad = _round_up(Cout, LANES)
    wmat = jnp.pad(wmat, ((0, Kpad - K), (0, Cpad - Cout)))
    bias2 = jnp.pad(bias2, ((0, 0), (0, Cpad - Cout)))
    return wmat.astype(jnp.bfloat16), bias2


def conv2d_pallas(x, wmat_lp, bias2, *, k, stride, pad, leaky, Cout,
                  out_dtype=jnp.bfloat16, residual=None):
    """NHWC conv (PyTorch Conv2d semantics, eval-mode BN folded) via im2col matmul.

    Optionally fuses a residual (shortcut) add into the epilogue.
    """
    B, H, W, Cin = x.shape
    Kpad, Cpad = wmat_lp.shape
    Hout = (H + 2 * pad - k) // stride + 1
    Wout = (W + 2 * pad - k) // stride + 1

    xp = jnp.pad(x, ((0, 0), (pad, pad), (pad, pad), (0, 0)))
    # im2col stays channel-last (K order = kh, kw, cin) -> no big 6-D transpose.
    # Under jit these strided slices/concat fuse into cheap XLA glue at toy sizes.
    # TODO(synk): at real YOLO sizes replace this HBM-materialized im2col with an
    # in-kernel implicit GEMM (k*k shifted matmuls accumulating into VMEM scratch)
    # plus a K grid axis ("arbitrary") with a VMEM f32 accumulator, budgeting
    # tiles against v7x's 64 MiB VMEM (vmem_limit_bytes per generation).
    slices = []
    for kh in range(k):
        for kw in range(k):
            slices.append(
                xp[:, kh:kh + (Hout - 1) * stride + 1:stride,
                   kw:kw + (Wout - 1) * stride + 1:stride, :])
    patches = slices[0] if len(slices) == 1 else jnp.concatenate(slices, axis=-1)

    M = B * Hout * Wout
    K = Cin * k * k
    patches = patches.reshape(M, K).astype(jnp.bfloat16)

    # Pad M to a bf16 sublane multiple and K up to the (pre-padded) weight K.
    # Zero-padded K columns hit zero weight rows -> no effect on the result.
    Mpad = _round_up(M, 16)
    patches = jnp.pad(patches, ((0, Mpad - M), (0, Kpad - K)))

    args = [patches, wmat_lp, bias2]
    in_specs = [
        pl.BlockSpec((Mpad, Kpad), lambda i: (0, 0)),
        pl.BlockSpec((Kpad, Cpad), lambda i: (0, 0)),
        pl.BlockSpec((1, Cpad), lambda i: (0, 0)),
    ]
    has_res = residual is not None
    res_bytes = 0
    if has_res:
        res = residual.reshape(M, Cout)
        res = jnp.pad(res, ((0, Mpad - M), (0, Cpad - Cout)))
        args.append(res)
        in_specs.append(pl.BlockSpec((Mpad, Cpad), lambda i: (0, 0)))
        res_bytes = Mpad * Cpad * jnp.dtype(res.dtype).itemsize

    out_bytes = Mpad * Cpad * jnp.dtype(out_dtype).itemsize
    in_bytes = Mpad * Kpad * 2 + Kpad * Cpad * 2 + Cpad * 4 + res_bytes

    # Single grid step: these layers are a handful of vmatmuls each, so the fixed
    # ~0.35us/step overhead dominates any split; whole working set is << VMEM.
    out = pl.pallas_call(
        functools.partial(_conv_mm_kernel, leaky, has_res),
        out_shape=jax.ShapeDtypeStruct((Mpad, Cpad), out_dtype),
        grid=(1,),
        in_specs=in_specs,
        out_specs=pl.BlockSpec((Mpad, Cpad), lambda i: (0, 0)),
        compiler_params=pltpu.CompilerParams(
            dimension_semantics=("arbitrary",)),
        cost_estimate=pl.CostEstimate(
            flops=2 * Mpad * Kpad * Cpad,
            transcendentals=0,
            bytes_accessed=in_bytes + out_bytes),
    )(*args)

    return out[:M, :Cout].reshape(B, Hout, Wout, Cout)


def _add_kernel(a_ref, b_ref, o_ref):
    o_ref[...] = a_ref[...] + b_ref[...]


def add_pallas(a, b):
    """Fallback shortcut add (only used when the add cannot be fused into a conv)."""
    shape = a.shape
    dtype = a.dtype
    n = a.size
    rows = -(-n // LANES)
    rows_pad = _round_up(rows, 16)
    total = rows_pad * LANES
    af = jnp.pad(a.reshape(-1), (0, total - n)).reshape(rows_pad, LANES)
    bf = jnp.pad(b.astype(dtype).reshape(-1), (0, total - n)).reshape(rows_pad, LANES)
    out = pl.pallas_call(
        _add_kernel,
        out_shape=jax.ShapeDtypeStruct((rows_pad, LANES), dtype),
        grid=(1,),
        in_specs=[pl.BlockSpec((rows_pad, LANES), lambda i: (0, 0)),
                  pl.BlockSpec((rows_pad, LANES), lambda i: (0, 0))],
        out_specs=pl.BlockSpec((rows_pad, LANES), lambda i: (0, 0)),
    )(af, bf)
    return out.reshape(-1)[:n].reshape(shape)


# ----------------------------------------------------------------------------
# Non-kernel glue: upsample, yolo decode (all NHWC inside the network)
# ----------------------------------------------------------------------------
def upsample_nearest2(x):
    # nn.Upsample(scale_factor=2, mode='nearest') on NHWC
    return jnp.repeat(jnp.repeat(x, 2, axis=1), 2, axis=2)


def predict_transform(pred_nhwc, inp_dim, anchors, num_classes):
    """JAX port of the standard YOLO predict_transform, taking NHWC input.

    NHWC (B, G, G, A*attrs) reshapes directly to the reference row ordering
    (B, G*G*A, attrs) -- no transpose needed.
    """
    B, G, _, _ = pred_nhwc.shape
    stride = inp_dim // G
    grid_size = G
    bbox_attrs = 5 + num_classes
    num_anchors = len(anchors)

    p = pred_nhwc.astype(jnp.float32).reshape(
        B, grid_size * grid_size * num_anchors, bbox_attrs)

    anchors_s = jnp.array([(a[0] / stride, a[1] / stride) for a in anchors],
                          dtype=jnp.float32)                       # (A, 2)

    g = jnp.arange(grid_size, dtype=jnp.float32)
    xo, yo = jnp.meshgrid(g, g)                                    # 'xy' indexing
    xy_off = jnp.stack([xo.reshape(-1), yo.reshape(-1)], axis=1)   # (G*G, 2)
    xy_off = jnp.repeat(xy_off, num_anchors, axis=0)[None]         # (1, G*G*A, 2)

    anch = jnp.tile(anchors_s, (grid_size * grid_size, 1))[None]   # (1, G*G*A, 2)

    xy = jax.nn.sigmoid(p[:, :, 0:2]) + xy_off
    wh = jnp.exp(p[:, :, 2:4]) * anch
    obj = jax.nn.sigmoid(p[:, :, 4:5])
    cls = jax.nn.sigmoid(p[:, :, 5:5 + num_classes])
    box = jnp.concatenate([xy, wh], axis=2) * float(stride)
    return jnp.concatenate([box, obj, cls], axis=2)


# ----------------------------------------------------------------------------
# Parameter construction (mirrors create_modules shape logic) + forward pass
# ----------------------------------------------------------------------------
def build_params(blocks, key):
    """Returns (statics, arrays): per-layer python metadata and device arrays.

    Weight prep (transpose, BN fold, Cout/K padding, bf16 cast) is done here once
    so the jitted forward only consumes ready-to-matmul operands.
    """
    net_info = blocks[0]
    modules = blocks[1:]
    prev_filters = int(net_info.get("channels", 3))
    filters = prev_filters
    output_filters = []
    statics = []
    arrays = []
    for index, b in enumerate(modules):
        st = None
        ar = None
        t = b["type"]
        if t == "convolutional":
            try:
                batch_normalize = int(b["batch_normalize"])
            except KeyError:
                batch_normalize = 0
            filters = int(b["filters"])
            k = int(b["size"])
            stride = int(b["stride"])
            pad = (k - 1) // 2 if int(b["pad"]) else 0
            key, k1, k2, k3, k4, k5, k6 = jax.random.split(key, 7)
            fan_in = prev_filters * k * k
            w = jax.random.normal(k1, (filters, prev_filters, k, k),
                                  jnp.float32) * (1.0 / fan_in ** 0.5)
            if batch_normalize:
                gamma = 1.0 + 0.1 * jax.random.normal(k2, (filters,), jnp.float32)
                beta = 0.1 * jax.random.normal(k3, (filters,), jnp.float32)
                rmean = 0.1 * jax.random.normal(k4, (filters,), jnp.float32)
                rvar = 1.0 + 0.1 * jnp.abs(jax.random.normal(k5, (filters,), jnp.float32))
                eps = 1e-5  # PyTorch BatchNorm2d default (eval-mode running stats)
                scale = gamma / jnp.sqrt(rvar + eps)
                bias = beta - rmean * scale
            else:
                scale = jnp.ones((filters,), jnp.float32)
                bias = 0.1 * jax.random.normal(k6, (filters,), jnp.float32)
            wmat_lp, bias2 = prepare_conv_weights(w, scale, bias)
            is_head = (index + 1 < len(modules)
                       and modules[index + 1]["type"] == "yolo")
            st = dict(k=k, stride=stride, pad=pad,
                      leaky=(b["activation"] == "leaky"),
                      Cout=filters, is_head=is_head)
            ar = dict(wmat=wmat_lp, bias=bias2)
        elif t == "route":
            layers = [int(a) for a in b["layers"].split(",")]
            start = layers[0]
            end = layers[1] if len(layers) > 1 else 0
            if start > 0:
                start -= index
            if end > 0:
                end -= index
            if end < 0:
                filters = output_filters[index + start] + output_filters[index + end]
            else:
                filters = output_filters[index + start]
        # upsample / shortcut / yolo: no params, `filters` unchanged
        statics.append(st)
        arrays.append(ar)
        prev_filters = filters
        output_filters.append(filters)
    return statics, arrays


def _compute_readers(modules):
    """Which later layers read each layer's output (for safe shortcut fusion)."""
    readers = {i: set() for i in range(len(modules))}
    for i, m in enumerate(modules):
        t = m["type"]
        if t in ("convolutional", "upsample", "yolo"):
            if i > 0:
                readers[i - 1].add(i)
        elif t == "shortcut":
            readers[i - 1].add(i)
            readers[i + int(m["from"])].add(i)
        elif t == "route":
            layers = [int(a) for a in m["layers"].split(",")]
            for l in layers:
                idx = i + l if l < 0 else l
                readers[idx].add(i)
    return readers


def darknet_forward(blocks, statics, arrays, x_nchw):
    net_info = blocks[0]
    modules = blocks[1:]
    readers = _compute_readers(modules)
    # Single layout change at the boundary: everything inside runs NHWC.
    x = jnp.transpose(x_nchw, (0, 2, 3, 1))
    outputs = {}
    fused_shortcuts = set()
    write = False
    detections = None
    for i, module in enumerate(modules):
        t = module["type"]
        if t == "convolutional":
            st = statics[i]
            ar = arrays[i]
            residual = None
            nxt = i + 1
            # Fuse a following linear shortcut into this conv's epilogue, but only
            # if nothing else reads the pre-add conv output (semantics preserved).
            if (nxt < len(modules)
                    and modules[nxt]["type"] == "shortcut"
                    and modules[nxt].get("activation", "linear") == "linear"
                    and readers.get(i, set()) == {nxt}):
                j = nxt + int(modules[nxt]["from"])
                if 0 <= j < i and outputs[j].shape[-1] == st["Cout"]:
                    residual = outputs[j]
                    fused_shortcuts.add(nxt)
            # bf16 intermediate activations; f32 only for the detection heads.
            out_dtype = jnp.float32 if st["is_head"] else jnp.bfloat16
            x = conv2d_pallas(x, ar["wmat"], ar["bias"],
                              k=st["k"], stride=st["stride"], pad=st["pad"],
                              leaky=st["leaky"], Cout=st["Cout"],
                              out_dtype=out_dtype, residual=residual)
        elif t == "upsample":
            x = upsample_nearest2(x)
        elif t == "route":
            layers = [int(a) for a in module["layers"].split(",")]
            if layers[0] > 0:
                layers[0] -= i
            if len(layers) == 1:
                x = outputs[i + layers[0]]
            else:
                if layers[1] > 0:
                    layers[1] -= i
                map1 = outputs[i + layers[0]]
                map2 = outputs[i + layers[1]]
                x = jnp.concatenate([map1, map2], axis=-1)  # channel concat (NHWC)
        elif t == "shortcut":
            if i in fused_shortcuts:
                x = outputs[i - 1]  # already contains the fused residual add
            else:
                frm = int(module["from"])
                x = add_pallas(outputs[i - 1], outputs[i + frm])
        elif t == "yolo":
            mask = [int(m) for m in module["mask"].split(",")]
            anch = [int(a) for a in module["anchors"].split(",")]
            anch = [(anch[j], anch[j + 1]) for j in range(0, len(anch), 2)]
            anch = [anch[m] for m in mask]
            inp_dim = int(net_info["height"])
            num_classes = int(module["classes"])
            x = predict_transform(x, inp_dim, anch, num_classes)
            if not write:
                detections = x
                write = True
            else:
                detections = jnp.concatenate([detections, x], axis=1)
        outputs[i] = x
    return detections


if __name__ == "__main__":
    blocks = parse_cfg_string(CFG)
    key = jax.random.PRNGKey(0)
    kp, kx = jax.random.split(key)
    statics, arrays = build_params(blocks, kp)

    B = 2
    C = int(blocks[0]["channels"])   # 4
    H = int(blocks[0]["height"])     # 16
    W = int(blocks[0]["width"])      # 16
    x = jax.random.normal(kx, (B, C, H, W), jnp.float32)

    # Whole forward jitted: all per-layer XLA glue + pallas_calls compile into one
    # executable (cfg structure and per-layer metadata are static via the closure).
    fwd = jax.jit(functools.partial(darknet_forward, blocks, statics))

    det = fwd(arrays, x)
    det = jax.block_until_ready(det)

    # yolo head 1: 4x4 grid * 3 anchors = 48 rows; head 2: 8x8 * 3 = 192 rows
    assert det.shape == (B, 48 + 192, 5 + 2), det.shape
    assert bool(jnp.all(jnp.isfinite(det)))
    print("KERNEL_OK")
</pallas_src>

<mosaic_0001>
module attributes {stable_mosaic.version = 11 : i64} {
  func.func @_conv_mm_kernel(%arg0: i32, %arg1: memref<512x128xbf16, #tpu.memory_space<vmem>>, %arg2: memref<128x128xbf16, #tpu.memory_space<vmem>>, %arg3: memref<1x128xf32, #tpu.memory_space<vmem>>, %arg4: memref<512x128xbf16, #tpu.memory_space<vmem>>) attributes {dimension_semantics = [#tpu.dimension_semantics<arbitrary>], iteration_bounds = array<i64: 1>, scalar_prefetch = 0 : i64, scratch_operands = 0 : i64, tpu.core_type = #tpu.core_type<tc>, window_params = [{pipeline_mode = #tpu.pipeline_mode<synchronous>, transform_indices = @transform_0, window_bounds = array<i64: 512, 128>}, {pipeline_mode = #tpu.pipeline_mode<synchronous>, transform_indices = @transform_1, window_bounds = array<i64: 128, 128>}, {pipeline_mode = #tpu.pipeline_mode<synchronous>, transform_indices = @transform_2, window_bounds = array<i64: 1, 128>}, {pipeline_mode = #tpu.pipeline_mode<synchronous>, transform_indices = @transform_3, window_bounds = array<i64: 512, 128>}]} {
    %c0 = arith.constant 0 : index
    %c0_0 = arith.constant 0 : index
    %0 = vector.load %arg1[%c0, %c0_0] : memref<512x128xbf16, #tpu.memory_space<vmem>>, vector<512x128xbf16>
    %c0_1 = arith.constant 0 : index
    %c0_2 = arith.constant 0 : index
    %1 = vector.load %arg2[%c0_1, %c0_2] : memref<128x128xbf16, #tpu.memory_space<vmem>>, vector<128x128xbf16>
    %cst = arith.constant dense<0.000000e+00> : vector<512x128xf32>
    %2 = tpu.matmul %0, %1, %cst {dimension_numbers = #tpu.dot_dimension_numbers<[1], [0], [0], [1], [0, 0, 1, 1], [], []>} : vector<512x128xbf16>, vector<128x128xbf16>, vector<512x128xf32> -> vector<512x128xf32>
    %c0_3 = arith.constant 0 : index
    %c0_4 = arith.constant 0 : index
    %3 = vector.load %arg3[%c0_3, %c0_4] : memref<1x128xf32, #tpu.memory_space<vmem>>, vector<1x128xf32>
    %4 = vector.broadcast %3 : vector<1x128xf32> to vector<512x128xf32>
    %5 = arith.addf %2, %4 : vector<512x128xf32>
    %cst_5 = arith.constant 0.000000e+00 : f32
    %6 = vector.broadcast %cst_5 : f32 to vector<512x128xf32>
    %7 = arith.cmpf ogt, %5, %6 : vector<512x128xf32>
    %cst_6 = arith.constant 1.000000e-01 : f32
    %8 = vector.broadcast %cst_6 : f32 to vector<512x128xf32>
    %9 = arith.mulf %8, %5 : vector<512x128xf32>
    %10 = arith.select %7, %5, %9 : vector<512x128xi1>, vector<512x128xf32>
    %11 = arith.truncf %10 : vector<512x128xf32> to vector<512x128xbf16>
    %c0_7 = arith.constant 0 : index
    %c0_8 = arith.constant 0 : index
    %12 = vector.load %arg4[%c0_7, %c0_8] : memref<512x128xbf16, #tpu.memory_space<vmem>>, vector<512x128xbf16>
    tpu.vector_store %arg4[%c0_7, %c0_8], %11 {strides = array<i32>} : memref<512x128xbf16, #tpu.memory_space<vmem>>, vector<512x128xbf16>,
    return
  }
  func.func @transform_0(%arg0: i32) -> (i32, i32) {
    %c0_i32 = arith.constant 0 : i32
    %c0_i32_0 = arith.constant 0 : i32
    %c0_i32_1 = arith.constant 0 : i32
    return %c0_i32, %c0_i32_0 : i32, i32
  }
  func.func @transform_1(%arg0: i32) -> (i32, i32) {
    %c0_i32 = arith.constant 0 : i32
    %c0_i32_0 = arith.constant 0 : i32
    %c0_i32_1 = arith.constant 0 : i32
    return %c0_i32, %c0_i32_0 : i32, i32
  }
  func.func @transform_2(%arg0: i32) -> (i32, i32) {
    %c0_i32 = arith.constant 0 : i32
    %c0_i32_0 = arith.constant 0 : i32
    %c0_i32_1 = arith.constant 0 : i32
    return %c0_i32, %c0_i32_0 : i32, i32
  }
  func.func @transform_3(%arg0: i32) -> (i32, i32) {
    %c0_i32 = arith.constant 0 : i32
    %c0_i32_0 = arith.constant 0 : i32
    %c0_i32_1 = arith.constant 0 : i32
    return %c0_i32, %c0_i32_0 : i32, i32
  }
}

module attributes {stable_mosaic.version = 11 : i64} {
  func.func @_conv_mm_kernel(%arg0: i32, %arg1: memref<128x128xbf16, #tpu.memory_space<vmem>>, %arg2: memref<128x128xbf16, #tpu.memory_space<vmem>>, %arg3: memref<1x128xf32, #tpu.memory_space<vmem>>, %arg4: memref<128x128xbf16, #tpu.memory_space<vmem>>) attributes {dimension_semantics = [#tpu.dimension_semantics<arbitrary>], iteration_bounds = array<i64: 1>, scalar_prefetch = 0 : i64, scratch_operands = 0 : i64, tpu.core_type = #tpu.core_type<tc>, window_params = [{pipeline_mode = #tpu.pipeline_mode<synchronous>, transform_indices = @transform_0, window_bounds = array<i64: 128, 128>}, {pipeline_mode = #tpu.pipeline_mode<synchronous>, transform_indices = @transform_1, window_bounds = array<i64: 128, 128>}, {pipeline_mode = #tpu.pipeline_mode<synchronous>, transform_indices = @transform_2, window_bounds = array<i64: 1, 128>}, {pipeline_mode = #tpu.pipeline_mode<synchronous>, transform_indices = @transform_3, window_bounds = array<i64: 128, 128>}]} {
    %c0 = arith.constant 0 : index
    %c0_0 = arith.constant 0 : index
    %0 = vector.load %arg1[%c0, %c0_0] : memref<128x128xbf16, #tpu.memory_space<vmem>>, vector<128x128xbf16>
    %c0_1 = arith.constant 0 : index
    %c0_2 = arith.constant 0 : index
    %1 = vector.load %arg2[%c0_1, %c0_2] : memref<128x128xbf16, #tpu.memory_space<vmem>>, vector<128x128xbf16>
    %cst = arith.constant dense<0.000000e+00> : vector<128x128xf32>
    %2 = tpu.matmul %0, %1, %cst {dimension_numbers = #tpu.dot_dimension_numbers<[1], [0], [0], [1], [0, 0, 1, 1], [], []>} : vector<128x128xbf16>, vector<128x128xbf16>, vector<128x128xf32> -> vector<128x128xf32>
    %c0_3 = arith.constant 0 : index
    %c0_4 = arith.constant 0 : index
    %3 = vector.load %arg3[%c0_3, %c0_4] : memref<1x128xf32, #tpu.memory_space<vmem>>, vector<1x128xf32>
    %4 = vector.broadcast %3 : vector<1x128xf32> to vector<128x128xf32>
    %5 = arith.addf %2, %4 : vector<128x128xf32>
    %cst_5 = arith.constant 0.000000e+00 : f32
    %6 = vector.broadcast %cst_5 : f32 to vector<128x128xf32>
    %7 = arith.cmpf ogt, %5, %6 : vector<128x128xf32>
    %cst_6 = arith.constant 1.000000e-01 : f32
    %8 = vector.broadcast %cst_6 : f32 to vector<128x128xf32>
    %9 = arith.mulf %8, %5 : vector<128x128xf32>
    %10 = arith.select %7, %5, %9 : vector<128x128xi1>, vector<128x128xf32>
    %11 = arith.truncf %10 : vector<128x128xf32> to vector<128x128xbf16>
    %c0_7 = arith.constant 0 : index
    %c0_8 = arith.constant 0 : index
    %12 = vector.load %arg4[%c0_7, %c0_8] : memref<128x128xbf16, #tpu.memory_space<vmem>>, vector<128x128xbf16>
    tpu.vector_store %arg4[%c0_7, %c0_8], %11 {strides = array<i32>} : memref<128x128xbf16, #tpu.memory_space<vmem>>, vector<128x128xbf16>,
    return
  }
  func.func @transform_0(%arg0: i32) -> (i32, i32) {
    %c0_i32 = arith.constant 0 : i32
    %c0_i32_0 = arith.constant 0 : i32
    %c0_i32_1 = arith.constant 0 : i32
    return %c0_i32, %c0_i32_0 : i32, i32
  }
  func.func @transform_1(%arg0: i32) -> (i32, i32) {
    %c0_i32 = arith.constant 0 : i32
    %c0_i32_0 = arith.constant 0 : i32
    %c0_i32_1 = arith.constant 0 : i32
    return %c0_i32, %c0_i32_0 : i32, i32
  }
  func.func @transform_2(%arg0: i32) -> (i32, i32) {
    %c0_i32 = arith.constant 0 : i32
    %c0_i32_0 = arith.constant 0 : i32
    %c0_i32_1 = arith.constant 0 : i32
    return %c0_i32, %c0_i32_0 : i32, i32
  }
  func.func @transform_3(%arg0: i32) -> (i32, i32) {
    %c0_i32 = arith.constant 0 : i32
    %c0_i32_0 = arith.constant 0 : i32
    %c0_i32_1 = arith.constant 0 : i32
    return %c0_i32, %c0_i32_0 : i32, i32
  }
}

module attributes {stable_mosaic.version = 11 : i64} {
  func.func @_conv_mm_kernel(%arg0: i32, %arg1: memref<128x256xbf16, #tpu.memory_space<vmem>>, %arg2: memref<256x128xbf16, #tpu.memory_space<vmem>>, %arg3: memref<1x128xf32, #tpu.memory_space<vmem>>, %arg4: memref<128x128xbf16, #tpu.memory_space<vmem>>, %arg5: memref<128x128xbf16, #tpu.memory_space<vmem>>) attributes {dimension_semantics = [#tpu.dimension_semantics<arbitrary>], iteration_bounds = array<i64: 1>, scalar_prefetch = 0 : i64, scratch_operands = 0 : i64, tpu.core_type = #tpu.core_type<tc>, window_params = [{pipeline_mode = #tpu.pipeline_mode<synchronous>, transform_indices = @transform_0, window_bounds = array<i64: 128, 256>}, {pipeline_mode = #tpu.pipeline_mode<synchronous>, transform_indices = @transform_1, window_bounds = array<i64: 256, 128>}, {pipeline_mode = #tpu.pipeline_mode<synchronous>, transform_indices = @transform_2, window_bounds = array<i64: 1, 128>}, {pipeline_mode = #tpu.pipeline_mode<synchronous>, transform_indices = @transform_3, window_bounds = array<i64: 128, 128>}, {pipeline_mode = #tpu.pipeline_mode<synchronous>, transform_indices = @transform_4, window_bounds = array<i64: 128, 128>}]} {
    %c0 = arith.constant 0 : index
    %c0_0 = arith.constant 0 : index
    %0 = vector.load %arg1[%c0, %c0_0] : memref<128x256xbf16, #tpu.memory_space<vmem>>, vector<128x256xbf16>
    %c0_1 = arith.constant 0 : index
    %c0_2 = arith.constant 0 : index
    %1 = vector.load %arg2[%c0_1, %c0_2] : memref<256x128xbf16, #tpu.memory_space<vmem>>, vector<256x128xbf16>
    %cst = arith.constant dense<0.000000e+00> : vector<128x128xf32>
    %2 = tpu.matmul %0, %1, %cst {dimension_numbers = #tpu.dot_dimension_numbers<[1], [0], [0], [1], [0, 0, 1, 1], [], []>} : vector<128x256xbf16>, vector<256x128xbf16>, vector<128x128xf32> -> vector<128x128xf32>
    %c0_3 = arith.constant 0 : index
    %c0_4 = arith.constant 0 : index
    %3 = vector.load %arg3[%c0_3, %c0_4] : memref<1x128xf32, #tpu.memory_space<vmem>>, vector<1x128xf32>
    %4 = vector.broadcast %3 : vector<1x128xf32> to vector<128x128xf32>
    %5 = arith.addf %2, %4 : vector<128x128xf32>
    %cst_5 = arith.constant 0.000000e+00 : f32
    %6 = vector.broadcast %cst_5 : f32 to vector<128x128xf32>
    %7 = arith.cmpf ogt, %5, %6 : vector<128x128xf32>
    %cst_6 = arith.constant 1.000000e-01 : f32
    %8 = vector.broadcast %cst_6 : f32 to vector<128x128xf32>
    %9 = arith.mulf %8, %5 : vector<128x128xf32>
    %10 = arith.select %7, %5, %9 : vector<128x128xi1>, vector<128x128xf32>
    %c0_7 = arith.constant 0 : index
    %c0_8 = arith.constant 0 : index
    %11 = vector.load %arg4[%c0_7, %c0_8] : memref<128x128xbf16, #tpu.memory_space<vmem>>, vector<128x128xbf16>
    %12 = arith.extf %11 : vector<128x128xbf16> to vector<128x128xf32>
    %13 = arith.addf %10, %12 : vector<128x128xf32>
    %14 = arith.truncf %13 : vector<128x128xf32> to vector<128x128xbf16>
    %c0_9 = arith.constant 0 : index
    %c0_10 = arith.constant 0 : index
    %15 = vector.load %arg5[%c0_9, %c0_10] : memref<128x128xbf16, #tpu.memory_space<vmem>>, vector<128x128xbf16>
    tpu.vector_store %arg5[%c0_9, %c0_10], %14 {strides = array<i32>} : memref<128x128xbf16, #tpu.memory_space<vmem>>, vector<128x128xbf16>,
    return
  }
  func.func @transform_0(%arg0: i32) -> (i32, i32) {
    %c0_i32 = arith.constant 0 : i32
    %c0_i32_0 = arith.constant 0 : i32
    %c0_i32_1 = arith.constant 0 : i32
    return %c0_i32, %c0_i32_0 : i32, i32
  }
  func.func @transform_1(%arg0: i32) -> (i32, i32) {
    %c0_i32 = arith.constant 0 : i32
    %c0_i32_0 = arith.constant 0 : i32
    %c0_i32_1 = arith.constant 0 : i32
    return %c0_i32, %c0_i32_0 : i32, i32
  }
  func.func @transform_2(%arg0: i32) -> (i32, i32) {
    %c0_i32 = arith.constant 0 : i32
    %c0_i32_0 = arith.constant 0 : i32
    %c0_i32_1 = arith.constant 0 : i32
    return %c0_i32, %c0_i32_0 : i32, i32
  }
  func.func @transform_3(%arg0: i32) -> (i32, i32) {
    %c0_i32 = arith.constant 0 : i32
    %c0_i32_0 = arith.constant 0 : i32
    %c0_i32_1 = arith.constant 0 : i32
    return %c0_i32, %c0_i32_0 : i32, i32
  }
  func.func @transform_4(%arg0: i32) -> (i32, i32) {
    %c0_i32 = arith.constant 0 : i32
    %c0_i32_0 = arith.constant 0 : i32
    %c0_i32_1 = arith.constant 0 : i32
    return %c0_i32, %c0_i32_0 : i32, i32
  }
}

module attributes {stable_mosaic.version = 11 : i64} {
  func.func @_conv_mm_kernel(%arg0: i32, %arg1: memref<32x256xbf16, #tpu.memory_space<vmem>>, %arg2: memref<256x128xbf16, #tpu.memory_space<vmem>>, %arg3: memref<1x128xf32, #tpu.memory_space<vmem>>, %arg4: memref<32x128xbf16, #tpu.memory_space<vmem>>) attributes {dimension_semantics = [#tpu.dimension_semantics<arbitrary>], iteration_bounds = array<i64: 1>, scalar_prefetch = 0 : i64, scratch_operands = 0 : i64, tpu.core_type = #tpu.core_type<tc>, window_params = [{pipeline_mode = #tpu.pipeline_mode<synchronous>, transform_indices = @transform_0, window_bounds = array<i64: 32, 256>}, {pipeline_mode = #tpu.pipeline_mode<synchronous>, transform_indices = @transform_1, window_bounds = array<i64: 256, 128>}, {pipeline_mode = #tpu.pipeline_mode<synchronous>, transform_indices = @transform_2, window_bounds = array<i64: 1, 128>}, {pipeline_mode = #tpu.pipeline_mode<synchronous>, transform_indices = @transform_3, window_bounds = array<i64: 32, 128>}]} {
    %c0 = arith.constant 0 : index
    %c0_0 = arith.constant 0 : index
    %0 = vector.load %arg1[%c0, %c0_0] : memref<32x256xbf16, #tpu.memory_space<vmem>>, vector<32x256xbf16>
    %c0_1 = arith.constant 0 : index
    %c0_2 = arith.constant 0 : index
    %1 = vector.load %arg2[%c0_1, %c0_2] : memref<256x128xbf16, #tpu.memory_space<vmem>>, vector<256x128xbf16>
    %cst = arith.constant dense<0.000000e+00> : vector<32x128xf32>
    %2 = tpu.matmul %0, %1, %cst {dimension_numbers = #tpu.dot_dimension_numbers<[1], [0], [0], [1], [0, 0, 1, 1], [], []>} : vector<32x256xbf16>, vector<256x128xbf16>, vector<32x128xf32> -> vector<32x128xf32>
    %c0_3 = arith.constant 0 : index
    %c0_4 = arith.constant 0 : index
    %3 = vector.load %arg3[%c0_3, %c0_4] : memref<1x128xf32, #tpu.memory_space<vmem>>, vector<1x128xf32>
    %4 = vector.broadcast %3 : vector<1x128xf32> to vector<32x128xf32>
    %5 = arith.addf %2, %4 : vector<32x128xf32>
    %cst_5 = arith.constant 0.000000e+00 : f32
    %6 = vector.broadcast %cst_5 : f32 to vector<32x128xf32>
    %7 = arith.cmpf ogt, %5, %6 : vector<32x128xf32>
    %cst_6 = arith.constant 1.000000e-01 : f32
    %8 = vector.broadcast %cst_6 : f32 to vector<32x128xf32>
    %9 = arith.mulf %8, %5 : vector<32x128xf32>
    %10 = arith.select %7, %5, %9 : vector<32x128xi1>, vector<32x128xf32>
    %11 = arith.truncf %10 : vector<32x128xf32> to vector<32x128xbf16>
    %c0_7 = arith.constant 0 : index
    %c0_8 = arith.constant 0 : index
    %12 = vector.load %arg4[%c0_7, %c0_8] : memref<32x128xbf16, #tpu.memory_space<vmem>>, vector<32x128xbf16>
    tpu.vector_store %arg4[%c0_7, %c0_8], %11 {strides = array<i32>} : memref<32x128xbf16, #tpu.memory_space<vmem>>, vector<32x128xbf16>,
    return
  }
  func.func @transform_0(%arg0: i32) -> (i32, i32) {
    %c0_i32 = arith.constant 0 : i32
    %c0_i32_0 = arith.constant 0 : i32
    %c0_i32_1 = arith.constant 0 : i32
    return %c0_i32, %c0_i32_0 : i32, i32
  }
  func.func @transform_1(%arg0: i32) -> (i32, i32) {
    %c0_i32 = arith.constant 0 : i32
    %c0_i32_0 = arith.constant 0 : i32
    %c0_i32_1 = arith.constant 0 : i32
    return %c0_i32, %c0_i32_0 : i32, i32
  }
  func.func @transform_2(%arg0: i32) -> (i32, i32) {
    %c0_i32 = arith.constant 0 : i32
    %c0_i32_0 = arith.constant 0 : i32
    %c0_i32_1 = arith.constant 0 : i32
    return %c0_i32, %c0_i32_0 : i32, i32
  }
  func.func @transform_3(%arg0: i32) -> (i32, i32) {
    %c0_i32 = arith.constant 0 : i32
    %c0_i32_0 = arith.constant 0 : i32
    %c0_i32_1 = arith.constant 0 : i32
    return %c0_i32, %c0_i32_0 : i32, i32
  }
}

module attributes {stable_mosaic.version = 11 : i64} {
  func.func @_conv_mm_kernel(%arg0: i32, %arg1: memref<32x128xbf16, #tpu.memory_space<vmem>>, %arg2: memref<128x128xbf16, #tpu.memory_space<vmem>>, %arg3: memref<1x128xf32, #tpu.memory_space<vmem>>, %arg4: memref<32x128xf32, #tpu.memory_space<vmem>>) attributes {dimension_semantics = [#tpu.dimension_semantics<arbitrary>], iteration_bounds = array<i64: 1>, scalar_prefetch = 0 : i64, scratch_operands = 0 : i64, tpu.core_type = #tpu.core_type<tc>, window_params = [{pipeline_mode = #tpu.pipeline_mode<synchronous>, transform_indices = @transform_0, window_bounds = array<i64: 32, 128>}, {pipeline_mode = #tpu.pipeline_mode<synchronous>, transform_indices = @transform_1, window_bounds = array<i64: 128, 128>}, {pipeline_mode = #tpu.pipeline_mode<synchronous>, transform_indices = @transform_2, window_bounds = array<i64: 1, 128>}, {pipeline_mode = #tpu.pipeline_mode<synchronous>, transform_indices = @transform_3, window_bounds = array<i64: 32, 128>}]} {
    %c0 = arith.constant 0 : index
    %c0_0 = arith.constant 0 : index
    %0 = vector.load %arg1[%c0, %c0_0] : memref<32x128xbf16, #tpu.memory_space<vmem>>, vector<32x128xbf16>
    %c0_1 = arith.constant 0 : index
    %c0_2 = arith.constant 0 : index
    %1 = vector.load %arg2[%c0_1, %c0_2] : memref<128x128xbf16, #tpu.memory_space<vmem>>, vector<128x128xbf16>
    %cst = arith.constant dense<0.000000e+00> : vector<32x128xf32>
    %2 = tpu.matmul %0, %1, %cst {dimension_numbers = #tpu.dot_dimension_numbers<[1], [0], [0], [1], [0, 0, 1, 1], [], []>} : vector<32x128xbf16>, vector<128x128xbf16>, vector<32x128xf32> -> vector<32x128xf32>
    %c0_3 = arith.constant 0 : index
    %c0_4 = arith.constant 0 : index
    %3 = vector.load %arg3[%c0_3, %c0_4] : memref<1x128xf32, #tpu.memory_space<vmem>>, vector<1x128xf32>
    %4 = vector.broadcast %3 : vector<1x128xf32> to vector<32x128xf32>
    %5 = arith.addf %2, %4 : vector<32x128xf32>
    %c0_5 = arith.constant 0 : index
    %c0_6 = arith.constant 0 : index
    %6 = vector.load %arg4[%c0_5, %c0_6] : memref<32x128xf32, #tpu.memory_space<vmem>>, vector<32x128xf32>
    tpu.vector_store %arg4[%c0_5, %c0_6], %5 {strides = array<i32>} : memref<32x128xf32, #tpu.memory_space<vmem>>, vector<32x128xf32>,
    return
  }
  func.func @transform_0(%arg0: i32) -> (i32, i32) {
    %c0_i32 = arith.constant 0 : i32
    %c0_i32_0 = arith.constant 0 : i32
    %c0_i32_1 = arith.constant 0 : i32
    return %c0_i32, %c0_i32_0 : i32, i32
  }
  func.func @transform_1(%arg0: i32) -> (i32, i32) {
    %c0_i32 = arith.constant 0 : i32
    %c0_i32_0 = arith.constant 0 : i32
    %c0_i32_1 = arith.constant 0 : i32
    return %c0_i32, %c0_i32_0 : i32, i32
  }
  func.func @transform_2(%arg0: i32) -> (i32, i32) {
    %c0_i32 = arith.constant 0 : i32
    %c0_i32_0 = arith.constant 0 : i32
    %c0_i32_1 = arith.constant 0 : i32
    return %c0_i32, %c0_i32_0 : i32, i32
  }
  func.func @transform_3(%arg0: i32) -> (i32, i32) {
    %c0_i32 = arith.constant 0 : i32
    %c0_i32_0 = arith.constant 0 : i32
    %c0_i32_1 = arith.constant 0 : i32
    return %c0_i32, %c0_i32_0 : i32, i32
  }
}

module attributes {stable_mosaic.version = 11 : i64} {
  func.func @_conv_mm_kernel(%arg0: i32, %arg1: memref<32x128xbf16, #tpu.memory_space<vmem>>, %arg2: memref<128x128xbf16, #tpu.memory_space<vmem>>, %arg3: memref<1x128xf32, #tpu.memory_space<vmem>>, %arg4: memref<32x128xbf16, #tpu.memory_space<vmem>>) attributes {dimension_semantics = [#tpu.dimension_semantics<arbitrary>], iteration_bounds = array<i64: 1>, scalar_prefetch = 0 : i64, scratch_operands = 0 : i64, tpu.core_type = #tpu.core_type<tc>, window_params = [{pipeline_mode = #tpu.pipeline_mode<synchronous>, transform_indices = @transform_0, window_bounds = array<i64: 32, 128>}, {pipeline_mode = #tpu.pipeline_mode<synchronous>, transform_indices = @transform_1, window_bounds = array<i64: 128, 128>}, {pipeline_mode = #tpu.pipeline_mode<synchronous>, transform_indices = @transform_2, window_bounds = array<i64: 1, 128>}, {pipeline_mode = #tpu.pipeline_mode<synchronous>, transform_indices = @transform_3, window_bounds = array<i64: 32, 128>}]} {
    %c0 = arith.constant 0 : index
    %c0_0 = arith.constant 0 : index
    %0 = vector.load %arg1[%c0, %c0_0] : memref<32x128xbf16, #tpu.memory_space<vmem>>, vector<32x128xbf16>
    %c0_1 = arith.constant 0 : index
    %c0_2 = arith.constant 0 : index
    %1 = vector.load %arg2[%c0_1, %c0_2] : memref<128x128xbf16, #tpu.memory_space<vmem>>, vector<128x128xbf16>
    %cst = arith.constant dense<0.000000e+00> : vector<32x128xf32>
    %2 = tpu.matmul %0, %1, %cst {dimension_numbers = #tpu.dot_dimension_numbers<[1], [0], [0], [1], [0, 0, 1, 1], [], []>} : vector<32x128xbf16>, vector<128x128xbf16>, vector<32x128xf32> -> vector<32x128xf32>
    %c0_3 = arith.constant 0 : index
    %c0_4 = arith.constant 0 : index
    %3 = vector.load %arg3[%c0_3, %c0_4] : memref<1x128xf32, #tpu.memory_space<vmem>>, vector<1x128xf32>
    %4 = vector.broadcast %3 : vector<1x128xf32> to vector<32x128xf32>
    %5 = arith.addf %2, %4 : vector<32x128xf32>
    %cst_5 = arith.constant 0.000000e+00 : f32
    %6 = vector.broadcast %cst_5 : f32 to vector<32x128xf32>
    %7 = arith.cmpf ogt, %5, %6 : vector<32x128xf32>
    %cst_6 = arith.constant 1.000000e-01 : f32
    %8 = vector.broadcast %cst_6 : f32 to vector<32x128xf32>
    %9 = arith.mulf %8, %5 : vector<32x128xf32>
    %10 = arith.select %7, %5, %9 : vector<32x128xi1>, vector<32x128xf32>
    %11 = arith.truncf %10 : vector<32x128xf32> to vector<32x128xbf16>
    %c0_7 = arith.constant 0 : index
    %c0_8 = arith.constant 0 : index
    %12 = vector.load %arg4[%c0_7, %c0_8] : memref<32x128xbf16, #tpu.memory_space<vmem>>, vector<32x128xbf16>
    tpu.vector_store %arg4[%c0_7, %c0_8], %11 {strides = array<i32>} : memref<32x128xbf16, #tpu.memory_space<vmem>>, vector<32x128xbf16>,
    return
  }
  func.func @transform_0(%arg0: i32) -> (i32, i32) {
    %c0_i32 = arith.constant 0 : i32
    %c0_i32_0 = arith.constant 0 : i32
    %c0_i32_1 = arith.constant 0 : i32
    return %c0_i32, %c0_i32_0 : i32, i32
  }
  func.func @transform_1(%arg0: i32) -> (i32, i32) {
    %c0_i32 = arith.constant 0 : i32
    %c0_i32_0 = arith.constant 0 : i32
    %c0_i32_1 = arith.constant 0 : i32
    return %c0_i32, %c0_i32_0 : i32, i32
  }
  func.func @transform_2(%arg0: i32) -> (i32, i32) {
    %c0_i32 = arith.constant 0 : i32
    %c0_i32_0 = arith.constant 0 : i32
    %c0_i32_1 = arith.constant 0 : i32
    return %c0_i32, %c0_i32_0 : i32, i32
  }
  func.func @transform_3(%arg0: i32) -> (i32, i32) {
    %c0_i32 = arith.constant 0 : i32
    %c0_i32_0 = arith.constant 0 : i32
    %c0_i32_1 = arith.constant 0 : i32
    return %c0_i32, %c0_i32_0 : i32, i32
  }
}

module attributes {stable_mosaic.version = 11 : i64} {
  func.func @_conv_mm_kernel(%arg0: i32, %arg1: memref<128x128xbf16, #tpu.memory_space<vmem>>, %arg2: memref<128x128xbf16, #tpu.memory_space<vmem>>, %arg3: memref<1x128xf32, #tpu.memory_space<vmem>>, %arg4: memref<128x128xf32, #tpu.memory_space<vmem>>) attributes {dimension_semantics = [#tpu.dimension_semantics<arbitrary>], iteration_bounds = array<i64: 1>, scalar_prefetch = 0 : i64, scratch_operands = 0 : i64, tpu.core_type = #tpu.core_type<tc>, window_params = [{pipeline_mode = #tpu.pipeline_mode<synchronous>, transform_indices = @transform_0, window_bounds = array<i64: 128, 128>}, {pipeline_mode = #tpu.pipeline_mode<synchronous>, transform_indices = @transform_1, window_bounds = array<i64: 128, 128>}, {pipeline_mode = #tpu.pipeline_mode<synchronous>, transform_indices = @transform_2, window_bounds = array<i64: 1, 128>}, {pipeline_mode = #tpu.pipeline_mode<synchronous>, transform_indices = @transform_3, window_bounds = array<i64: 128, 128>}]} {
    %c0 = arith.constant 0 : index
    %c0_0 = arith.constant 0 : index
    %0 = vector.load %arg1[%c0, %c0_0] : memref<128x128xbf16, #tpu.memory_space<vmem>>, vector<128x128xbf16>
    %c0_1 = arith.constant 0 : index
    %c0_2 = arith.constant 0 : index
    %1 = vector.load %arg2[%c0_1, %c0_2] : memref<128x128xbf16, #tpu.memory_space<vmem>>, vector<128x128xbf16>
    %cst = arith.constant dense<0.000000e+00> : vector<128x128xf32>
    %2 = tpu.matmul %0, %1, %cst {dimension_numbers = #tpu.dot_dimension_numbers<[1], [0], [0], [1], [0, 0, 1, 1], [], []>} : vector<128x128xbf16>, vector<128x128xbf16>, vector<128x128xf32> -> vector<128x128xf32>
    %c0_3 = arith.constant 0 : index
    %c0_4 = arith.constant 0 : index
    %3 = vector.load %arg3[%c0_3, %c0_4] : memref<1x128xf32, #tpu.memory_space<vmem>>, vector<1x128xf32>
    %4 = vector.broadcast %3 : vector<1x128xf32> to vector<128x128xf32>
    %5 = arith.addf %2, %4 : vector<128x128xf32>
    %c0_5 = arith.constant 0 : index
    %c0_6 = arith.constant 0 : index
    %6 = vector.load %arg4[%c0_5, %c0_6] : memref<128x128xf32, #tpu.memory_space<vmem>>, vector<128x128xf32>
    tpu.vector_store %arg4[%c0_5, %c0_6], %5 {strides = array<i32>} : memref<128x128xf32, #tpu.memory_space<vmem>>, vector<128x128xf32>,
    return
  }
  func.func @transform_0(%arg0: i32) -> (i32, i32) {
    %c0_i32 = arith.constant 0 : i32
    %c0_i32_0 = arith.constant 0 : i32
    %c0_i32_1 = arith.constant 0 : i32
    return %c0_i32, %c0_i32_0 : i32, i32
  }
  func.func @transform_1(%arg0: i32) -> (i32, i32) {
    %c0_i32 = arith.constant 0 : i32
    %c0_i32_0 = arith.constant 0 : i32
    %c0_i32_1 = arith.constant 0 : i32
    return %c0_i32, %c0_i32_0 : i32, i32
  }
  func.func @transform_2(%arg0: i32) -> (i32, i32) {
    %c0_i32 = arith.constant 0 : i32
    %c0_i32_0 = arith.constant 0 : i32
    %c0_i32_1 = arith.constant 0 : i32
    return %c0_i32, %c0_i32_0 : i32, i32
  }
  func.func @transform_3(%arg0: i32) -> (i32, i32) {
    %c0_i32 = arith.constant 0 : i32
    %c0_i32_0 = arith.constant 0 : i32
    %c0_i32_1 = arith.constant 0 : i32
    return %c0_i32, %c0_i32_0 : i32, i32
  }
}

</mosaic_0001>

<llo_original>
// kernel: darknet_forward.8
$region0: #{darknet_forward.8}
  #allocation0 [shape = 'u32[]', space=smem, size = 0x4, offset = 0x4, fixed_abs, tag = 'smem constant byte address 0x4 - core index']
  #allocation1 [shape = 'u32[144,128]{1,0:T(1,128)}', space=vmem, size = 0x12000, scoped, tag = 'internal scratch']
  %s0 = inlined_call_operand.vmem [shape: bf16[128,128], index: 0, kind: input, shape index: {}]
  %s1 = inlined_call_operand.vmem [shape: bf16[128,128], index: 1, kind: input, shape index: {}]
  %s2 = inlined_call_operand.vmem [shape: f32[1,128], index: 2, kind: input, shape index: {}]
  %s3 = inlined_call_operand.vmem [shape: bf16[128,128], index: 3, kind: output, shape index: {}]
  %s4 = sld [smem:[#allocation0]]
  $region22: #{darknet_forward.8} parent=0
    _
  %s6 = ssub.s32 1, %s4
  %s7 = scalar_select 0, %s6, %s4
  // Predicated region
  $region2: #{darknet_forward.8} parent=0 // pred_check
    _
  $region3: #{darknet_forward.8} parent=0 // pred_check_branch
    %9 = sbr.rel (0) target = $region5
  $region4: #{darknet_forward.8} parent=0 // pred_region
    _
  $region5: #{darknet_forward.8} parent=0 // pred_fallthru
    _
  // Predicated region
  $region6: #{darknet_forward.8} parent=0 // pred_check
    _
  $region7: #{darknet_forward.8} parent=0 // pred_check_branch
    %11 = sbr.rel (0) target = $region9
  $region8: #{darknet_forward.8} parent=0 // pred_region
    _
  $region9: #{darknet_forward.8} parent=0 // pred_fallthru
    _
  // Predicated region
  $region10: #{darknet_forward.8} parent=0 // pred_check
    _
  $region11: #{darknet_forward.8} parent=0 // pred_check_branch
    %13 = sbr.rel (0) target = $region13
  $region12: #{darknet_forward.8} parent=0 // pred_region
    _
  $region13: #{darknet_forward.8} parent=0 // pred_fallthru
    _
  %v15 = vld [vmem:[%s0] sm:$0xf]
  %v16 = vld [vmem:[%s0 + $0x4] sm:$0xf]
  %v17 = vld [vmem:[%s0 + $0x8] sm:$0xf]
  %v18 = vld [vmem:[%s0 + $0xc] sm:$0xf]
  %v19 = vld [vmem:[%s0 + $0x10] sm:$0xf]
  %v20 = vld [vmem:[%s0 + $0x14] sm:$0xf]
  %v21 = vld [vmem:[%s0 + $0x18] sm:$0xf]
  %v22 = vld [vmem:[%s0 + $0x1c] sm:$0xf]
  %v23 = vld [vmem:[%s0 + $0x20] sm:$0xf]
  %v24 = vld [vmem:[%s0 + $0x24] sm:$0xf]
  %v25 = vld [vmem:[%s0 + $0x28] sm:$0xf]
  %v26 = vld [vmem:[%s0 + $0x2c] sm:$0xf]
  %v27 = vld [vmem:[%s0 + $0x30] sm:$0xf]
  %v28 = vld [vmem:[%s0 + $0x34] sm:$0xf]
  %v29 = vld [vmem:[%s0 + $0x38] sm:$0xf]
  %v30 = vld [vmem:[%s0 + $0x3c] sm:$0xf]
  %v31 = vld [vmem:[%s1] sm:$0xf]
  %v32 = vld [vmem:[%s1 + $0x4] sm:$0xf]
  %v33 = vld [vmem:[%s1 + $0x8] sm:$0xf]
  %v34 = vld [vmem:[%s1 + $0xc] sm:$0xf]
  %v35 = vld [vmem:[%s1 + $0x10] sm:$0xf]
  %v36 = vld [vmem:[%s1 + $0x14] sm:$0xf]
  %v37 = vld [vmem:[%s1 + $0x18] sm:$0xf]
  %v38 = vld [vmem:[%s1 + $0x1c] sm:$0xf]
  %v39 = vld [vmem:[%s1 + $0x20] sm:$0xf]
  %v40 = vld [vmem:[%s1 + $0x24] sm:$0xf]
  %v41 = vld [vmem:[%s1 + $0x28] sm:$0xf]
  %v42 = vld [vmem:[%s1 + $0x2c] sm:$0xf]
  %v43 = vld [vmem:[%s1 + $0x30] sm:$0xf]
  %v44 = vld [vmem:[%s1 + $0x34] sm:$0xf]
  %v45 = vld [vmem:[%s1 + $0x38] sm:$0xf]
  %v46 = vld [vmem:[%s1 + $0x3c] sm:$0xf]
  %v47 = vld [vmem:[%s2] sm:$0x1]
  %v49 = vlaneseq
  %v50 = vshrl.u32 %v49, 7
  %v51 = vsub.s32 0, %v50
  %v52 = vrot.slane %v47, %v51
  %v70 = vunpack.c.l.b16 %v15
  %v71 = vunpack.c.l.b16 %v16
  %v72 = vunpack.c.l.b16 %v17
  %v73 = vunpack.c.l.b16 %v18
  %v74 = vunpack.c.l.b16 %v19
  %v75 = vunpack.c.l.b16 %v20
  %v76 = vunpack.c.l.b16 %v21
  %v77 = vunpack.c.l.b16 %v22
  %v78 = vunpack.c.l.b16 %v23
  %v79 = vunpack.c.l.b16 %v24
  %v80 = vunpack.c.l.b16 %v25
  %v81 = vunpack.c.l.b16 %v26
  %v82 = vunpack.c.l.b16 %v27
  %v83 = vunpack.c.l.b16 %v28
  %v84 = vunpack.c.l.b16 %v29
  %v85 = vunpack.c.l.b16 %v30
  %v86 = vpack.c.b16 %v71, %v70
  %v87 = vpack.c.b16 %v73, %v72
  %v88 = vpack.c.b16 %v75, %v74
  %v89 = vpack.c.b16 %v77, %v76
  %v90 = vpack.c.b16 %v79, %v78
  %v91 = vpack.c.b16 %v81, %v80
  %v92 = vpack.c.b16 %v83, %v82
  %v93 = vpack.c.b16 %v85, %v84
  %v118 = vunpack.c.l.b16 %v31
  %v119 = vunpack.c.l.b16 %v32
  %v120 = vunpack.c.l.b16 %v33
  %v121 = vunpack.c.l.b16 %v34
  %v122 = vunpack.c.l.b16 %v35
  %v123 = vunpack.c.l.b16 %v36
  %v124 = vunpack.c.l.b16 %v37
  %v125 = vunpack.c.l.b16 %v38
  %v126 = vunpack.c.l.b16 %v39
  %v127 = vunpack.c.l.b16 %v40
  %v128 = vunpack.c.l.b16 %v41
  %v129 = vunpack.c.l.b16 %v42
  %v130 = vunpack.c.l.b16 %v43
  %v131 = vunpack.c.l.b16 %v44
  %v132 = vunpack.c.l.b16 %v45
  %v133 = vunpack.c.l.b16 %v46
  %v134 = vpack.c.b16 %v119, %v118
  %v135 = vpack.c.b16 %v121, %v120
  %v136 = vpack.c.b16 %v123, %v122
  %v137 = vpack.c.b16 %v125, %v124
  %v138 = vpack.c.b16 %v127, %v126
  %v139 = vpack.c.b16 %v129, %v128
  %v140 = vpack.c.b16 %v131, %v130
  %v141 = vpack.c.b16 %v133, %v132
  %150 = vmatprep.subr.bf16.mxu0 0
  %151 = vmatpush1.bf16.msra.mxu0 %v141
  %152 = vmatprep.subr.bf16.mxu0 0
  %153 = vmatpush1.bf16.msra.mxu0 %v140
  %154 = vmatprep.subr.bf16.mxu0 0
  %155 = vmatpush1.bf16.msra.mxu0 %v139
  %156 = vmatprep.subr.bf16.mxu0 0
  %157 = vmatpush1.bf16.msra.mxu0 %v138
  %158 = vmatprep.subr.bf16.mxu0 0
  %159 = vmatpush1.bf16.msra.mxu0 %v137
  %160 = vmatprep.subr.bf16.mxu0 0
  %161 = vmatpush1.bf16.msra.mxu0 %v136
  %162 = vmatprep.subr.bf16.mxu0 0
  %163 = vmatpush1.bf16.msra.mxu0 %v135
  %164 = vmatprep.subr.bf16.mxu0 0
  %165 = vmatpush1.bf16.msra.mxu0 %v134
  %166 = vmatprep.subr.bf16.mxu0 0
  %167 = vmatpush2.bf16.msra.mxu0 0
  %168 = vmatprep.subr.bf16.mxu0 0
  %169 = vmatpush2.bf16.msra.mxu0 0
  %170 = vmatprep.subr.bf16.mxu0 0
  %171 = vmatpush2.bf16.msra.mxu0 0
  %172 = vmatprep.subr.bf16.mxu0 0
  %173 = vmatpush2.bf16.msra.mxu0 0
  %174 = vmatprep.subr.bf16.mxu0 0
  %175 = vmatpush2.bf16.msra.mxu0 0
  %176 = vmatprep.subr.bf16.mxu0 0
  %177 = vmatpush2.bf16.msra.mxu0 0
  %178 = vmatprep.subr.bf16.mxu0 0
  %179 = vmatpush2.bf16.msra.mxu0 0
  %180 = vmatprep.subr.bf16.mxu0 0
  %181 = vmatpush2.bf16.msra.mxu0 0
  %182 = vmatprep.mubr.bf16.mxu0 0
  %183 = vmatmul.mubr.bf16.gmra.mxu0 %v86
  %v184 = vpop.f32.mrf.mxu0
  %v185 = vadd.f32 %v52, %v184
  %v186 = vpop.f32.mrf.mxu0
  %v187 = vpop.f32.mrf.mxu0
  %v188 = vadd.f32 %v52, %v187
  %v189 = vpop.f32.mrf.mxu0
  %190 = vmatprep.mubr.bf16.mxu0 0
  %191 = vmatmul.mubr.bf16.gmra.mxu0 %v87
  %v192 = vpop.f32.mrf.mxu0
  %v193 = vadd.f32 %v52, %v192
  %v194 = vpop.f32.mrf.mxu0
  %v195 = vpop.f32.mrf.mxu0
  %v196 = vadd.f32 %v52, %v195
  %v197 = vpop.f32.mrf.mxu0
  %198 = vmatprep.mubr.bf16.mxu0 0
  %199 = vmatmul.mubr.bf16.gmra.mxu0 %v88
  %v200 = vpop.f32.mrf.mxu0
  %v201 = vadd.f32 %v52, %v200
  %v202 = vpop.f32.mrf.mxu0
  %v203 = vpop.f32.mrf.mxu0
  %v204 = vadd.f32 %v52, %v203
  %v205 = vpop.f32.mrf.mxu0
  %206 = vmatprep.mubr.bf16.mxu0 0
  %207 = vmatmul.mubr.bf16.gmra.mxu0 %v89
  %v208 = vpop.f32.mrf.mxu0
  %v209 = vadd.f32 %v52, %v208
  %v210 = vpop.f32.mrf.mxu0
  %v211 = vpop.f32.mrf.mxu0
  %v212 = vadd.f32 %v52, %v211
  %v213 = vpop.f32.mrf.mxu0
  %214 = vmatprep.mubr.bf16.mxu0 0
  %215 = vmatmul.mubr.bf16.gmra.mxu0 %v90
  %v216 = vpop.f32.mrf.mxu0
  %v217 = vadd.f32 %v52, %v216
  %v218 = vpop.f32.mrf.mxu0
  %v219 = vpop.f32.mrf.mxu0
  %v220 = vadd.f32 %v52, %v219
  %v221 = vpop.f32.mrf.mxu0
  %222 = vmatprep.mubr.bf16.mxu0 0
  %223 = vmatmul.mubr.bf16.gmra.mxu0 %v91
  %v224 = vpop.f32.mrf.mxu0
  %v225 = vadd.f32 %v52, %v224
  %v226 = vpop.f32.mrf.mxu0
  %v227 = vpop.f32.mrf.mxu0
  %v228 = vadd.f32 %v52, %v227
  %v229 = vpop.f32.mrf.mxu0
  %230 = vmatprep.mubr.bf16.mxu0 0
  %231 = vmatmul.mubr.bf16.gmra.mxu0 %v92
  %v232 = vpop.f32.mrf.mxu0
  %v233 = vadd.f32 %v52, %v232
  %v234 = vpop.f32.mrf.mxu0
  %v235 = vpop.f32.mrf.mxu0
  %v236 = vadd.f32 %v52, %v235
  %v237 = vpop.f32.mrf.mxu0
  %238 = vmatprep.mubr.bf16.mxu0 0
  %239 = vmatmul.mubr.bf16.gmra.mxu0 %v93
  %v240 = vpop.f32.mrf.mxu0
  %v241 = vadd.f32 %v52, %v240
  %v242 = vpop.f32.mrf.mxu0
  %v243 = vpop.f32.mrf.mxu0
  %v244 = vadd.f32 %v52, %v243
  %v245 = vpop.f32.mrf.mxu0
  %246 = vdwg.mxu0
  %vm247 = vcmp.gt.f32.partialorder %v185, 0.0
  %vm248 = vcmp.gt.f32.partialorder %v188, 0.0
  %vm249 = vcmp.gt.f32.partialorder %v193, 0.0
  %vm250 = vcmp.gt.f32.partialorder %v196, 0.0
  %vm251 = vcmp.gt.f32.partialorder %v201, 0.0
  %vm252 = vcmp.gt.f32.partialorder %v204, 0.0
  %vm253 = vcmp.gt.f32.partialorder %v209, 0.0
  %vm254 = vcmp.gt.f32.partialorder %v212, 0.0
  %vm255 = vcmp.gt.f32.partialorder %v217, 0.0
  %vm256 = vcmp.gt.f32.partialorder %v220, 0.0
  %vm257 = vcmp.gt.f32.partialorder %v225, 0.0
  %vm258 = vcmp.gt.f32.partialorder %v228, 0.0
  %vm259 = vcmp.gt.f32.partialorder %v233, 0.0
  %vm260 = vcmp.gt.f32.partialorder %v236, 0.0
  %vm261 = vcmp.gt.f32.partialorder %v241, 0.0
  %vm262 = vcmp.gt.f32.partialorder %v244, 0.0
  %v263 = vmul.f32 %v185, 0.1
  %v264 = vmul.f32 %v188, 0.1
  %v265 = vmul.f32 %v193, 0.1
  %v266 = vmul.f32 %v196, 0.1
  %v267 = vmul.f32 %v201, 0.1
  %v268 = vmul.f32 %v204, 0.1
  %v269 = vmul.f32 %v209, 0.1
  %v270 = vmul.f32 %v212, 0.1
  %v271 = vmul.f32 %v217, 0.1
  %v272 = vmul.f32 %v220, 0.1
  %v273 = vmul.f32 %v225, 0.1
  %v274 = vmul.f32 %v228, 0.1
  %v275 = vmul.f32 %v233, 0.1
  %v276 = vmul.f32 %v236, 0.1
  %v277 = vmul.f32 %v241, 0.1
  %v278 = vmul.f32 %v244, 0.1
  %v279 = vsel %vm247, %v185, %v263
  %v280 = vsel %vm248, %v188, %v264
  %v281 = vsel %vm249, %v193, %v265
  %v282 = vsel %vm250, %v196, %v266
  %v283 = vsel %vm251, %v201, %v267
  %v284 = vsel %vm252, %v204, %v268
  %v285 = vsel %vm253, %v209, %v269
  %v286 = vsel %vm254, %v212, %v270
  %v287 = vsel %vm255, %v217, %v271
  %v288 = vsel %vm256, %v220, %v272
  %v289 = vsel %vm257, %v225, %v273
  %v290 = vsel %vm258, %v228, %v274
  %v291 = vsel %vm259, %v233, %v275
  %v292 = vsel %vm260, %v236, %v276
  %v293 = vsel %vm261, %v241, %v277
  %v294 = vsel %vm262, %v244, %v278
  %v295 = vpack.c.bf16 %v280, %v279
  %v296 = vpack.c.bf16 %v282, %v281
  %v297 = vpack.c.bf16 %v284, %v283
  %v298 = vpack.c.bf16 %v286, %v285
  %v299 = vpack.c.bf16 %v288, %v287
  %v300 = vpack.c.bf16 %v290, %v289
  %v301 = vpack.c.bf16 %v292, %v291
  %v302 = vpack.c.bf16 %v294, %v293
  %v311 = vunpack.c.l.b16 %v295
  %v312 = vunpack.c.h.b16 %v295
  %v313 = vunpack.c.l.b16 %v296
  %v314 = vunpack.c.h.b16 %v296
  %v315 = vunpack.c.l.b16 %v297
  %v316 = vunpack.c.h.b16 %v297
  %v317 = vunpack.c.l.b16 %v298
  %v318 = vunpack.c.h.b16 %v298
  %v319 = vunpack.c.l.b16 %v299
  %v320 = vunpack.c.h.b16 %v299
  %v321 = vunpack.c.l.b16 %v300
  %v322 = vunpack.c.h.b16 %v300
  %v323 = vunpack.c.l.b16 %v301
  %v324 = vunpack.c.h.b16 %v301
  %v325 = vunpack.c.l.b16 %v302
  %v326 = vunpack.c.h.b16 %v302
  %v327 = vpack.c.b16 %v311, %v311
  %v328 = vpack.c.b16 %v312, %v312
  %v329 = vpack.c.b16 %v313, %v313
  %v330 = vpack.c.b16 %v314, %v314
  %v331 = vpack.c.b16 %v315, %v315
  %v332 = vpack.c.b16 %v316, %v316
  %v333 = vpack.c.b16 %v317, %v317
  %v334 = vpack.c.b16 %v318, %v318
  %v335 = vpack.c.b16 %v319, %v319
  %v336 = vpack.c.b16 %v320, %v320
  %v337 = vpack.c.b16 %v321, %v321
  %v338 = vpack.c.b16 %v322, %v322
  %v339 = vpack.c.b16 %v323, %v323
  %v340 = vpack.c.b16 %v324, %v324
  %v341 = vpack.c.b16 %v325, %v325
  %v342 = vpack.c.b16 %v326, %v326
  %359 = vst [vmem:[%s3] sm:$0xf] %v327
  %360 = vst [vmem:[%s3 + $0x4] sm:$0xf] %v328
  %361 = vst [vmem:[%s3 + $0x8] sm:$0xf] %v329
  %362 = vst [vmem:[%s3 + $0xc] sm:$0xf] %v330
  %363 = vst [vmem:[%s3 + $0x10] sm:$0xf] %v331
  %364 = vst [vmem:[%s3 + $0x14] sm:$0xf] %v332
  %365 = vst [vmem:[%s3 + $0x18] sm:$0xf] %v333
  %366 = vst [vmem:[%s3 + $0x1c] sm:$0xf] %v334
  %367 = vst [vmem:[%s3 + $0x20] sm:$0xf] %v335
  %368 = vst [vmem:[%s3 + $0x24] sm:$0xf] %v336
  %369 = vst [vmem:[%s3 + $0x28] sm:$0xf] %v337
  %370 = vst [vmem:[%s3 + $0x2c] sm:$0xf] %v338
  %371 = vst [vmem:[%s3 + $0x30] sm:$0xf] %v339
  %372 = vst [vmem:[%s3 + $0x34] sm:$0xf] %v340
  %373 = vst [vmem:[%s3 + $0x38] sm:$0xf] %v341
  %374 = vst [vmem:[%s3 + $0x3c] sm:$0xf] %v342
  // Predicated region
  $region14: #{darknet_forward.8} parent=0 // pred_check
    _
  $region15: #{darknet_forward.8} parent=0 // pred_check_branch
    %376 = sbr.rel (0) target = $region17
  $region16: #{darknet_forward.8} parent=0 // pred_region
    _
  $region17: #{darknet_forward.8} parent=0 // pred_fallthru
    _
  // Predicated region
  $region18: #{darknet_forward.8} parent=0 // pred_check
    _
  $region19: #{darknet_forward.8} parent=0 // pred_check_branch
    %378 = sbr.rel (0) target = $region21
  $region20: #{darknet_forward.8} parent=0 // pred_region
    _
  $region21: #{darknet_forward.8} parent=0 // pred_fallthru
    _

// kernel: darknet_forward.7
$region0: #{darknet_forward.7}
  #allocation0 [shape = 'u32[]', space=smem, size = 0x4, offset = 0x4, fixed_abs, tag = 'smem constant byte address 0x4 - core index']
  #allocation1 [shape = 'u32[144,128]{1,0:T(1,128)}', space=vmem, size = 0x12000, scoped, tag = 'internal scratch']
  %s0 = inlined_call_operand.vmem [shape: bf16[512,128], index: 0, kind: input, shape index: {}]
  %s1 = inlined_call_operand.vmem [shape: bf16[128,128], index: 1, kind: input, shape index: {}]
  %s2 = inlined_call_operand.vmem [shape: f32[1,128], index: 2, kind: input, shape index: {}]
  %s3 = inlined_call_operand.vmem [shape: bf16[512,128], index: 3, kind: output, shape index: {}]
  %s4 = sld [smem:[#allocation0]]
  $region22: #{darknet_forward.7} parent=0
    _
  %s6 = ssub.s32 1, %s4
  %s7 = scalar_select 0, %s6, %s4
  // Predicated region
  $region2: #{darknet_forward.7} parent=0 // pred_check
    _
  $region3: #{darknet_forward.7} parent=0 // pred_check_branch
    %9 = sbr.rel (0) target = $region5
  $region4: #{darknet_forward.7} parent=0 // pred_region
    _
  $region5: #{darknet_forward.7} parent=0 // pred_fallthru
    _
  // Predicated region
  $region6: #{darknet_forward.7} parent=0 // pred_check
    _
  $region7: #{darknet_forward.7} parent=0 // pred_check_branch
    %11 = sbr.rel (0) target = $region9
  $region8: #{darknet_forward.7} parent=0 // pred_region
    _
  $region9: #{darknet_forward.7} parent=0 // pred_fallthru
    _
  // Predicated region
  $region10: #{darknet_forward.7} parent=0 // pred_check
    _
  $region11: #{darknet_forward.7} parent=0 // pred_check_branch
    %13 = sbr.rel (0) target = $region13
  $region12: #{darknet_forward.7} parent=0 // pred_region
    _
  $region13: #{darknet_forward.7} parent=0 // pred_fallthru
    _
  %v15 = vld [vmem:[%s0] sm:$0xf]
  %v16 = vld [vmem:[%s0 + $0x4] sm:$0xf]
  %v17 = vld [vmem:[%s0 + $0x8] sm:$0xf]
  %v18 = vld [vmem:[%s0 + $0xc] sm:$0xf]
  %v19 = vld [vmem:[%s0 + $0x10] sm:$0xf]
  %v20 = vld [vmem:[%s0 + $0x14] sm:$0xf]
  %v21 = vld [vmem:[%s0 + $0x18] sm:$0xf]
  %v22 = vld [vmem:[%s0 + $0x1c] sm:$0xf]
  %v23 = vld [vmem:[%s0 + $0x20] sm:$0xf]
  %v24 = vld [vmem:[%s0 + $0x24] sm:$0xf]
  %v25 = vld [vmem:[%s0 + $0x28] sm:$0xf]
  %v26 = vld [vmem:[%s0 + $0x2c] sm:$0xf]
  %v27 = vld [vmem:[%s0 + $0x30] sm:$0xf]
  %v28 = vld [vmem:[%s0 + $0x34] sm:$0xf]
  %v29 = vld [vmem:[%s0 + $0x38] sm:$0xf]
  %v30 = vld [vmem:[%s0 + $0x3c] sm:$0xf]
  %v31 = vld [vmem:[%s0 + $0x40] sm:$0xf]
  %v32 = vld [vmem:[%s0 + $0x44] sm:$0xf]
  %v33 = vld [vmem:[%s0 + $0x48] sm:$0xf]
  %v34 = vld [vmem:[%s0 + $0x4c] sm:$0xf]
  %v35 = vld [vmem:[%s0 + $0x50] sm:$0xf]
  %v36 = vld [vmem:[%s0 + $0x54] sm:$0xf]
  %v37 = vld [vmem:[%s0 + $0x58] sm:$0xf]
  %v38 = vld [vmem:[%s0 + $0x5c] sm:$0xf]
  %v39 = vld [vmem:[%s0 + $0x60] sm:$0xf]
  %v40 = vld [vmem:[%s0 + $0x64] sm:$0xf]
  %v41 = vld [vmem:[%s0 + $0x68] sm:$0xf]
  %v42 = vld [vmem:[%s0 + $0x6c] sm:$0xf]
  %v43 = vld [vmem:[%s0 + $0x70] sm:$0xf]
  %v44 = vld [vmem:[%s0 + $0x74] sm:$0xf]
  %v45 = vld [vmem:[%s0 + $0x78] sm:$0xf]
  %v46 = vld [vmem:[%s0 + $0x7c] sm:$0xf]
  %v47 = vld [vmem:[%s0 + $0x80] sm:$0xf]
  %v48 = vld [vmem:[%s0 + $0x84] sm:$0xf]
  %v49 = vld [vmem:[%s0 + $0x88] sm:$0xf]
  %v50 = vld [vmem:[%s0 + $0x8c] sm:$0xf]
  %v51 = vld [vmem:[%s0 + $0x90] sm:$0xf]
  %v52 = vld [vmem:[%s0 + $0x94] sm:$0xf]
  %v53 = vld [vmem:[%s0 + $0x98] sm:$0xf]
  %v54 = vld [vmem:[%s0 + $0x9c] sm:$0xf]
  %v55 = vld [vmem:[%s0 + $0xa0] sm:$0xf]
  %v56 = vld [vmem:[%s0 + $0xa4] sm:$0xf]
  %v57 = vld [vmem:[%s0 + $0xa8] sm:$0xf]
  %v58 = vld [vmem:[%s0 + $0xac] sm:$0xf]
  %v59 = vld [vmem:[%s0 + $0xb0] sm:$0xf]
  %v60 = vld [vmem:[%s0 + $0xb4] sm:$0xf]
  %v61 = vld [vmem:[%s0 + $0xb8] sm:$0xf]
  %v62 = vld [vmem:[%s0 + $0xbc] sm:$0xf]
  %v63 = vld [vmem:[%s0 + $0xc0] sm:$0xf]
  %v64 = vld [vmem:[%s0 + $0xc4] sm:$0xf]
  %v65 = vld [vmem:[%s0 + $0xc8] sm:$0xf]
  %v66 = vld [vmem:[%s0 + $0xcc] sm:$0xf]
  %v67 = vld [vmem:[%s0 + $0xd0] sm:$0xf]
  %v68 = vld [vmem:[%s0 + $0xd4] sm:$0xf]
  %v69 = vld [vmem:[%s0 + $0xd8] sm:$0xf]
  %v70 = vld [vmem:[%s0 + $0xdc] sm:$0xf]
  %v71 = vld [vmem:[%s0 + $0xe0] sm:$0xf]
  %v72 = vld [vmem:[%s0 + $0xe4] sm:$0xf]
  %v73 = vld [vmem:[%s0 + $0xe8] sm:$0xf]
  %v74 = vld [vmem:[%s0 + $0xec] sm:$0xf]
  %v75 = vld [vmem:[%s0 + $0xf0] sm:$0xf]
  %v76 = vld [vmem:[%s0 + $0xf4] sm:$0xf]
  %v77 = vld [vmem:[%s0 + $0xf8] sm:$0xf]
  %v78 = vld [vmem:[%s0 + $0xfc] sm:$0xf]
  %v79 = vld [vmem:[%s1] sm:$0xf]
  %v80 = vld [vmem:[%s1 + $0x4] sm:$0xf]
  %v81 = vld [vmem:[%s1 + $0x8] sm:$0xf]
  %v82 = vld [vmem:[%s1 + $0xc] sm:$0xf]
  %v83 = vld [vmem:[%s1 + $0x10] sm:$0xf]
  %v84 = vld [vmem:[%s1 + $0x14] sm:$0xf]
  %v85 = vld [vmem:[%s1 + $0x18] sm:$0xf]
  %v86 = vld [vmem:[%s1 + $0x1c] sm:$0xf]
  %v87 = vld [vmem:[%s1 + $0x20] sm:$0xf]
  %v88 = vld [vmem:[%s1 + $0x24] sm:$0xf]
  %v89 = vld [vmem:[%s1 + $0x28] sm:$0xf]
  %v90 = vld [vmem:[%s1 + $0x2c] sm:$0xf]
  %v91 = vld [vmem:[%s1 + $0x30] sm:$0xf]
  %v92 = vld [vmem:[%s1 + $0x34] sm:$0xf]
  %v93 = vld [vmem:[%s1 + $0x38] sm:$0xf]
  %v94 = vld [vmem:[%s1 + $0x3c] sm:$0xf]
  %v95 = vld [vmem:[%s2] sm:$0x1]
  %v97 = vlaneseq
  %v98 = vshrl.u32 %v97, 7
  %v99 = vsub.s32 0, %v98
  %v100 = vrot.slane %v95, %v99
  %v166 = vunpack.c.l.b16 %v15
  %v167 = vunpack.c.l.b16 %v16
  %v168 = vunpack.c.l.b16 %v17
  %v169 = vunpack.c.l.b16 %v18
  %v170 = vunpack.c.l.b16 %v19
  %v171 = vunpack.c.l.b16 %v20
  %v172 = vunpack.c.l.b16 %v21
  %v173 = vunpack.c.l.b16 %v22
  %v174 = vunpack.c.l.b16 %v23
  %v175 = vunpack.c.l.b16 %v24
  %v176 = vunpack.c.l.b16 %v25
  %v177 = vunpack.c.l.b16 %v26
  %v178 = vunpack.c.l.b16 %v27
  %v179 = vunpack.c.l.b16 %v28
  %v180 = vunpack.c.l.b16 %v29
  %v181 = vunpack.c.l.b16 %v30
  %v182 = vunpack.c.l.b16 %v31
  %v183 = vunpack.c.l.b16 %v32
  %v184 = vunpack.c.l.b16 %v33
  %v185 = vunpack.c.l.b16 %v34
  %v186 = vunpack.c.l.b16 %v35
  %v187 = vunpack.c.l.b16 %v36
  %v188 = vunpack.c.l.b16 %v37
  %v189 = vunpack.c.l.b16 %v38
  %v190 = vunpack.c.l.b16 %v39
  %v191 = vunpack.c.l.b16 %v40
  %v192 = vunpack.c.l.b16 %v41
  %v193 = vunpack.c.l.b16 %v42
  %v194 = vunpack.c.l.b16 %v43
  %v195 = vunpack.c.l.b16 %v44
  %v196 = vunpack.c.l.b16 %v45
  %v197 = vunpack.c.l.b16 %v46
  %v198 = vunpack.c.l.b16 %v47
  %v199 = vunpack.c.l.b16 %v48
  %v200 = vunpack.c.l.b16 %v49
  %v201 = vunpack.c.l.b16 %v50
  %v202 = vunpack.c.l.b16 %v51
  %v203 = vunpack.c.l.b16 %v52
  %v204 = vunpack.c.l.b16 %v53
  %v205 = vunpack.c.l.b16 %v54
  %v206 = vunpack.c.l.b16 %v55
  %v207 = vunpack.c.l.b16 %v56
  %v208 = vunpack.c.l.b16 %v57
  %v209 = vunpack.c.l.b16 %v58
  %v210 = vunpack.c.l.b16 %v59
  %v211 = vunpack.c.l.b16 %v60
  %v212 = vunpack.c.l.b16 %v61
  %v213 = vunpack.c.l.b16 %v62
  %v214 = vunpack.c.l.b16 %v63
  %v215 = vunpack.c.l.b16 %v64
  %v216 = vunpack.c.l.b16 %v65
  %v217 = vunpack.c.l.b16 %v66
  %v218 = vunpack.c.l.b16 %v67
  %v219 = vunpack.c.l.b16 %v68
  %v220 = vunpack.c.l.b16 %v69
  %v221 = vunpack.c.l.b16 %v70
  %v222 = vunpack.c.l.b16 %v71
  %v223 = vunpack.c.l.b16 %v72
  %v224 = vunpack.c.l.b16 %v73
  %v225 = vunpack.c.l.b16 %v74
  %v226 = vunpack.c.l.b16 %v75
  %v227 = vunpack.c.l.b16 %v76
  %v228 = vunpack.c.l.b16 %v77
  %v229 = vunpack.c.l.b16 %v78
  %v230 = vpack.c.b16 %v167, %v166
  %v231 = vpack.c.b16 %v169, %v168
  %v232 = vpack.c.b16 %v171, %v170
  %v233 = vpack.c.b16 %v173, %v172
  %v234 = vpack.c.b16 %v175, %v174
  %v235 = vpack.c.b16 %v177, %v176
  %v236 = vpack.c.b16 %v179, %v178
  %v237 = vpack.c.b16 %v181, %v180
  %v238 = vpack.c.b16 %v183, %v182
  %v239 = vpack.c.b16 %v185, %v184
  %v240 = vpack.c.b16 %v187, %v186
  %v241 = vpack.c.b16 %v189, %v188
  %v242 = vpack.c.b16 %v191, %v190
  %v243 = vpack.c.b16 %v193, %v192
  %v244 = vpack.c.b16 %v195, %v194
  %v245 = vpack.c.b16 %v197, %v196
  %v246 = vpack.c.b16 %v199, %v198
  %v247 = vpack.c.b16 %v201, %v200
  %v248 = vpack.c.b16 %v203, %v202
  %v249 = vpack.c.b16 %v205, %v204
  %v250 = vpack.c.b16 %v207, %v206
  %v251 = vpack.c.b16 %v209, %v208
  %v252 = vpack.c.b16 %v211, %v210
  %v253 = vpack.c.b16 %v213, %v212
  %v254 = vpack.c.b16 %v215, %v214
  %v255 = vpack.c.b16 %v217, %v216
  %v256 = vpack.c.b16 %v219, %v218
  %v257 = vpack.c.b16 %v221, %v220
  %v258 = vpack.c.b16 %v223, %v222
  %v259 = vpack.c.b16 %v225, %v224
  %v260 = vpack.c.b16 %v227, %v226
  %v261 = vpack.c.b16 %v229, %v228
  %v310 = vunpack.c.l.b16 %v79
  %v311 = vunpack.c.l.b16 %v80
  %v312 = vunpack.c.l.b16 %v81
  %v313 = vunpack.c.l.b16 %v82
  %v314 = vunpack.c.l.b16 %v83
  %v315 = vunpack.c.l.b16 %v84
  %v316 = vunpack.c.l.b16 %v85
  %v317 = vunpack.c.l.b16 %v86
  %v318 = vunpack.c.l.b16 %v87
  %v319 = vunpack.c.l.b16 %v88
  %v320 = vunpack.c.l.b16 %v89
  %v321 = vunpack.c.l.b16 %v90
  %v322 = vunpack.c.l.b16 %v91
  %v323 = vunpack.c.l.b16 %v92
  %v324 = vunpack.c.l.b16 %v93
  %v325 = vunpack.c.l.b16 %v94
  %v326 = vpack.c.b16 %v311, %v310
  %v327 = vpack.c.b16 %v313, %v312
  %v328 = vpack.c.b16 %v315, %v314
  %v329 = vpack.c.b16 %v317, %v316
  %v330 = vpack.c.b16 %v319, %v318
  %v331 = vpack.c.b16 %v321, %v320
  %v332 = vpack.c.b16 %v323, %v322
  %v333 = vpack.c.b16 %v325, %v324
  %342 = vmatprep.subr.bf16.mxu0 0
  %343 = vmatpush1.bf16.msra.mxu0 %v333
  %344 = vmatprep.subr.bf16.mxu0 0
  %345 = vmatpush1.bf16.msra.mxu0 %v332
  %346 = vmatprep.subr.bf16.mxu0 0
  %347 = vmatpush1.bf16.msra.mxu0 %v331
  %348 = vmatprep.subr.bf16.mxu0 0
  %349 = vmatpush1.bf16.msra.mxu0 %v330
  %350 = vmatprep.subr.bf16.mxu0 0
  %351 = vmatpush1.bf16.msra.mxu0 %v329
  %352 = vmatprep.subr.bf16.mxu0 0
  %353 = vmatpush1.bf16.msra.mxu0 %v328
  %354 = vmatprep.subr.bf16.mxu0 0
  %355 = vmatpush1.bf16.msra.mxu0 %v327
  %356 = vmatprep.subr.bf16.mxu0 0
  %357 = vmatpush1.bf16.msra.mxu0 %v326
  %358 = vmatprep.subr.bf16.mxu0 0
  %359 = vmatpush2.bf16.msra.mxu0 0
  %360 = vmatprep.subr.bf16.mxu0 0
  %361 = vmatpush2.bf16.msra.mxu0 0
  %362 = vmatprep.subr.bf16.mxu0 0
  %363 = vmatpush2.bf16.msra.mxu0 0
  %364 = vmatprep.subr.bf16.mxu0 0
  %365 = vmatpush2.bf16.msra.mxu0 0
  %366 = vmatprep.subr.bf16.mxu0 0
  %367 = vmatpush2.bf16.msra.mxu0 0
  %368 = vmatprep.subr.bf16.mxu0 0
  %369 = vmatpush2.bf16.msra.mxu0 0
  %370 = vmatprep.subr.bf16.mxu0 0
  %371 = vmatpush2.bf16.msra.mxu0 0
  %372 = vmatprep.subr.bf16.mxu0 0
  %373 = vmatpush2.bf16.msra.mxu0 0
  %374 = vmatprep.mubr.bf16.mxu0 0
  %375 = vmatmul.mubr.bf16.gmra.mxu0 %v230
  %v376 = vpop.f32.mrf.mxu0
  %v377 = vadd.f32 %v100, %v376
  %v378 = vpop.f32.mrf.mxu0
  %v379 = vpop.f32.mrf.mxu0
  %v380 = vadd.f32 %v100, %v379
  %v381 = vpop.f32.mrf.mxu0
  %382 = vmatprep.mubr.bf16.mxu0 0
  %383 = vmatmul.mubr.bf16.gmra.mxu0 %v231
  %v384 = vpop.f32.mrf.mxu0
  %v385 = vadd.f32 %v100, %v384
  %v386 = vpop.f32.mrf.mxu0
  %v387 = vpop.f32.mrf.mxu0
  %v388 = vadd.f32 %v100, %v387
  %v389 = vpop.f32.mrf.mxu0
  %390 = vmatprep.mubr.bf16.mxu0 0
  %391 = vmatmul.mubr.bf16.gmra.mxu0 %v232
  %v392 = vpop.f32.mrf.mxu0
  %v393 = vadd.f32 %v100, %v392
  %v394 = vpop.f32.mrf.mxu0
  %v395 = vpop.f32.mrf.mxu0
  %v396 = vadd.f32 %v100, %v395
  %v397 = vpop.f32.mrf.mxu0
  %398 = vmatprep.mubr.bf16.mxu0 0
  %399 = vmatmul.mubr.bf16.gmra.mxu0 %v233
  %v400 = vpop.f32.mrf.mxu0
  %v401 = vadd.f32 %v100, %v400
  %v402 = vpop.f32.mrf.mxu0
  %v403 = vpop.f32.mrf.mxu0
  %v404 = vadd.f32 %v100, %v403
  %v405 = vpop.f32.mrf.mxu0
  %406 = vmatprep.mubr.bf16.mxu0 0
  %407 = vmatmul.mubr.bf16.gmra.mxu0 %v234
  %v408 = vpop.f32.mrf.mxu0
  %v409 = vadd.f32 %v100, %v408
  %v410 = vpop.f32.mrf.mxu0
  %v411 = vpop.f32.mrf.mxu0
  %v412 = vadd.f32 %v100, %v411
  %v413 = vpop.f32.mrf.mxu0
  %414 = vmatprep.mubr.bf16.mxu0 0
  %415 = vmatmul.mubr.bf16.gmra.mxu0 %v235
  %v416 = vpop.f32.mrf.mxu0
  %v417 = vadd.f32 %v100, %v416
  %v418 = vpop.f32.mrf.mxu0
  %v419 = vpop.f32.mrf.mxu0
  %v420 = vadd.f32 %v100, %v419
  %v421 = vpop.f32.mrf.mxu0
  %422 = vmatprep.mubr.bf16.mxu0 0
  %423 = vmatmul.mubr.bf16.gmra.mxu0 %v236
  %v424 = vpop.f32.mrf.mxu0
  %v425 = vadd.f32 %v100, %v424
  %v426 = vpop.f32.mrf.mxu0
  %v427 = vpop.f32.mrf.mxu0
  %v428 = vadd.f32 %v100, %v427
  %v429 = vpop.f32.mrf.mxu0
  %430 = vmatprep.mubr.bf16.mxu0 0
  %431 = vmatmul.mubr.bf16.gmra.mxu0 %v237
  %v432 = vpop.f32.mrf.mxu0
  %v433 = vadd.f32 %v100, %v432
  %v434 = vpop.f32.mrf.mxu0
  %v435 = vpop.f32.mrf.mxu0
  %v436 = vadd.f32 %v100, %v435
  %v437 = vpop.f32.mrf.mxu0
  %438 = vmatprep.mubr.bf16.mxu0 0
  %439 = vmatmul.mubr.bf16.gmra.mxu0 %v238
  %v440 = vpop.f32.mrf.mxu0
  %v441 = vadd.f32 %v100, %v440
  %v442 = vpop.f32.mrf.mxu0
  %v443 = vpop.f32.mrf.mxu0
  %v444 = vadd.f32 %v100, %v443
  %v445 = vpop.f32.mrf.mxu0
  %446 = vmatprep.mubr.bf16.mxu0 0
  %447 = vmatmul.mubr.bf16.gmra.mxu0 %v239
  %v448 = vpop.f32.mrf.mxu0
  %v449 = vadd.f32 %v100, %v448
  %v450 = vpop.f32.mrf.mxu0
  %v451 = vpop.f32.mrf.mxu0
  %v452 = vadd.f32 %v100, %v451
  %v453 = vpop.f32.mrf.mxu0
  %454 = vmatprep.mubr.bf16.mxu0 0
  %455 = vmatmul.mubr.bf16.gmra.mxu0 %v240
  %v456 = vpop.f32.mrf.mxu0
  %v457 = vadd.f32 %v100, %v456
  %v458 = vpop.f32.mrf.mxu0
  %v459 = vpop.f32.mrf.mxu0
  %v460 = vadd.f32 %v100, %v459
  %v461 = vpop.f32.mrf.mxu0
  %462 = vmatprep.mubr.bf16.mxu0 0
  %463 = vmatmul.mubr.bf16.gmra.mxu0 %v241
  %v464 = vpop.f32.mrf.mxu0
  %v465 = vadd.f32 %v100, %v464
  %v466 = vpop.f32.mrf.mxu0
  %v467 = vpop.f32.mrf.mxu0
  %v468 = vadd.f32 %v100, %v467
  %v469 = vpop.f32.mrf.mxu0
  %470 = vmatprep.mubr.bf16.mxu0 0
  %471 = vmatmul.mubr.bf16.gmra.mxu0 %v242
  %v472 = vpop.f32.mrf.mxu0
  %v473 = vadd.f32 %v100, %v472
  %v474 = vpop.f32.mrf.mxu0
  %v475 = vpop.f32.mrf.mxu0
  %v476 = vadd.f32 %v100, %v475
  %v477 = vpop.f32.mrf.mxu0
  %478 = vmatprep.mubr.bf16.mxu0 0
  %479 = vmatmul.mubr.bf16.gmra.mxu0 %v243
  %v480 = vpop.f32.mrf.mxu0
  %v481 = vadd.f32 %v100, %v480
  %v482 = vpop.f32.mrf.mxu0
  %v483 = vpop.f32.mrf.mxu0
  %v484 = vadd.f32 %v100, %v483
  %v485 = vpop.f32.mrf.mxu0
  %486 = vmatprep.mubr.bf16.mxu0 0
  %487 = vmatmul.mubr.bf16.gmra.mxu0 %v244
  %v488 = vpop.f32.mrf.mxu0
  %v489 = vadd.f32 %v100, %v488
  %v490 = vpop.f32.mrf.mxu0
  %v491 = vpop.f32.mrf.mxu0
  %v492 = vadd.f32 %v100, %v491
  %v493 = vpop.f32.mrf.mxu0
  %494 = vmatprep.mubr.bf16.mxu0 0
  %495 = vmatmul.mubr.bf16.gmra.mxu0 %v245
  %v496 = vpop.f32.mrf.mxu0
  %v497 = vadd.f32 %v100, %v496
  %v498 = vpop.f32.mrf.mxu0
  %v499 = vpop.f32.mrf.mxu0
  %v500 = vadd.f32 %v100, %v499
  %v501 = vpop.f32.mrf.mxu0
  %502 = vmatprep.mubr.bf16.mxu0 0
  %503 = vmatmul.mubr.bf16.gmra.mxu0 %v246
  %v504 = vpop.f32.mrf.mxu0
  %v505 = vadd.f32 %v100, %v504
  %v506 = vpop.f32.mrf.mxu0
  %v507 = vpop.f32.mrf.mxu0
  %v508 = vadd.f32 %v100, %v507
  %v509 = vpop.f32.mrf.mxu0
  %510 = vmatprep.mubr.bf16.mxu0 0
  %511 = vmatmul.mubr.bf16.gmra.mxu0 %v247
  %v512 = vpop.f32.mrf.mxu0
  %v513 = vadd.f32 %v100, %v512
  %v514 = vpop.f32.mrf.mxu0
  %v515 = vpop.f32.mrf.mxu0
  %v516 = vadd.f32 %v100, %v515
  %v517 = vpop.f32.mrf.mxu0
  %518 = vmatprep.mubr.bf16.mxu0 0
  %519 = vmatmul.mubr.bf16.gmra.mxu0 %v248
  %v520 = vpop.f32.mrf.mxu0
  %v521 = vadd.f32 %v100, %v520
  %v522 = vpop.f32.mrf.mxu0
  %v523 = vpop.f32.mrf.mxu0
  %v524 = vadd.f32 %v100, %v523
  %v525 = vpop.f32.mrf.mxu0
  %526 = vmatprep.mubr.bf16.mxu0 0
  %527 = vmatmul.mubr.bf16.gmra.mxu0 %v249
  %v528 = vpop.f32.mrf.mxu0
  %v529 = vadd.f32 %v100, %v528
  %v530 = vpop.f32.mrf.mxu0
  %v531 = vpop.f32.mrf.mxu0
  %v532 = vadd.f32 %v100, %v531
  %v533 = vpop.f32.mrf.mxu0
  %534 = vmatprep.mubr.bf16.mxu0 0
  %535 = vmatmul.mubr.bf16.gmra.mxu0 %v250
  %v536 = vpop.f32.mrf.mxu0
  %v537 = vadd.f32 %v100, %v536
  %v538 = vpop.f32.mrf.mxu0
  %v539 = vpop.f32.mrf.mxu0
  %v540 = vadd.f32 %v100, %v539
  %v541 = vpop.f32.mrf.mxu0
  %542 = vmatprep.mubr.bf16.mxu0 0
  %543 = vmatmul.mubr.bf16.gmra.mxu0 %v251
  %v544 = vpop.f32.mrf.mxu0
  %v545 = vadd.f32 %v100, %v544
  %v546 = vpop.f32.mrf.mxu0
  %v547 = vpop.f32.mrf.mxu0
  %v548 = vadd.f32 %v100, %v547
  %v549 = vpop.f32.mrf.mxu0
  %550 = vmatprep.mubr.bf16.mxu0 0
  %551 = vmatmul.mubr.bf16.gmra.mxu0 %v252
  %v552 = vpop.f32.mrf.mxu0
  %v553 = vadd.f32 %v100, %v552
  %v554 = vpop.f32.mrf.mxu0
  %v555 = vpop.f32.mrf.mxu0
  %v556 = vadd.f32 %v100, %v555
  %v557 = vpop.f32.mrf.mxu0
  %558 = vmatprep.mubr.bf16.mxu0 0
  %559 = vmatmul.mubr.bf16.gmra.mxu0 %v253
  %v560 = vpop.f32.mrf.mxu0
  %v561 = vadd.f32 %v100, %v560
  %v562 = vpop.f32.mrf.mxu0
  %v563 = vpop.f32.mrf.mxu0
  %v564 = vadd.f32 %v100, %v563
  %v565 = vpop.f32.mrf.mxu0
  %566 = vmatprep.mubr.bf16.mxu0 0
  %567 = vmatmul.mubr.bf16.gmra.mxu0 %v254
  %v568 = vpop.f32.mrf.mxu0
  %v569 = vadd.f32 %v100, %v568
  %v570 = vpop.f32.mrf.mxu0
  %v571 = vpop.f32.mrf.mxu0
  %v572 = vadd.f32 %v100, %v571
  %v573 = vpop.f32.mrf.mxu0
  %574 = vmatprep.mubr.bf16.mxu0 0
  %575 = vmatmul.mubr.bf16.gmra.mxu0 %v255
  %v576 = vpop.f32.mrf.mxu0
  %v577 = vadd.f32 %v100, %v576
  %v578 = vpop.f32.mrf.mxu0
  %v579 = vpop.f32.mrf.mxu0
  %v580 = vadd.f32 %v100, %v579
  %v581 = vpop.f32.mrf.mxu0
  %582 = vmatprep.mubr.bf16.mxu0 0
  %583 = vmatmul.mubr.bf16.gmra.mxu0 %v256
  %v584 = vpop.f32.mrf.mxu0
  %v585 = vadd.f32 %v100, %v584
  %v586 = vpop.f32.mrf.mxu0
  %v587 = vpop.f32.mrf.mxu0
  %v588 = vadd.f32 %v100, %v587
  %v589 = vpop.f32.mrf.mxu0
  %590 = vmatprep.mubr.bf16.mxu0 0
  %591 = vmatmul.mubr.bf16.gmra.mxu0 %v257
  %v592 = vpop.f32.mrf.mxu0
  %v593 = vadd.f32 %v100, %v592
  %v594 = vpop.f32.mrf.mxu0
  %v595 = vpop.f32.mrf.mxu0
  %v596 = vadd.f32 %v100, %v595
  %v597 = vpop.f32.mrf.mxu0
  %598 = vmatprep.mubr.bf16.mxu0 0
  %599 = vmatmul.mubr.bf16.gmra.mxu0 %v258
  %v600 = vpop.f32.mrf.mxu0
  %v601 = vadd.f32 %v100, %v600
  %v602 = vpop.f32.mrf.mxu0
  %v603 = vpop.f32.mrf.mxu0
  %v604 = vadd.f32 %v100, %v603
  %v605 = vpop.f32.mrf.mxu0
  %606 = vmatprep.mubr.bf16.mxu0 0
  %607 = vmatmul.mubr.bf16.gmra.mxu0 %v259
  %v608 = vpop.f32.mrf.mxu0
  %v609 = vadd.f32 %v100, %v608
  %v610 = vpop.f32.mrf.mxu0
  %v611 = vpop.f32.mrf.mxu0
  %v612 = vadd.f32 %v100, %v611
  %v613 = vpop.f32.mrf.mxu0
  %614 = vmatprep.mubr.bf16.mxu0 0
  %615 = vmatmul.mubr.bf16.gmra.mxu0 %v260
  %v616 = vpop.f32.mrf.mxu0
  %v617 = vadd.f32 %v100, %v616
  %v618 = vpop.f32.mrf.mxu0
  %v619 = vpop.f32.mrf.mxu0
  %v620 = vadd.f32 %v100, %v619
  %v621 = vpop.f32.mrf.mxu0
  %622 = vmatprep.mubr.bf16.mxu0 0
  %623 = vmatmul.mubr.bf16.gmra.mxu0 %v261
  %v624 = vpop.f32.mrf.mxu0
  %v625 = vadd.f32 %v100, %v624
  %v626 = vpop.f32.mrf.mxu0
  %v627 = vpop.f32.mrf.mxu0
  %v628 = vadd.f32 %v100, %v627
  %v629 = vpop.f32.mrf.mxu0
  %630 = vdwg.mxu0
  %vm631 = vcmp.gt.f32.partialorder %v377, 0.0
  %vm632 = vcmp.gt.f32.partialorder %v380, 0.0
  %vm633 = vcmp.gt.f32.partialorder %v385, 0.0
  %vm634 = vcmp.gt.f32.partialorder %v388, 0.0
  %vm635 = vcmp.gt.f32.partialorder %v393, 0.0
  %vm636 = vcmp.gt.f32.partialorder %v396, 0.0
  %vm637 = vcmp.gt.f32.partialorder %v401, 0.0
  %vm638 = vcmp.gt.f32.partialorder %v404, 0.0
  %vm639 = vcmp.gt.f32.partialorder %v409, 0.0
  %vm640 = vcmp.gt.f32.partialorder %v412, 0.0
  %vm641 = vcmp.gt.f32.partialorder %v417, 0.0
  %vm642 = vcmp.gt.f32.partialorder %v420, 0.0
  %vm643 = vcmp.gt.f32.partialorder %v425, 0.0
  %vm644 = vcmp.gt.f32.partialorder %v428, 0.0
  %vm645 = vcmp.gt.f32.partialorder %v433, 0.0
  %vm646 = vcmp.gt.f32.partialorder %v436, 0.0
  %vm647 = vcmp.gt.f32.partialorder %v441, 0.0
  %vm648 = vcmp.gt.f32.partialorder %v444, 0.0
  %vm649 = vcmp.gt.f32.partialorder %v449, 0.0
  %vm650 = vcmp.gt.f32.partialorder %v452, 0.0
  %vm651 = vcmp.gt.f32.partialorder %v457, 0.0
  %vm652 = vcmp.gt.f32.partialorder %v460, 0.0
  %vm653 = vcmp.gt.f32.partialorder %v465, 0.0
  %vm654 = vcmp.gt.f32.partialorder %v468, 0.0
  %vm655 = vcmp.gt.f32.partialorder %v473, 0.0
  %vm656 = vcmp.gt.f32.partialorder %v476, 0.0
  %vm657 = vcmp.gt.f32.partialorder %v481, 0.0
  %vm658 = vcmp.gt.f32.partialorder %v484, 0.0
  %vm659 = vcmp.gt.f32.partialorder %v489, 0.0
  %vm660 = vcmp.gt.f32.partialorder %v492, 0.0
  %vm661 = vcmp.gt.f32.partialorder %v497, 0.0
  %vm662 = vcmp.gt.f32.partialorder %v500, 0.0
  %vm663 = vcmp.gt.f32.partialorder %v505, 0.0
  %vm664 = vcmp.gt.f32.partialorder %v508, 0.0
  %vm665 = vcmp.gt.f32.partialorder %v513, 0.0
  %vm666 = vcmp.gt.f32.partialorder %v516, 0.0
  %vm667 = vcmp.gt.f32.partialorder %v521, 0.0
  %vm668 = vcmp.gt.f32.partialorder %v524, 0.0
  %vm669 = vcmp.gt.f32.partialorder %v529, 0.0
  %vm670 = vcmp.gt.f32.partialorder %v532, 0.0
  %vm671 = vcmp.gt.f32.partialorder %v537, 0.0
  %vm672 = vcmp.gt.f32.partialorder %v540, 0.0
  %vm673 = vcmp.gt.f32.partialorder %v545, 0.0
  %vm674 = vcmp.gt.f32.partialorder %v548, 0.0
  %vm675 = vcmp.gt.f32.partialorder %v553, 0.0
  %vm676 = vcmp.gt.f32.partialorder %v556, 0.0
  %vm677 = vcmp.gt.f32.partialorder %v561, 0.0
  %vm678 = vcmp.gt.f32.partialorder %v564, 0.0
  %vm679 = vcmp.gt.f32.partialorder %v569, 0.0
  %vm680 = vcmp.gt.f32.partialorder %v572, 0.0
  %vm681 = vcmp.gt.f32.partialorder %v577, 0.0
  %vm682 = vcmp.gt.f32.partialorder %v580, 0.0
  %vm683 = vcmp.gt.f32.partialorder %v585, 0.0
  %vm684 = vcmp.gt.f32.partialorder %v588, 0.0
  %vm685 = vcmp.gt.f32.partialorder %v593, 0.0
  %vm686 = vcmp.gt.f32.partialorder %v596, 0.0
  %vm687 = vcmp.gt.f32.partialorder %v601, 0.0
  %vm688 = vcmp.gt.f32.partialorder %v604, 0.0
  %vm689 = vcmp.gt.f32.partialorder %v609, 0.0
  %vm690 = vcmp.gt.f32.partialorder %v612, 0.0
  %vm691 = vcmp.gt.f32.partialorder %v617, 0.0
  %vm692 = vcmp.gt.f32.partialorder %v620, 0.0
  %vm693 = vcmp.gt.f32.partialorder %v625, 0.0
  %vm694 = vcmp.gt.f32.partialorder %v628, 0.0
  %v695 = vmul.f32 %v377, 0.1
  %v696 = vmul.f32 %v380, 0.1
  %v697 = vmul.f32 %v385, 0.1
  %v698 = vmul.f32 %v388, 0.1
  %v699 = vmul.f32 %v393, 0.1
  %v700 = vmul.f32 %v396, 0.1
  %v701 = vmul.f32 %v401, 0.1
  %v702 = vmul.f32 %v404, 0.1
  %v703 = vmul.f32 %v409, 0.1
  %v704 = vmul.f32 %v412, 0.1
  %v705 = vmul.f32 %v417, 0.1
  %v706 = vmul.f32 %v420, 0.1
  %v707 = vmul.f32 %v425, 0.1
  %v708 = vmul.f32 %v428, 0.1
  %v709 = vmul.f32 %v433, 0.1
  %v710 = vmul.f32 %v436, 0.1
  %v711 = vmul.f32 %v441, 0.1
  %v712 = vmul.f32 %v444, 0.1
  %v713 = vmul.f32 %v449, 0.1
  %v714 = vmul.f32 %v452, 0.1
  %v715 = vmul.f32 %v457, 0.1
  %v716 = vmul.f32 %v460, 0.1
  %v717 = vmul.f32 %v465, 0.1
  %v718 = vmul.f32 %v468, 0.1
  %v719 = vmul.f32 %v473, 0.1
  %v720 = vmul.f32 %v476, 0.1
  %v721 = vmul.f32 %v481, 0.1
  %v722 = vmul.f32 %v484, 0.1
  %v723 = vmul.f32 %v489, 0.1
  %v724 = vmul.f32 %v492, 0.1
  %v725 = vmul.f32 %v497, 0.1
  %v726 = vmul.f32 %v500, 0.1
  %v727 = vmul.f32 %v505, 0.1
  %v728 = vmul.f32 %v508, 0.1
  %v729 = vmul.f32 %v513, 0.1
  %v730 = vmul.f32 %v516, 0.1
  %v731 = vmul.f32 %v521, 0.1
  %v732 = vmul.f32 %v524, 0.1
  %v733 = vmul.f32 %v529, 0.1
  %v734 = vmul.f32 %v532, 0.1
  %v735 = vmul.f32 %v537, 0.1
  %v736 = vmul.f32 %v540, 0.1
  %v737 = vmul.f32 %v545, 0.1
  %v738 = vmul.f32 %v548, 0.1
  %v739 = vmul.f32 %v553, 0.1
  %v740 = vmul.f32 %v556, 0.1
  %v741 = vmul.f32 %v561, 0.1
  %v742 = vmul.f32 %v564, 0.1
  %v743 = vmul.f32 %v569, 0.1
  %v744 = vmul.f32 %v572, 0.1
  %v745 = vmul.f32 %v577, 0.1
  %v746 = vmul.f32 %v580, 0.1
  %v747 = vmul.f32 %v585, 0.1
  %v748 = vmul.f32 %v588, 0.1
  %v749 = vmul.f32 %v593, 0.1
  %v750 = vmul.f32 %v596, 0.1
  %v751 = vmul.f32 %v601, 0.1
  %v752 = vmul.f32 %v604, 0.1
  %v753 = vmul.f32 %v609, 0.1
  %v754 = vmul.f32 %v612, 0.1
  %v755 = vmul.f32 %v617, 0.1
  %v756 = vmul.f32 %v620, 0.1
  %v757 = vmul.f32 %v625, 0.1
  %v758 = vmul.f32 %v628, 0.1
  %v759 = vsel %vm631, %v377, %v695
  %v760 = vsel %vm632, %v380, %v696
  %v761 = vsel %vm633, %v385, %v697
  %v762 = vsel %vm634, %v388, %v698
  %v763 = vsel %vm635, %v393, %v699
  %v764 = vsel %vm636, %v396, %v700
  %v765 = vsel %vm637, %v401, %v701
  %v766 = vsel %vm638, %v404, %v702
  %v767 = vsel %vm639, %v409, %v703
  %v768 = vsel %vm640, %v412, %v704
  %v769 = vsel %vm641, %v417, %v705
  %v770 = vsel %vm642, %v420, %v706
  %v771 = vsel %vm643, %v425, %v707
  %v772 = vsel %vm644, %v428, %v708
  %v773 = vsel %vm645, %v433, %v709
  %v774 = vsel %vm646, %v436, %v710
  %v775 = vsel %vm647, %v441, %v711
  %v776 = vsel %vm648, %v444, %v712
  %v777 = vsel %vm649, %v449, %v713
  %v778 = vsel %vm650, %v452, %v714
  %v779 = vsel %vm651, %v457, %v715
  %v780 = vsel %vm652, %v460, %v716
  %v781 = vsel %vm653, %v465, %v717
  %v782 = vsel %vm654, %v468, %v718
  %v783 = vsel %vm655, %v473, %v719
  %v784 = vsel %vm656, %v476, %v720
  %v785 = vsel %vm657, %v481, %v721
  %v786 = vsel %vm658, %v484, %v722
  %v787 = vsel %vm659, %v489, %v723
  %v788 = vsel %vm660, %v492, %v724
  %v789 = vsel %vm661, %v497, %v725
  %v790 = vsel %vm662, %v500, %v726
  %v791 = vsel %vm663, %v505, %v727
  %v792 = vsel %vm664, %v508, %v728
  %v793 = vsel %vm665, %v513, %v729
  %v794 = vsel %vm666, %v516, %v730
  %v795 = vsel %vm667, %v521, %v731
  %v796 = vsel %vm668, %v524, %v732
  %v797 = vsel %vm669, %v529, %v733
  %v798 = vsel %vm670, %v532, %v734
  %v799 = vsel %vm671, %v537, %v735
  %v800 = vsel %vm672, %v540, %v736
  %v801 = vsel %vm673, %v545, %v737
  %v802 = vsel %vm674, %v548, %v738
  %v803 = vsel %vm675, %v553, %v739
  %v804 = vsel %vm676, %v556, %v740
  %v805 = vsel %vm677, %v561, %v741
  %v806 = vsel %vm678, %v564, %v742
  %v807 = vsel %vm679, %v569, %v743
  %v808 = vsel %vm680, %v572, %v744
  %v809 = vsel %vm681, %v577, %v745
  %v810 = vsel %vm682, %v580, %v746
  %v811 = vsel %vm683, %v585, %v747
  %v812 = vsel %vm684, %v588, %v748
  %v813 = vsel %vm685, %v593, %v749
  %v814 = vsel %vm686, %v596, %v750
  %v815 = vsel %vm687, %v601, %v751
  %v816 = vsel %vm688, %v604, %v752
  %v817 = vsel %vm689, %v609, %v753
  %v818 = vsel %vm690, %v612, %v754
  %v819 = vsel %vm691, %v617, %v755
  %v820 = vsel %vm692, %v620, %v756
  %v821 = vsel %vm693, %v625, %v757
  %v822 = vsel %vm694, %v628, %v758
  %v823 = vpack.c.bf16 %v760, %v759
  %v824 = vpack.c.bf16 %v762, %v761
  %v825 = vpack.c.bf16 %v764, %v763
  %v826 = vpack.c.bf16 %v766, %v765
  %v827 = vpack.c.bf16 %v768, %v767
  %v828 = vpack.c.bf16 %v770, %v769
  %v829 = vpack.c.bf16 %v772, %v771
  %v830 = vpack.c.bf16 %v774, %v773
  %v831 = vpack.c.bf16 %v776, %v775
  %v832 = vpack.c.bf16 %v778, %v777
  %v833 = vpack.c.bf16 %v780, %v779
  %v834 = vpack.c.bf16 %v782, %v781
  %v835 = vpack.c.bf16 %v784, %v783
  %v836 = vpack.c.bf16 %v786, %v785
  %v837 = vpack.c.bf16 %v788, %v787
  %v838 = vpack.c.bf16 %v790, %v789
  %v839 = vpack.c.bf16 %v792, %v791
  %v840 = vpack.c.bf16 %v794, %v793
  %v841 = vpack.c.bf16 %v796, %v795
  %v842 = vpack.c.bf16 %v798, %v797
  %v843 = vpack.c.bf16 %v800, %v799
  %v844 = vpack.c.bf16 %v802, %v801
  %v845 = vpack.c.bf16 %v804, %v803
  %v846 = vpack.c.bf16 %v806, %v805
  %v847 = vpack.c.bf16 %v808, %v807
  %v848 = vpack.c.bf16 %v810, %v809
  %v849 = vpack.c.bf16 %v812, %v811
  %v850 = vpack.c.bf16 %v814, %v813
  %v851 = vpack.c.bf16 %v816, %v815
  %v852 = vpack.c.bf16 %v818, %v817
  %v853 = vpack.c.bf16 %v820, %v819
  %v854 = vpack.c.bf16 %v822, %v821
  %v887 = vunpack.c.l.b16 %v823
  %v888 = vunpack.c.h.b16 %v823
  %v889 = vunpack.c.l.b16 %v824
  %v890 = vunpack.c.h.b16 %v824
  %v891 = vunpack.c.l.b16 %v825
  %v892 = vunpack.c.h.b16 %v825
  %v893 = vunpack.c.l.b16 %v826
  %v894 = vunpack.c.h.b16 %v826
  %v895 = vunpack.c.l.b16 %v827
  %v896 = vunpack.c.h.b16 %v827
  %v897 = vunpack.c.l.b16 %v828
  %v898 = vunpack.c.h.b16 %v828
  %v899 = vunpack.c.l.b16 %v829
  %v900 = vunpack.c.h.b16 %v829
  %v901 = vunpack.c.l.b16 %v830
  %v902 = vunpack.c.h.b16 %v830
  %v903 = vunpack.c.l.b16 %v831
  %v904 = vunpack.c.h.b16 %v831
  %v905 = vunpack.c.l.b16 %v832
  %v906 = vunpack.c.h.b16 %v832
  %v907 = vunpack.c.l.b16 %v833
  %v908 = vunpack.c.h.b16 %v833
  %v909 = vunpack.c.l.b16 %v834
  %v910 = vunpack.c.h.b16 %v834
  %v911 = vunpack.c.l.b16 %v835
  %v912 = vunpack.c.h.b16 %v835
  %v913 = vunpack.c.l.b16 %v836
  %v914 = vunpack.c.h.b16 %v836
  %v915 = vunpack.c.l.b16 %v837
  %v916 = vunpack.c.h.b16 %v837
  %v917 = vunpack.c.l.b16 %v838
  %v918 = vunpack.c.h.b16 %v838
  %v919 = vunpack.c.l.b16 %v839
  %v920 = vunpack.c.h.b16 %v839
  %v921 = vunpack.c.l.b16 %v840
  %v922 = vunpack.c.h.b16 %v840
  %v923 = vunpack.c.l.b16 %v841
  %v924 = vunpack.c.h.b16 %v841
  %v925 = vunpack.c.l.b16 %v842
  %v926 = vunpack.c.h.b16 %v842
  %v927 = vunpack.c.l.b16 %v843
  %v928 = vunpack.c.h.b16 %v843
  %v929 = vunpack.c.l.b16 %v844
  %v930 = vunpack.c.h.b16 %v844
  %v931 = vunpack.c.l.b16 %v845
  %v932 = vunpack.c.h.b16 %v845
  %v933 = vunpack.c.l.b16 %v846
  %v934 = vunpack.c.h.b16 %v846
  %v935 = vunpack.c.l.b16 %v847
  %v936 = vunpack.c.h.b16 %v847
  %v937 = vunpack.c.l.b16 %v848
  %v938 = vunpack.c.h.b16 %v848
  %v939 = vunpack.c.l.b16 %v849
  %v940 = vunpack.c.h.b16 %v849
  %v941 = vunpack.c.l.b16 %v850
  %v942 = vunpack.c.h.b16 %v850
  %v943 = vunpack.c.l.b16 %v851
  %v944 = vunpack.c.h.b16 %v851
  %v945 = vunpack.c.l.b16 %v852
  %v946 = vunpack.c.h.b16 %v852
  %v947 = vunpack.c.l.b16 %v853
  %v948 = vunpack.c.h.b16 %v853
  %v949 = vunpack.c.l.b16 %v854
  %v950 = vunpack.c.h.b16 %v854
  %v951 = vpack.c.b16 %v887, %v887
  %v952 = vpack.c.b16 %v888, %v888
  %v953 = vpack.c.b16 %v889, %v889
  %v954 = vpack.c.b16 %v890, %v890
  %v955 = vpack.c.b16 %v891, %v891
  %v956 = vpack.c.b16 %v892, %v892
  %v957 = vpack.c.b16 %v893, %v893
  %v958 = vpack.c.b16 %v894, %v894
  %v959 = vpack.c.b16 %v895, %v895
  %v960 = vpack.c.b16 %v896, %v896
  %v961 = vpack.c.b16 %v897, %v897
  %v962 = vpack.c.b16 %v898, %v898
  %v963 = vpack.c.b16 %v899, %v899
  %v964 = vpack.c.b16 %v900, %v900
  %v965 = vpack.c.b16 %v901, %v901
  %v966 = vpack.c.b16 %v902, %v902
  %v967 = vpack.c.b16 %v903, %v903
  %v968 = vpack.c.b16 %v904, %v904
  %v969 = vpack.c.b16 %v905, %v905
  %v970 = vpack.c.b16 %v906, %v906
  %v971 = vpack.c.b16 %v907, %v907
  %v972 = vpack.c.b16 %v908, %v908
  %v973 = vpack.c.b16 %v909, %v909
  %v974 = vpack.c.b16 %v910, %v910
  %v975 = vpack.c.b16 %v911, %v911
  %v976 = vpack.c.b16 %v912, %v912
  %v977 = vpack.c.b16 %v913, %v913
  %v978 = vpack.c.b16 %v914, %v914
  %v979 = vpack.c.b16 %v915, %v915
  %v980 = vpack.c.b16 %v916, %v916
  %v981 = vpack.c.b16 %v917, %v917
  %v982 = vpack.c.b16 %v918, %v918
  %v983 = vpack.c.b16 %v919, %v919
  %v984 = vpack.c.b16 %v920, %v920
  %v985 = vpack.c.b16 %v921, %v921
  %v986 = vpack.c.b16 %v922, %v922
  %v987 = vpack.c.b16 %v923, %v923
  %v988 = vpack.c.b16 %v924, %v924
  %v989 = vpack.c.b16 %v925, %v925
  %v990 = vpack.c.b16 %v926, %v926
  %v991 = vpack.c.b16 %v927, %v927
  %v992 = vpack.c.b16 %v928, %v928
  %v993 = vpack.c.b16 %v929, %v929
  %v994 = vpack.c.b16 %v930, %v930
  %v995 = vpack.c.b16 %v931, %v931
  %v996 = vpack.c.b16 %v932, %v932
  %v997 = vpack.c.b16 %v933, %v933
  %v998 = vpack.c.b16 %v934, %v934
  %v999 = vpack.c.b16 %v935, %v935
  %v1000 = vpack.c.b16 %v936, %v936
  %v1001 = vpack.c.b16 %v937, %v937
  %v1002 = vpack.c.b16 %v938, %v938
  %v1003 = vpack.c.b16 %v939, %v939
  %v1004 = vpack.c.b16 %v940, %v940
  %v1005 = vpack.c.b16 %v941, %v941
  %v1006 = vpack.c.b16 %v942, %v942
  %v1007 = vpack.c.b16 %v943, %v943
  %v1008 = vpack.c.b16 %v944, %v944
  %v1009 = vpack.c.b16 %v945, %v945
  %v1010 = vpack.c.b16 %v946, %v946
  %v1011 = vpack.c.b16 %v947, %v947
  %v1012 = vpack.c.b16 %v948, %v948
  %v1013 = vpack.c.b16 %v949, %v949
  %v1014 = vpack.c.b16 %v950, %v950
  %1079 = vst [vmem:[%s3] sm:$0xf] %v951
  %1080 = vst [vmem:[%s3 + $0x4] sm:$0xf] %v952
  %1081 = vst [vmem:[%s3 + $0x8] sm:$0xf] %v953
  %1082 = vst [vmem:[%s3 + $0xc] sm:$0xf] %v954
  %1083 = vst [vmem:[%s3 + $0x10] sm:$0xf] %v955
  %1084 = vst [vmem:[%s3 + $0x14] sm:$0xf] %v956
  %1085 = vst [vmem:[%s3 + $0x18] sm:$0xf] %v957
  %1086 = vst [vmem:[%s3 + $0x1c] sm:$0xf] %v958
  %1087 = vst [vmem:[%s3 + $0x20] sm:$0xf] %v959
  %1088 = vst [vmem:[%s3 + $0x24] sm:$0xf] %v960
  %1089 = vst [vmem:[%s3 + $0x28] sm:$0xf] %v961
  %1090 = vst [vmem:[%s3 + $0x2c] sm:$0xf] %v962
  %1091 = vst [vmem:[%s3 + $0x30] sm:$0xf] %v963
  %1092 = vst [vmem:[%s3 + $0x34] sm:$0xf] %v964
  %1093 = vst [vmem:[%s3 + $0x38] sm:$0xf] %v965
  %1094 = vst [vmem:[%s3 + $0x3c] sm:$0xf] %v966
  %1095 = vst [vmem:[%s3 + $0x40] sm:$0xf] %v967
  %1096 = vst [vmem:[%s3 + $0x44] sm:$0xf] %v968
  %1097 = vst [vmem:[%s3 + $0x48] sm:$0xf] %v969
  %1098 = vst [vmem:[%s3 + $0x4c] sm:$0xf] %v970
  %1099 = vst [vmem:[%s3 + $0x50] sm:$0xf] %v971
  %1100 = vst [vmem:[%s3 + $0x54] sm:$0xf] %v972
  %1101 = vst [vmem:[%s3 + $0x58] sm:$0xf] %v973
  %1102 = vst [vmem:[%s3 + $0x5c] sm:$0xf] %v974
  %1103 = vst [vmem:[%s3 + $0x60] sm:$0xf] %v975
  %1104 = vst [vmem:[%s3 + $0x64] sm:$0xf] %v976
  %1105 = vst [vmem:[%s3 + $0x68] sm:$0xf] %v977
  %1106 = vst [vmem:[%s3 + $0x6c] sm:$0xf] %v978
  %1107 = vst [vmem:[%s3 + $0x70] sm:$0xf] %v979
  %1108 = vst [vmem:[%s3 + $0x74] sm:$0xf] %v980
  %1109 = vst [vmem:[%s3 + $0x78] sm:$0xf] %v981
  %1110 = vst [vmem:[%s3 + $0x7c] sm:$0xf] %v982
  %1111 = vst [vmem:[%s3 + $0x80] sm:$0xf] %v983
  %1112 = vst [vmem:[%s3 + $0x84] sm:$0xf] %v984
  %1113 = vst [vmem:[%s3 + $0x88] sm:$0xf] %v985
  %1114 = vst [vmem:[%s3 + $0x8c] sm:$0xf] %v986
  %1115 = vst [vmem:[%s3 + $0x90] sm:$0xf] %v987
  %1116 = vst [vmem:[%s3 + $0x94] sm:$0xf] %v988
  %1117 = vst [vmem:[%s3 + $0x98] sm:$0xf] %v989
  %1118 = vst [vmem:[%s3 + $0x9c] sm:$0xf] %v990
  %1119 = vst [vmem:[%s3 + $0xa0] sm:$0xf] %v991
  %1120 = vst [vmem:[%s3 + $0xa4] sm:$0xf] %v992
  %1121 = vst [vmem:[%s3 + $0xa8] sm:$0xf] %v993
  %1122 = vst [vmem:[%s3 + $0xac] sm:$0xf] %v994
  %1123 = vst [vmem:[%s3 + $0xb0] sm:$0xf] %v995
  %1124 = vst [vmem:[%s3 + $0xb4] sm:$0xf] %v996
  %1125 = vst [vmem:[%s3 + $0xb8] sm:$0xf] %v997
  %1126 = vst [vmem:[%s3 + $0xbc] sm:$0xf] %v998
  %1127 = vst [vmem:[%s3 + $0xc0] sm:$0xf] %v999
  %1128 = vst [vmem:[%s3 + $0xc4] sm:$0xf] %v1000
  %1129 = vst [vmem:[%s3 + $0xc8] sm:$0xf] %v1001
  %1130 = vst [vmem:[%s3 + $0xcc] sm:$0xf] %v1002
  %1131 = vst [vmem:[%s3 + $0xd0] sm:$0xf] %v1003
  %1132 = vst [vmem:[%s3 + $0xd4] sm:$0xf] %v1004
  %1133 = vst [vmem:[%s3 + $0xd8] sm:$0xf] %v1005
  %1134 = vst [vmem:[%s3 + $0xdc] sm:$0xf] %v1006
  %1135 = vst [vmem:[%s3 + $0xe0] sm:$0xf] %v1007
  %1136 = vst [vmem:[%s3 + $0xe4] sm:$0xf] %v1008
  %1137 = vst [vmem:[%s3 + $0xe8] sm:$0xf] %v1009
  %1138 = vst [vmem:[%s3 + $0xec] sm:$0xf] %v1010
  %1139 = vst [vmem:[%s3 + $0xf0] sm:$0xf] %v1011
  %1140 = vst [vmem:[%s3 + $0xf4] sm:$0xf] %v1012
  %1141 = vst [vmem:[%s3 + $0xf8] sm:$0xf] %v1013
  %1142 = vst [vmem:[%s3 + $0xfc] sm:$0xf] %v1014
  // Predicated region
  $region14: #{darknet_forward.7} parent=0 // pred_check
    _
  $region15: #{darknet_forward.7} parent=0 // pred_check_branch
    %1144 = sbr.rel (0) target = $region17
  $region16: #{darknet_forward.7} parent=0 // pred_region
    _
  $region17: #{darknet_forward.7} parent=0 // pred_fallthru
    _
  // Predicated region
  $region18: #{darknet_forward.7} parent=0 // pred_check
    _
  $region19: #{darknet_forward.7} parent=0 // pred_check_branch
    %1146 = sbr.rel (0) target = $region21
  $region20: #{darknet_forward.7} parent=0 // pred_region
    _
  $region21: #{darknet_forward.7} parent=0 // pred_fallthru
    _

// kernel: darknet_forward.9
$region0: #{darknet_forward.9}
  #allocation0 [shape = 'u32[]', space=smem, size = 0x4, offset = 0x4, fixed_abs, tag = 'smem constant byte address 0x4 - core index']
  #allocation1 [shape = 'u32[144,128]{1,0:T(1,128)}', space=vmem, size = 0x12000, scoped, tag = 'internal scratch']
  %s0 = inlined_call_operand.vmem [shape: bf16[128,256], index: 0, kind: input, shape index: {}]
  %s1 = inlined_call_operand.vmem [shape: bf16[256,128], index: 1, kind: input, shape index: {}]
  %s2 = inlined_call_operand.vmem [shape: f32[1,128], index: 2, kind: input, shape index: {}]
  %s3 = inlined_call_operand.vmem [shape: bf16[128,128], index: 3, kind: input, shape index: {}]
  %s4 = inlined_call_operand.vmem [shape: bf16[128,128], index: 4, kind: output, shape index: {}]
  %s5 = sld [smem:[#allocation0]]
  $region26: #{darknet_forward.9} parent=0
    _
  %s7 = ssub.s32 1, %s5
  %s8 = scalar_select 0, %s7, %s5
  // Predicated region
  $region2: #{darknet_forward.9} parent=0 // pred_check
    _
  $region3: #{darknet_forward.9} parent=0 // pred_check_branch
    %10 = sbr.rel (0) target = $region5
  $region4: #{darknet_forward.9} parent=0 // pred_region
    _
  $region5: #{darknet_forward.9} parent=0 // pred_fallthru
    _
  // Predicated region
  $region6: #{darknet_forward.9} parent=0 // pred_check
    _
  $region7: #{darknet_forward.9} parent=0 // pred_check_branch
    %12 = sbr.rel (0) target = $region9
  $region8: #{darknet_forward.9} parent=0 // pred_region
    _
  $region9: #{darknet_forward.9} parent=0 // pred_fallthru
    _
  // Predicated region
  $region10: #{darknet_forward.9} parent=0 // pred_check
    _
  $region11: #{darknet_forward.9} parent=0 // pred_check_branch
    %14 = sbr.rel (0) target = $region13
  $region12: #{darknet_forward.9} parent=0 // pred_region
    _
  $region13: #{darknet_forward.9} parent=0 // pred_fallthru
    _
  // Predicated region
  $region14: #{darknet_forward.9} parent=0 // pred_check
    _
  $region15: #{darknet_forward.9} parent=0 // pred_check_branch
    %16 = sbr.rel (0) target = $region17
  $region16: #{darknet_forward.9} parent=0 // pred_region
    _
  $region17: #{darknet_forward.9} parent=0 // pred_fallthru
    _
  %v18 = vld [vmem:[%s0] sm:$0xff]
  %v19 = vld [vmem:[%s0 + $0x8] sm:$0xff]
  %v20 = vld [vmem:[%s0 + $0x10] sm:$0xff]
  %v21 = vld [vmem:[%s0 + $0x18] sm:$0xff]
  %v22 = vld [vmem:[%s0 + $0x20] sm:$0xff]
  %v23 = vld [vmem:[%s0 + $0x28] sm:$0xff]
  %v24 = vld [vmem:[%s0 + $0x30] sm:$0xff]
  %v25 = vld [vmem:[%s0 + $0x38] sm:$0xff]
  %v26 = vld [vmem:[%s0 + $0x40] sm:$0xff]
  %v27 = vld [vmem:[%s0 + $0x48] sm:$0xff]
  %v28 = vld [vmem:[%s0 + $0x50] sm:$0xff]
  %v29 = vld [vmem:[%s0 + $0x58] sm:$0xff]
  %v30 = vld [vmem:[%s0 + $0x60] sm:$0xff]
  %v31 = vld [vmem:[%s0 + $0x68] sm:$0xff]
  %v32 = vld [vmem:[%s0 + $0x70] sm:$0xff]
  %v33 = vld [vmem:[%s0 + $0x78] sm:$0xff]
  %v34 = vld [vmem:[%s1] sm:$0xf]
  %v35 = vld [vmem:[%s1 + $0x4] sm:$0xf]
  %v36 = vld [vmem:[%s1 + $0x8] sm:$0xf]
  %v37 = vld [vmem:[%s1 + $0xc] sm:$0xf]
  %v38 = vld [vmem:[%s1 + $0x10] sm:$0xf]
  %v39 = vld [vmem:[%s1 + $0x14] sm:$0xf]
  %v40 = vld [vmem:[%s1 + $0x18] sm:$0xf]
  %v41 = vld [vmem:[%s1 + $0x1c] sm:$0xf]
  %v42 = vld [vmem:[%s1 + $0x20] sm:$0xf]
  %v43 = vld [vmem:[%s1 + $0x24] sm:$0xf]
  %v44 = vld [vmem:[%s1 + $0x28] sm:$0xf]
  %v45 = vld [vmem:[%s1 + $0x2c] sm:$0xf]
  %v46 = vld [vmem:[%s1 + $0x30] sm:$0xf]
  %v47 = vld [vmem:[%s1 + $0x34] sm:$0xf]
  %v48 = vld [vmem:[%s1 + $0x38] sm:$0xf]
  %v49 = vld [vmem:[%s1 + $0x3c] sm:$0xf]
  %v50 = vld [vmem:[%s1 + $0x40] sm:$0xf]
  %v51 = vld [vmem:[%s1 + $0x44] sm:$0xf]
  %v52 = vld [vmem:[%s1 + $0x48] sm:$0xf]
  %v53 = vld [vmem:[%s1 + $0x4c] sm:$0xf]
  %v54 = vld [vmem:[%s1 + $0x50] sm:$0xf]
  %v55 = vld [vmem:[%s1 + $0x54] sm:$0xf]
  %v56 = vld [vmem:[%s1 + $0x58] sm:$0xf]
  %v57 = vld [vmem:[%s1 + $0x5c] sm:$0xf]
  %v58 = vld [vmem:[%s1 + $0x60] sm:$0xf]
  %v59 = vld [vmem:[%s1 + $0x64] sm:$0xf]
  %v60 = vld [vmem:[%s1 + $0x68] sm:$0xf]
  %v61 = vld [vmem:[%s1 + $0x6c] sm:$0xf]
  %v62 = vld [vmem:[%s1 + $0x70] sm:$0xf]
  %v63 = vld [vmem:[%s1 + $0x74] sm:$0xf]
  %v64 = vld [vmem:[%s1 + $0x78] sm:$0xf]
  %v65 = vld [vmem:[%s1 + $0x7c] sm:$0xf]
  %v66 = vld [vmem:[%s2] sm:$0x1]
  %v68 = vlaneseq
  %v69 = vshrl.u32 %v68, 7
  %v70 = vsub.s32 0, %v69
  %v71 = vrot.slane %v66, %v70
  %v89 = vunpack.c.l.b16 %v18
  %v90 = vunpack.c.h.b16 %v18
  %v91 = vunpack.c.l.b16 %v19
  %v92 = vunpack.c.h.b16 %v19
  %v93 = vunpack.c.l.b16 %v20
  %v94 = vunpack.c.h.b16 %v20
  %v95 = vunpack.c.l.b16 %v21
  %v96 = vunpack.c.h.b16 %v21
  %v97 = vunpack.c.l.b16 %v22
  %v98 = vunpack.c.h.b16 %v22
  %v99 = vunpack.c.l.b16 %v23
  %v100 = vunpack.c.h.b16 %v23
  %v101 = vunpack.c.l.b16 %v24
  %v102 = vunpack.c.h.b16 %v24
  %v103 = vunpack.c.l.b16 %v25
  %v104 = vunpack.c.h.b16 %v25
  %v105 = vunpack.c.l.b16 %v26
  %v106 = vunpack.c.h.b16 %v26
  %v107 = vunpack.c.l.b16 %v27
  %v108 = vunpack.c.h.b16 %v27
  %v109 = vunpack.c.l.b16 %v28
  %v110 = vunpack.c.h.b16 %v28
  %v111 = vunpack.c.l.b16 %v29
  %v112 = vunpack.c.h.b16 %v29
  %v113 = vunpack.c.l.b16 %v30
  %v114 = vunpack.c.h.b16 %v30
  %v115 = vunpack.c.l.b16 %v31
  %v116 = vunpack.c.h.b16 %v31
  %v117 = vunpack.c.l.b16 %v32
  %v118 = vunpack.c.h.b16 %v32
  %v119 = vunpack.c.l.b16 %v33
  %v120 = vunpack.c.h.b16 %v33
  %v121 = vpack.c.b16 %v91, %v89
  %v122 = vpack.c.b16 %v92, %v90
  %v123 = vpack.c.b16 %v95, %v93
  %v124 = vpack.c.b16 %v96, %v94
  %v125 = vpack.c.b16 %v99, %v97
  %v126 = vpack.c.b16 %v100, %v98
  %v127 = vpack.c.b16 %v103, %v101
  %v128 = vpack.c.b16 %v104, %v102
  %v129 = vpack.c.b16 %v107, %v105
  %v130 = vpack.c.b16 %v108, %v106
  %v131 = vpack.c.b16 %v111, %v109
  %v132 = vpack.c.b16 %v112, %v110
  %v133 = vpack.c.b16 %v115, %v113
  %v134 = vpack.c.b16 %v116, %v114
  %v135 = vpack.c.b16 %v119, %v117
  %v136 = vpack.c.b16 %v120, %v118
  %v185 = vunpack.c.l.b16 %v34
  %v186 = vunpack.c.l.b16 %v35
  %v187 = vunpack.c.l.b16 %v36
  %v188 = vunpack.c.l.b16 %v37
  %v189 = vunpack.c.l.b16 %v38
  %v190 = vunpack.c.l.b16 %v39
  %v191 = vunpack.c.l.b16 %v40
  %v192 = vunpack.c.l.b16 %v41
  %v193 = vunpack.c.l.b16 %v42
  %v194 = vunpack.c.l.b16 %v43
  %v195 = vunpack.c.l.b16 %v44
  %v196 = vunpack.c.l.b16 %v45
  %v197 = vunpack.c.l.b16 %v46
  %v198 = vunpack.c.l.b16 %v47
  %v199 = vunpack.c.l.b16 %v48
  %v200 = vunpack.c.l.b16 %v49
  %v201 = vunpack.c.l.b16 %v50
  %v202 = vunpack.c.l.b16 %v51
  %v203 = vunpack.c.l.b16 %v52
  %v204 = vunpack.c.l.b16 %v53
  %v205 = vunpack.c.l.b16 %v54
  %v206 = vunpack.c.l.b16 %v55
  %v207 = vunpack.c.l.b16 %v56
  %v208 = vunpack.c.l.b16 %v57
  %v209 = vunpack.c.l.b16 %v58
  %v210 = vunpack.c.l.b16 %v59
  %v211 = vunpack.c.l.b16 %v60
  %v212 = vunpack.c.l.b16 %v61
  %v213 = vunpack.c.l.b16 %v62
  %v214 = vunpack.c.l.b16 %v63
  %v215 = vunpack.c.l.b16 %v64
  %v216 = vunpack.c.l.b16 %v65
  %v217 = vpack.c.b16 %v186, %v185
  %v218 = vpack.c.b16 %v188, %v187
  %v219 = vpack.c.b16 %v190, %v189
  %v220 = vpack.c.b16 %v192, %v191
  %v221 = vpack.c.b16 %v194, %v193
  %v222 = vpack.c.b16 %v196, %v195
  %v223 = vpack.c.b16 %v198, %v197
  %v224 = vpack.c.b16 %v200, %v199
  %v225 = vpack.c.b16 %v202, %v201
  %v226 = vpack.c.b16 %v204, %v203
  %v227 = vpack.c.b16 %v206, %v205
  %v228 = vpack.c.b16 %v208, %v207
  %v229 = vpack.c.b16 %v210, %v209
  %v230 = vpack.c.b16 %v212, %v211
  %v231 = vpack.c.b16 %v214, %v213
  %v232 = vpack.c.b16 %v216, %v215
  %249 = vmatprep.subr.bf16.mxu0 0
  %250 = vmatpush1.bf16.msra.mxu0 %v224
  %251 = vmatprep.subr.bf16.mxu0 0
  %252 = vmatpush1.bf16.msra.mxu0 %v223
  %253 = vmatprep.subr.bf16.mxu0 0
  %254 = vmatpush1.bf16.msra.mxu0 %v222
  %255 = vmatprep.subr.bf16.mxu0 0
  %256 = vmatpush1.bf16.msra.mxu0 %v221
  %257 = vmatprep.subr.bf16.mxu0 0
  %258 = vmatpush1.bf16.msra.mxu0 %v220
  %259 = vmatprep.subr.bf16.mxu0 0
  %260 = vmatpush1.bf16.msra.mxu0 %v219
  %261 = vmatprep.subr.bf16.mxu0 0
  %262 = vmatpush1.bf16.msra.mxu0 %v218
  %263 = vmatprep.subr.bf16.mxu0 0
  %264 = vmatpush1.bf16.msra.mxu0 %v217
  %265 = vmatprep.subr.bf16.mxu0 0
  %266 = vmatpush2.bf16.msra.mxu0 %v232
  %267 = vmatprep.subr.bf16.mxu0 0
  %268 = vmatpush2.bf16.msra.mxu0 %v231
  %269 = vmatprep.subr.bf16.mxu0 0
  %270 = vmatpush2.bf16.msra.mxu0 %v230
  %271 = vmatprep.subr.bf16.mxu0 0
  %272 = vmatpush2.bf16.msra.mxu0 %v229
  %273 = vmatprep.subr.bf16.mxu0 0
  %274 = vmatpush2.bf16.msra.mxu0 %v228
  %275 = vmatprep.subr.bf16.mxu0 0
  %276 = vmatpush2.bf16.msra.mxu0 %v227
  %277 = vmatprep.subr.bf16.mxu0 0
  %278 = vmatpush2.bf16.msra.mxu0 %v226
  %279 = vmatprep.subr.bf16.mxu0 0
  %280 = vmatpush2.bf16.msra.mxu0 %v225
  %281 = vmatprep.mubr.bf16.mxu0 %v122
  %282 = vmatmul.mubr.bf16.gmra.mxu0 %v121
  %v283 = vpop.f32.mrf.mxu0
  %v284 = vadd.f32 %v71, %v283
  %v285 = vpop.f32.mrf.mxu0
  %v286 = vpop.f32.mrf.mxu0
  %v287 = vadd.f32 %v71, %v286
  %v288 = vpop.f32.mrf.mxu0
  %289 = vmatprep.mubr.bf16.mxu0 %v124
  %290 = vmatmul.mubr.bf16.gmra.mxu0 %v123
  %v291 = vpop.f32.mrf.mxu0
  %v292 = vadd.f32 %v71, %v291
  %v293 = vpop.f32.mrf.mxu0
  %v294 = vpop.f32.mrf.mxu0
  %v295 = vadd.f32 %v71, %v294
  %v296 = vpop.f32.mrf.mxu0
  %297 = vmatprep.mubr.bf16.mxu0 %v126
  %298 = vmatmul.mubr.bf16.gmra.mxu0 %v125
  %v299 = vpop.f32.mrf.mxu0
  %v300 = vadd.f32 %v71, %v299
  %v301 = vpop.f32.mrf.mxu0
  %v302 = vpop.f32.mrf.mxu0
  %v303 = vadd.f32 %v71, %v302
  %v304 = vpop.f32.mrf.mxu0
  %305 = vmatprep.mubr.bf16.mxu0 %v128
  %306 = vmatmul.mubr.bf16.gmra.mxu0 %v127
  %v307 = vpop.f32.mrf.mxu0
  %v308 = vadd.f32 %v71, %v307
  %v309 = vpop.f32.mrf.mxu0
  %v310 = vpop.f32.mrf.mxu0
  %v311 = vadd.f32 %v71, %v310
  %v312 = vpop.f32.mrf.mxu0
  %313 = vmatprep.mubr.bf16.mxu0 %v130
  %314 = vmatmul.mubr.bf16.gmra.mxu0 %v129
  %v315 = vpop.f32.mrf.mxu0
  %v316 = vadd.f32 %v71, %v315
  %v317 = vpop.f32.mrf.mxu0
  %v318 = vpop.f32.mrf.mxu0
  %v319 = vadd.f32 %v71, %v318
  %v320 = vpop.f32.mrf.mxu0
  %321 = vmatprep.mubr.bf16.mxu0 %v132
  %322 = vmatmul.mubr.bf16.gmra.mxu0 %v131
  %v323 = vpop.f32.mrf.mxu0
  %v324 = vadd.f32 %v71, %v323
  %v325 = vpop.f32.mrf.mxu0
  %v326 = vpop.f32.mrf.mxu0
  %v327 = vadd.f32 %v71, %v326
  %v328 = vpop.f32.mrf.mxu0
  %329 = vmatprep.mubr.bf16.mxu0 %v134
  %330 = vmatmul.mubr.bf16.gmra.mxu0 %v133
  %v331 = vpop.f32.mrf.mxu0
  %v332 = vadd.f32 %v71, %v331
  %v333 = vpop.f32.mrf.mxu0
  %v334 = vpop.f32.mrf.mxu0
  %v335 = vadd.f32 %v71, %v334
  %v336 = vpop.f32.mrf.mxu0
  %337 = vmatprep.mubr.bf16.mxu0 %v136
  %338 = vmatmul.mubr.bf16.gmra.mxu0 %v135
  %v339 = vpop.f32.mrf.mxu0
  %v340 = vadd.f32 %v71, %v339
  %v341 = vpop.f32.mrf.mxu0
  %v342 = vpop.f32.mrf.mxu0
  %v343 = vadd.f32 %v71, %v342
  %v344 = vpop.f32.mrf.mxu0
  %345 = vdwg.mxu0
  %vm346 = vcmp.gt.f32.partialorder %v284, 0.0
  %vm347 = vcmp.gt.f32.partialorder %v287, 0.0
  %vm348 = vcmp.gt.f32.partialorder %v292, 0.0
  %vm349 = vcmp.gt.f32.partialorder %v295, 0.0
  %vm350 = vcmp.gt.f32.partialorder %v300, 0.0
  %vm351 = vcmp.gt.f32.partialorder %v303, 0.0
  %vm352 = vcmp.gt.f32.partialorder %v308, 0.0
  %vm353 = vcmp.gt.f32.partialorder %v311, 0.0
  %vm354 = vcmp.gt.f32.partialorder %v316, 0.0
  %vm355 = vcmp.gt.f32.partialorder %v319, 0.0
  %vm356 = vcmp.gt.f32.partialorder %v324, 0.0
  %vm357 = vcmp.gt.f32.partialorder %v327, 0.0
  %vm358 = vcmp.gt.f32.partialorder %v332, 0.0
  %vm359 = vcmp.gt.f32.partialorder %v335, 0.0
  %vm360 = vcmp.gt.f32.partialorder %v340, 0.0
  %vm361 = vcmp.gt.f32.partialorder %v343, 0.0
  %v362 = vmul.f32 %v284, 0.1
  %v363 = vmul.f32 %v287, 0.1
  %v364 = vmul.f32 %v292, 0.1
  %v365 = vmul.f32 %v295, 0.1
  %v366 = vmul.f32 %v300, 0.1
  %v367 = vmul.f32 %v303, 0.1
  %v368 = vmul.f32 %v308, 0.1
  %v369 = vmul.f32 %v311, 0.1
  %v370 = vmul.f32 %v316, 0.1
  %v371 = vmul.f32 %v319, 0.1
  %v372 = vmul.f32 %v324, 0.1
  %v373 = vmul.f32 %v327, 0.1
  %v374 = vmul.f32 %v332, 0.1
  %v375 = vmul.f32 %v335, 0.1
  %v376 = vmul.f32 %v340, 0.1
  %v377 = vmul.f32 %v343, 0.1
  %v378 = vsel %vm346, %v284, %v362
  %v379 = vsel %vm347, %v287, %v363
  %v380 = vsel %vm348, %v292, %v364
  %v381 = vsel %vm349, %v295, %v365
  %v382 = vsel %vm350, %v300, %v366
  %v383 = vsel %vm351, %v303, %v367
  %v384 = vsel %vm352, %v308, %v368
  %v385 = vsel %vm353, %v311, %v369
  %v386 = vsel %vm354, %v316, %v370
  %v387 = vsel %vm355, %v319, %v371
  %v388 = vsel %vm356, %v324, %v372
  %v389 = vsel %vm357, %v327, %v373
  %v390 = vsel %vm358, %v332, %v374
  %v391 = vsel %vm359, %v335, %v375
  %v392 = vsel %vm360, %v340, %v376
  %v393 = vsel %vm361, %v343, %v377
  %v394 = vld [vmem:[%s3] sm:$0xf]
  %v395 = vld [vmem:[%s3 + $0x4] sm:$0xf]
  %v396 = vld [vmem:[%s3 + $0x8] sm:$0xf]
  %v397 = vld [vmem:[%s3 + $0xc] sm:$0xf]
  %v398 = vld [vmem:[%s3 + $0x10] sm:$0xf]
  %v399 = vld [vmem:[%s3 + $0x14] sm:$0xf]
  %v400 = vld [vmem:[%s3 + $0x18] sm:$0xf]
  %v401 = vld [vmem:[%s3 + $0x1c] sm:$0xf]
  %v402 = vld [vmem:[%s3 + $0x20] sm:$0xf]
  %v403 = vld [vmem:[%s3 + $0x24] sm:$0xf]
  %v404 = vld [vmem:[%s3 + $0x28] sm:$0xf]
  %v405 = vld [vmem:[%s3 + $0x2c] sm:$0xf]
  %v406 = vld [vmem:[%s3 + $0x30] sm:$0xf]
  %v407 = vld [vmem:[%s3 + $0x34] sm:$0xf]
  %v408 = vld [vmem:[%s3 + $0x38] sm:$0xf]
  %v409 = vld [vmem:[%s3 + $0x3c] sm:$0xf]
  %v410 = vunpack.c.l.bf16 %v394
  %v411 = vunpack.c.l.bf16 %v395
  %v412 = vunpack.c.l.bf16 %v396
  %v413 = vunpack.c.l.bf16 %v397
  %v414 = vunpack.c.l.bf16 %v398
  %v415 = vunpack.c.l.bf16 %v399
  %v416 = vunpack.c.l.bf16 %v400
  %v417 = vunpack.c.l.bf16 %v401
  %v418 = vunpack.c.l.bf16 %v402
  %v419 = vunpack.c.l.bf16 %v403
  %v420 = vunpack.c.l.bf16 %v404
  %v421 = vunpack.c.l.bf16 %v405
  %v422 = vunpack.c.l.bf16 %v406
  %v423 = vunpack.c.l.bf16 %v407
  %v424 = vunpack.c.l.bf16 %v408
  %v425 = vunpack.c.l.bf16 %v409
  %v426 = vadd.f32 %v378, %v410
  %v427 = vadd.f32 %v379, %v411
  %v428 = vadd.f32 %v380, %v412
  %v429 = vadd.f32 %v381, %v413
  %v430 = vadd.f32 %v382, %v414
  %v431 = vadd.f32 %v383, %v415
  %v432 = vadd.f32 %v384, %v416
  %v433 = vadd.f32 %v385, %v417
  %v434 = vadd.f32 %v386, %v418
  %v435 = vadd.f32 %v387, %v419
  %v436 = vadd.f32 %v388, %v420
  %v437 = vadd.f32 %v389, %v421
  %v438 = vadd.f32 %v390, %v422
  %v439 = vadd.f32 %v391, %v423
  %v440 = vadd.f32 %v392, %v424
  %v441 = vadd.f32 %v393, %v425
  %v442 = vpack.c.bf16 %v427, %v426
  %v443 = vpack.c.bf16 %v429, %v428
  %v444 = vpack.c.bf16 %v431, %v430
  %v445 = vpack.c.bf16 %v433, %v432
  %v446 = vpack.c.bf16 %v435, %v434
  %v447 = vpack.c.bf16 %v437, %v436
  %v448 = vpack.c.bf16 %v439, %v438
  %v449 = vpack.c.bf16 %v441, %v440
  %v458 = vunpack.c.l.b16 %v442
  %v459 = vunpack.c.h.b16 %v442
  %v460 = vunpack.c.l.b16 %v443
  %v461 = vunpack.c.h.b16 %v443
  %v462 = vunpack.c.l.b16 %v444
  %v463 = vunpack.c.h.b16 %v444
  %v464 = vunpack.c.l.b16 %v445
  %v465 = vunpack.c.h.b16 %v445
  %v466 = vunpack.c.l.b16 %v446
  %v467 = vunpack.c.h.b16 %v446
  %v468 = vunpack.c.l.b16 %v447
  %v469 = vunpack.c.h.b16 %v447
  %v470 = vunpack.c.l.b16 %v448
  %v471 = vunpack.c.h.b16 %v448
  %v472 = vunpack.c.l.b16 %v449
  %v473 = vunpack.c.h.b16 %v449
  %v474 = vpack.c.b16 %v458, %v458
  %v475 = vpack.c.b16 %v459, %v459
  %v476 = vpack.c.b16 %v460, %v460
  %v477 = vpack.c.b16 %v461, %v461
  %v478 = vpack.c.b16 %v462, %v462
  %v479 = vpack.c.b16 %v463, %v463
  %v480 = vpack.c.b16 %v464, %v464
  %v481 = vpack.c.b16 %v465, %v465
  %v482 = vpack.c.b16 %v466, %v466
  %v483 = vpack.c.b16 %v467, %v467
  %v484 = vpack.c.b16 %v468, %v468
  %v485 = vpack.c.b16 %v469, %v469
  %v486 = vpack.c.b16 %v470, %v470
  %v487 = vpack.c.b16 %v471, %v471
  %v488 = vpack.c.b16 %v472, %v472
  %v489 = vpack.c.b16 %v473, %v473
  %506 = vst [vmem:[%s4] sm:$0xf] %v474
  %507 = vst [vmem:[%s4 + $0x4] sm:$0xf] %v475
  %508 = vst [vmem:[%s4 + $0x8] sm:$0xf] %v476
  %509 = vst [vmem:[%s4 + $0xc] sm:$0xf] %v477
  %510 = vst [vmem:[%s4 + $0x10] sm:$0xf] %v478
  %511 = vst [vmem:[%s4 + $0x14] sm:$0xf] %v479
  %512 = vst [vmem:[%s4 + $0x18] sm:$0xf] %v480
  %513 = vst [vmem:[%s4 + $0x1c] sm:$0xf] %v481
  %514 = vst [vmem:[%s4 + $0x20] sm:$0xf] %v482
  %515 = vst [vmem:[%s4 + $0x24] sm:$0xf] %v483
  %516 = vst [vmem:[%s4 + $0x28] sm:$0xf] %v484
  %517 = vst [vmem:[%s4 + $0x2c] sm:$0xf] %v485
  %518 = vst [vmem:[%s4 + $0x30] sm:$0xf] %v486
  %519 = vst [vmem:[%s4 + $0x34] sm:$0xf] %v487
  %520 = vst [vmem:[%s4 + $0x38] sm:$0xf] %v488
  %521 = vst [vmem:[%s4 + $0x3c] sm:$0xf] %v489
  // Predicated region
  $region18: #{darknet_forward.9} parent=0 // pred_check
    _
  $region19: #{darknet_forward.9} parent=0 // pred_check_branch
    %523 = sbr.rel (0) target = $region21
  $region20: #{darknet_forward.9} parent=0 // pred_region
    _
  $region21: #{darknet_forward.9} parent=0 // pred_fallthru
    _
  // Predicated region
  $region22: #{darknet_forward.9} parent=0 // pred_check
    _
  $region23: #{darknet_forward.9} parent=0 // pred_check_branch
    %525 = sbr.rel (0) target = $region25
  $region24: #{darknet_forward.9} parent=0 // pred_region
    _
  $region25: #{darknet_forward.9} parent=0 // pred_fallthru
    _

// kernel: darknet_forward.10
$region0: #{darknet_forward.10}
  #allocation0 [shape = 'u32[]', space=smem, size = 0x4, offset = 0x4, fixed_abs, tag = 'smem constant byte address 0x4 - core index']
  #allocation1 [shape = 'u32[144,128]{1,0:T(1,128)}', space=vmem, size = 0x12000, scoped, tag = 'internal scratch']
  %s0 = inlined_call_operand.vmem [shape: bf16[32,256], index: 0, kind: input, shape index: {}]
  %s1 = inlined_call_operand.vmem [shape: bf16[256,128], index: 1, kind: input, shape index: {}]
  %s2 = inlined_call_operand.vmem [shape: f32[1,128], index: 2, kind: input, shape index: {}]
  %s3 = inlined_call_operand.vmem [shape: bf16[32,128], index: 3, kind: output, shape index: {}]
  %s4 = sld [smem:[#allocation0]]
  $region22: #{darknet_forward.10} parent=0
    _
  %s6 = ssub.s32 1, %s4
  %s7 = scalar_select 0, %s6, %s4
  // Predicated region
  $region2: #{darknet_forward.10} parent=0 // pred_check
    _
  $region3: #{darknet_forward.10} parent=0 // pred_check_branch
    %9 = sbr.rel (0) target = $region5
  $region4: #{darknet_forward.10} parent=0 // pred_region
    _
  $region5: #{darknet_forward.10} parent=0 // pred_fallthru
    _
  // Predicated region
  $region6: #{darknet_forward.10} parent=0 // pred_check
    _
  $region7: #{darknet_forward.10} parent=0 // pred_check_branch
    %11 = sbr.rel (0) target = $region9
  $region8: #{darknet_forward.10} parent=0 // pred_region
    _
  $region9: #{darknet_forward.10} parent=0 // pred_fallthru
    _
  // Predicated region
  $region10: #{darknet_forward.10} parent=0 // pred_check
    _
  $region11: #{darknet_forward.10} parent=0 // pred_check_branch
    %13 = sbr.rel (0) target = $region13
  $region12: #{darknet_forward.10} parent=0 // pred_region
    _
  $region13: #{darknet_forward.10} parent=0 // pred_fallthru
    _
  %v15 = vld [vmem:[%s0] sm:$0xff]
  %v16 = vld [vmem:[%s0 + $0x8] sm:$0xff]
  %v17 = vld [vmem:[%s0 + $0x10] sm:$0xff]
  %v18 = vld [vmem:[%s0 + $0x18] sm:$0xff]
  %v19 = vld [vmem:[%s1] sm:$0xf]
  %v20 = vld [vmem:[%s1 + $0x4] sm:$0xf]
  %v21 = vld [vmem:[%s1 + $0x8] sm:$0xf]
  %v22 = vld [vmem:[%s1 + $0xc] sm:$0xf]
  %v23 = vld [vmem:[%s1 + $0x10] sm:$0xf]
  %v24 = vld [vmem:[%s1 + $0x14] sm:$0xf]
  %v25 = vld [vmem:[%s1 + $0x18] sm:$0xf]
  %v26 = vld [vmem:[%s1 + $0x1c] sm:$0xf]
  %v27 = vld [vmem:[%s1 + $0x20] sm:$0xf]
  %v28 = vld [vmem:[%s1 + $0x24] sm:$0xf]
  %v29 = vld [vmem:[%s1 + $0x28] sm:$0xf]
  %v30 = vld [vmem:[%s1 + $0x2c] sm:$0xf]
  %v31 = vld [vmem:[%s1 + $0x30] sm:$0xf]
  %v32 = vld [vmem:[%s1 + $0x34] sm:$0xf]
  %v33 = vld [vmem:[%s1 + $0x38] sm:$0xf]
  %v34 = vld [vmem:[%s1 + $0x3c] sm:$0xf]
  %v35 = vld [vmem:[%s1 + $0x40] sm:$0xf]
  %v36 = vld [vmem:[%s1 + $0x44] sm:$0xf]
  %v37 = vld [vmem:[%s1 + $0x48] sm:$0xf]
  %v38 = vld [vmem:[%s1 + $0x4c] sm:$0xf]
  %v39 = vld [vmem:[%s1 + $0x50] sm:$0xf]
  %v40 = vld [vmem:[%s1 + $0x54] sm:$0xf]
  %v41 = vld [vmem:[%s1 + $0x58] sm:$0xf]
  %v42 = vld [vmem:[%s1 + $0x5c] sm:$0xf]
  %v43 = vld [vmem:[%s1 + $0x60] sm:$0xf]
  %v44 = vld [vmem:[%s1 + $0x64] sm:$0xf]
  %v45 = vld [vmem:[%s1 + $0x68] sm:$0xf]
  %v46 = vld [vmem:[%s1 + $0x6c] sm:$0xf]
  %v47 = vld [vmem:[%s1 + $0x70] sm:$0xf]
  %v48 = vld [vmem:[%s1 + $0x74] sm:$0xf]
  %v49 = vld [vmem:[%s1 + $0x78] sm:$0xf]
  %v50 = vld [vmem:[%s1 + $0x7c] sm:$0xf]
  %v51 = vld [vmem:[%s2] sm:$0x1]
  %v53 = vlaneseq
  %v54 = vshrl.u32 %v53, 7
  %v55 = vsub.s32 0, %v54
  %v56 = vrot.slane %v51, %v55
  %v62 = vunpack.c.l.b16 %v15
  %v63 = vunpack.c.h.b16 %v15
  %v64 = vunpack.c.l.b16 %v16
  %v65 = vunpack.c.h.b16 %v16
  %v66 = vunpack.c.l.b16 %v17
  %v67 = vunpack.c.h.b16 %v17
  %v68 = vunpack.c.l.b16 %v18
  %v69 = vunpack.c.h.b16 %v18
  %v70 = vpack.c.b16 %v64, %v62
  %v71 = vpack.c.b16 %v65, %v63
  %v72 = vpack.c.b16 %v68, %v66
  %v73 = vpack.c.b16 %v69, %v67
  %v110 = vunpack.c.l.b16 %v19
  %v111 = vunpack.c.l.b16 %v20
  %v112 = vunpack.c.l.b16 %v21
  %v113 = vunpack.c.l.b16 %v22
  %v114 = vunpack.c.l.b16 %v23
  %v115 = vunpack.c.l.b16 %v24
  %v116 = vunpack.c.l.b16 %v25
  %v117 = vunpack.c.l.b16 %v26
  %v118 = vunpack.c.l.b16 %v27
  %v119 = vunpack.c.l.b16 %v28
  %v120 = vunpack.c.l.b16 %v29
  %v121 = vunpack.c.l.b16 %v30
  %v122 = vunpack.c.l.b16 %v31
  %v123 = vunpack.c.l.b16 %v32
  %v124 = vunpack.c.l.b16 %v33
  %v125 = vunpack.c.l.b16 %v34
  %v126 = vunpack.c.l.b16 %v35
  %v127 = vunpack.c.l.b16 %v36
  %v128 = vunpack.c.l.b16 %v37
  %v129 = vunpack.c.l.b16 %v38
  %v130 = vunpack.c.l.b16 %v39
  %v131 = vunpack.c.l.b16 %v40
  %v132 = vunpack.c.l.b16 %v41
  %v133 = vunpack.c.l.b16 %v42
  %v134 = vunpack.c.l.b16 %v43
  %v135 = vunpack.c.l.b16 %v44
  %v136 = vunpack.c.l.b16 %v45
  %v137 = vunpack.c.l.b16 %v46
  %v138 = vunpack.c.l.b16 %v47
  %v139 = vunpack.c.l.b16 %v48
  %v140 = vunpack.c.l.b16 %v49
  %v141 = vunpack.c.l.b16 %v50
  %v142 = vpack.c.b16 %v111, %v110
  %v143 = vpack.c.b16 %v113, %v112
  %v144 = vpack.c.b16 %v115, %v114
  %v145 = vpack.c.b16 %v117, %v116
  %v146 = vpack.c.b16 %v119, %v118
  %v147 = vpack.c.b16 %v121, %v120
  %v148 = vpack.c.b16 %v123, %v122
  %v149 = vpack.c.b16 %v125, %v124
  %v150 = vpack.c.b16 %v127, %v126
  %v151 = vpack.c.b16 %v129, %v128
  %v152 = vpack.c.b16 %v131, %v130
  %v153 = vpack.c.b16 %v133, %v132
  %v154 = vpack.c.b16 %v135, %v134
  %v155 = vpack.c.b16 %v137, %v136
  %v156 = vpack.c.b16 %v139, %v138
  %v157 = vpack.c.b16 %v141, %v140
  %174 = vmatprep.subr.bf16.mxu0 0
  %175 = vmatpush1.bf16.msra.mxu0 %v149
  %176 = vmatprep.subr.bf16.mxu0 0
  %177 = vmatpush1.bf16.msra.mxu0 %v148
  %178 = vmatprep.subr.bf16.mxu0 0
  %179 = vmatpush1.bf16.msra.mxu0 %v147
  %180 = vmatprep.subr.bf16.mxu0 0
  %181 = vmatpush1.bf16.msra.mxu0 %v146
  %182 = vmatprep.subr.bf16.mxu0 0
  %183 = vmatpush1.bf16.msra.mxu0 %v145
  %184 = vmatprep.subr.bf16.mxu0 0
  %185 = vmatpush1.bf16.msra.mxu0 %v144
  %186 = vmatprep.subr.bf16.mxu0 0
  %187 = vmatpush1.bf16.msra.mxu0 %v143
  %188 = vmatprep.subr.bf16.mxu0 0
  %189 = vmatpush1.bf16.msra.mxu0 %v142
  %190 = vmatprep.subr.bf16.mxu0 0
  %191 = vmatpush2.bf16.msra.mxu0 %v157
  %192 = vmatprep.subr.bf16.mxu0 0
  %193 = vmatpush2.bf16.msra.mxu0 %v156
  %194 = vmatprep.subr.bf16.mxu0 0
  %195 = vmatpush2.bf16.msra.mxu0 %v155
  %196 = vmatprep.subr.bf16.mxu0 0
  %197 = vmatpush2.bf16.msra.mxu0 %v154
  %198 = vmatprep.subr.bf16.mxu0 0
  %199 = vmatpush2.bf16.msra.mxu0 %v153
  %200 = vmatprep.subr.bf16.mxu0 0
  %201 = vmatpush2.bf16.msra.mxu0 %v152
  %202 = vmatprep.subr.bf16.mxu0 0
  %203 = vmatpush2.bf16.msra.mxu0 %v151
  %204 = vmatprep.subr.bf16.mxu0 0
  %205 = vmatpush2.bf16.msra.mxu0 %v150
  %206 = vmatprep.mubr.bf16.mxu0 %v71
  %207 = vmatmul.mubr.bf16.gmra.mxu0 %v70
  %v208 = vpop.f32.mrf.mxu0
  %v209 = vadd.f32 %v56, %v208
  %v210 = vpop.f32.mrf.mxu0
  %v211 = vpop.f32.mrf.mxu0
  %v212 = vadd.f32 %v56, %v211
  %v213 = vpop.f32.mrf.mxu0
  %214 = vmatprep.mubr.bf16.mxu0 %v73
  %215 = vmatmul.mubr.bf16.gmra.mxu0 %v72
  %v216 = vpop.f32.mrf.mxu0
  %v217 = vadd.f32 %v56, %v216
  %v218 = vpop.f32.mrf.mxu0
  %v219 = vpop.f32.mrf.mxu0
  %v220 = vadd.f32 %v56, %v219
  %v221 = vpop.f32.mrf.mxu0
  %222 = vdwg.mxu0
  %vm223 = vcmp.gt.f32.partialorder %v209, 0.0
  %vm224 = vcmp.gt.f32.partialorder %v212, 0.0
  %vm225 = vcmp.gt.f32.partialorder %v217, 0.0
  %vm226 = vcmp.gt.f32.partialorder %v220, 0.0
  %v227 = vmul.f32 %v209, 0.1
  %v228 = vmul.f32 %v212, 0.1
  %v229 = vmul.f32 %v217, 0.1
  %v230 = vmul.f32 %v220, 0.1
  %v231 = vsel %vm223, %v209, %v227
  %v232 = vsel %vm224, %v212, %v228
  %v233 = vsel %vm225, %v217, %v229
  %v234 = vsel %vm226, %v220, %v230
  %v235 = vpack.c.bf16 %v232, %v231
  %v236 = vpack.c.bf16 %v234, %v233
  %v239 = vunpack.c.l.b16 %v235
  %v240 = vunpack.c.h.b16 %v235
  %v241 = vunpack.c.l.b16 %v236
  %v242 = vunpack.c.h.b16 %v236
  %v243 = vpack.c.b16 %v239, %v239
  %v244 = vpack.c.b16 %v240, %v240
  %v245 = vpack.c.b16 %v241, %v241
  %v246 = vpack.c.b16 %v242, %v242
  %251 = vst [vmem:[%s3] sm:$0xf] %v243
  %252 = vst [vmem:[%s3 + $0x4] sm:$0xf] %v244
  %253 = vst [vmem:[%s3 + $0x8] sm:$0xf] %v245
  %254 = vst [vmem:[%s3 + $0xc] sm:$0xf] %v246
  // Predicated region
  $region14: #{darknet_forward.10} parent=0 // pred_check
    _
  $region15: #{darknet_forward.10} parent=0 // pred_check_branch
    %256 = sbr.rel (0) target = $region17
  $region16: #{darknet_forward.10} parent=0 // pred_region
    _
  $region17: #{darknet_forward.10} parent=0 // pred_fallthru
    _
  // Predicated region
  $region18: #{darknet_forward.10} parent=0 // pred_check
    _
  $region19: #{darknet_forward.10} parent=0 // pred_check_branch
    %258 = sbr.rel (0) target = $region21
  $region20: #{darknet_forward.10} parent=0 // pred_region
    _
  $region21: #{darknet_forward.10} parent=0 // pred_fallthru
    _

// kernel: darknet_forward.11
$region0: #{darknet_forward.11}
  #allocation0 [shape = 'u32[]', space=smem, size = 0x4, offset = 0x4, fixed_abs, tag = 'smem constant byte address 0x4 - core index']
  #allocation1 [shape = 'u32[144,128]{1,0:T(1,128)}', space=vmem, size = 0x12000, scoped, tag = 'internal scratch']
  %s0 = inlined_call_operand.vmem [shape: bf16[32,128], index: 0, kind: input, shape index: {}]
  %s1 = inlined_call_operand.vmem [shape: bf16[128,128], index: 1, kind: input, shape index: {}]
  %s2 = inlined_call_operand.vmem [shape: f32[1,128], index: 2, kind: input, shape index: {}]
  %s3 = inlined_call_operand.vmem [shape: f32[32,128], index: 3, kind: output, shape index: {}]
  %s4 = sld [smem:[#allocation0]]
  $region22: #{darknet_forward.11} parent=0
    _
  %s6 = ssub.s32 1, %s4
  %s7 = scalar_select 0, %s6, %s4
  // Predicated region
  $region2: #{darknet_forward.11} parent=0 // pred_check
    _
  $region3: #{darknet_forward.11} parent=0 // pred_check_branch
    %9 = sbr.rel (0) target = $region5
  $region4: #{darknet_forward.11} parent=0 // pred_region
    _
  $region5: #{darknet_forward.11} parent=0 // pred_fallthru
    _
  // Predicated region
  $region6: #{darknet_forward.11} parent=0 // pred_check
    _
  $region7: #{darknet_forward.11} parent=0 // pred_check_branch
    %11 = sbr.rel (0) target = $region9
  $region8: #{darknet_forward.11} parent=0 // pred_region
    _
  $region9: #{darknet_forward.11} parent=0 // pred_fallthru
    _
  // Predicated region
  $region10: #{darknet_forward.11} parent=0 // pred_check
    _
  $region11: #{darknet_forward.11} parent=0 // pred_check_branch
    %13 = sbr.rel (0) target = $region13
  $region12: #{darknet_forward.11} parent=0 // pred_region
    _
  $region13: #{darknet_forward.11} parent=0 // pred_fallthru
    _
  %v15 = vld [vmem:[%s0] sm:$0xf]
  %v16 = vld [vmem:[%s0 + $0x4] sm:$0xf]
  %v17 = vld [vmem:[%s0 + $0x8] sm:$0xf]
  %v18 = vld [vmem:[%s0 + $0xc] sm:$0xf]
  %v19 = vld [vmem:[%s1] sm:$0xf]
  %v20 = vld [vmem:[%s1 + $0x4] sm:$0xf]
  %v21 = vld [vmem:[%s1 + $0x8] sm:$0xf]
  %v22 = vld [vmem:[%s1 + $0xc] sm:$0xf]
  %v23 = vld [vmem:[%s1 + $0x10] sm:$0xf]
  %v24 = vld [vmem:[%s1 + $0x14] sm:$0xf]
  %v25 = vld [vmem:[%s1 + $0x18] sm:$0xf]
  %v26 = vld [vmem:[%s1 + $0x1c] sm:$0xf]
  %v27 = vld [vmem:[%s1 + $0x20] sm:$0xf]
  %v28 = vld [vmem:[%s1 + $0x24] sm:$0xf]
  %v29 = vld [vmem:[%s1 + $0x28] sm:$0xf]
  %v30 = vld [vmem:[%s1 + $0x2c] sm:$0xf]
  %v31 = vld [vmem:[%s1 + $0x30] sm:$0xf]
  %v32 = vld [vmem:[%s1 + $0x34] sm:$0xf]
  %v33 = vld [vmem:[%s1 + $0x38] sm:$0xf]
  %v34 = vld [vmem:[%s1 + $0x3c] sm:$0xf]
  %v35 = vld [vmem:[%s2] sm:$0x1]
  %v37 = vlaneseq
  %v38 = vshrl.u32 %v37, 7
  %v39 = vsub.s32 0, %v38
  %v40 = vrot.slane %v35, %v39
  %v46 = vunpack.c.l.b16 %v15
  %v47 = vunpack.c.l.b16 %v16
  %v48 = vunpack.c.l.b16 %v17
  %v49 = vunpack.c.l.b16 %v18
  %v50 = vpack.c.b16 %v47, %v46
  %v51 = vpack.c.b16 %v49, %v48
  %v70 = vunpack.c.l.b16 %v19
  %v71 = vunpack.c.l.b16 %v20
  %v72 = vunpack.c.l.b16 %v21
  %v73 = vunpack.c.l.b16 %v22
  %v74 = vunpack.c.l.b16 %v23
  %v75 = vunpack.c.l.b16 %v24
  %v76 = vunpack.c.l.b16 %v25
  %v77 = vunpack.c.l.b16 %v26
  %v78 = vunpack.c.l.b16 %v27
  %v79 = vunpack.c.l.b16 %v28
  %v80 = vunpack.c.l.b16 %v29
  %v81 = vunpack.c.l.b16 %v30
  %v82 = vunpack.c.l.b16 %v31
  %v83 = vunpack.c.l.b16 %v32
  %v84 = vunpack.c.l.b16 %v33
  %v85 = vunpack.c.l.b16 %v34
  %v86 = vpack.c.b16 %v71, %v70
  %v87 = vpack.c.b16 %v73, %v72
  %v88 = vpack.c.b16 %v75, %v74
  %v89 = vpack.c.b16 %v77, %v76
  %v90 = vpack.c.b16 %v79, %v78
  %v91 = vpack.c.b16 %v81, %v80
  %v92 = vpack.c.b16 %v83, %v82
  %v93 = vpack.c.b16 %v85, %v84
  %102 = vmatprep.subr.bf16.mxu0 0
  %103 = vmatpush1.bf16.msra.mxu0 %v93
  %104 = vmatprep.subr.bf16.mxu0 0
  %105 = vmatpush1.bf16.msra.mxu0 %v92
  %106 = vmatprep.subr.bf16.mxu0 0
  %107 = vmatpush1.bf16.msra.mxu0 %v91
  %108 = vmatprep.subr.bf16.mxu0 0
  %109 = vmatpush1.bf16.msra.mxu0 %v90
  %110 = vmatprep.subr.bf16.mxu0 0
  %111 = vmatpush1.bf16.msra.mxu0 %v89
  %112 = vmatprep.subr.bf16.mxu0 0
  %113 = vmatpush1.bf16.msra.mxu0 %v88
  %114 = vmatprep.subr.bf16.mxu0 0
  %115 = vmatpush1.bf16.msra.mxu0 %v87
  %116 = vmatprep.subr.bf16.mxu0 0
  %117 = vmatpush1.bf16.msra.mxu0 %v86
  %118 = vmatprep.subr.bf16.mxu0 0
  %119 = vmatpush2.bf16.msra.mxu0 0
  %120 = vmatprep.subr.bf16.mxu0 0
  %121 = vmatpush2.bf16.msra.mxu0 0
  %122 = vmatprep.subr.bf16.mxu0 0
  %123 = vmatpush2.bf16.msra.mxu0 0
  %124 = vmatprep.subr.bf16.mxu0 0
  %125 = vmatpush2.bf16.msra.mxu0 0
  %126 = vmatprep.subr.bf16.mxu0 0
  %127 = vmatpush2.bf16.msra.mxu0 0
  %128 = vmatprep.subr.bf16.mxu0 0
  %129 = vmatpush2.bf16.msra.mxu0 0
  %130 = vmatprep.subr.bf16.mxu0 0
  %131 = vmatpush2.bf16.msra.mxu0 0
  %132 = vmatprep.subr.bf16.mxu0 0
  %133 = vmatpush2.bf16.msra.mxu0 0
  %134 = vmatprep.mubr.bf16.mxu0 0
  %135 = vmatmul.mubr.bf16.gmra.mxu0 %v50
  %v136 = vpop.f32.mrf.mxu0
  %v137 = vadd.f32 %v40, %v136
  %v138 = vpop.f32.mrf.mxu0
  %v139 = vpop.f32.mrf.mxu0
  %v140 = vadd.f32 %v40, %v139
  %v141 = vpop.f32.mrf.mxu0
  %142 = vmatprep.mubr.bf16.mxu0 0
  %143 = vmatmul.mubr.bf16.gmra.mxu0 %v51
  %v144 = vpop.f32.mrf.mxu0
  %v145 = vadd.f32 %v40, %v144
  %v146 = vpop.f32.mrf.mxu0
  %v147 = vpop.f32.mrf.mxu0
  %v148 = vadd.f32 %v40, %v147
  %v149 = vpop.f32.mrf.mxu0
  %150 = vdwg.mxu0
  %151 = vst [vmem:[%s3] sm:$0xff] %v137
  %152 = vst [vmem:[%s3 + $0x8] sm:$0xff] %v140
  %153 = vst [vmem:[%s3 + $0x10] sm:$0xff] %v145
  %154 = vst [vmem:[%s3 + $0x18] sm:$0xff] %v148
  // Predicated region
  $region14: #{darknet_forward.11} parent=0 // pred_check
    _
  $region15: #{darknet_forward.11} parent=0 // pred_check_branch
    %156 = sbr.rel (0) target = $region17
  $region16: #{darknet_forward.11} parent=0 // pred_region
    _
  $region17: #{darknet_forward.11} parent=0 // pred_fallthru
    _
  // Predicated region
  $region18: #{darknet_forward.11} parent=0 // pred_check
    _
  $region19: #{darknet_forward.11} parent=0 // pred_check_branch
    %158 = sbr.rel (0) target = $region21
  $region20: #{darknet_forward.11} parent=0 // pred_region
    _
  $region21: #{darknet_forward.11} parent=0 // pred_fallthru
    _

// kernel: darknet_forward.12
$region0: #{darknet_forward.12}
  #allocation0 [shape = 'u32[]', space=smem, size = 0x4, offset = 0x4, fixed_abs, tag = 'smem constant byte address 0x4 - core index']
  #allocation1 [shape = 'u32[144,128]{1,0:T(1,128)}', space=vmem, size = 0x12000, scoped, tag = 'internal scratch']
  %s0 = inlined_call_operand.vmem [shape: bf16[32,128], index: 0, kind: input, shape index: {}]
  %s1 = inlined_call_operand.vmem [shape: bf16[128,128], index: 1, kind: input, shape index: {}]
  %s2 = inlined_call_operand.vmem [shape: f32[1,128], index: 2, kind: input, shape index: {}]
  %s3 = inlined_call_operand.vmem [shape: bf16[32,128], index: 3, kind: output, shape index: {}]
  %s4 = sld [smem:[#allocation0]]
  $region22: #{darknet_forward.12} parent=0
    _
  %s6 = ssub.s32 1, %s4
  %s7 = scalar_select 0, %s6, %s4
  // Predicated region
  $region2: #{darknet_forward.12} parent=0 // pred_check
    _
  $region3: #{darknet_forward.12} parent=0 // pred_check_branch
    %9 = sbr.rel (0) target = $region5
  $region4: #{darknet_forward.12} parent=0 // pred_region
    _
  $region5: #{darknet_forward.12} parent=0 // pred_fallthru
    _
  // Predicated region
  $region6: #{darknet_forward.12} parent=0 // pred_check
    _
  $region7: #{darknet_forward.12} parent=0 // pred_check_branch
    %11 = sbr.rel (0) target = $region9
  $region8: #{darknet_forward.12} parent=0 // pred_region
    _
  $region9: #{darknet_forward.12} parent=0 // pred_fallthru
    _
  // Predicated region
  $region10: #{darknet_forward.12} parent=0 // pred_check
    _
  $region11: #{darknet_forward.12} parent=0 // pred_check_branch
    %13 = sbr.rel (0) target = $region13
  $region12: #{darknet_forward.12} parent=0 // pred_region
    _
  $region13: #{darknet_forward.12} parent=0 // pred_fallthru
    _
  %v15 = vld [vmem:[%s0] sm:$0xf]
  %v16 = vld [vmem:[%s0 + $0x4] sm:$0xf]
  %v17 = vld [vmem:[%s0 + $0x8] sm:$0xf]
  %v18 = vld [vmem:[%s0 + $0xc] sm:$0xf]
  %v19 = vld [vmem:[%s1] sm:$0xf]
  %v20 = vld [vmem:[%s1 + $0x4] sm:$0xf]
  %v21 = vld [vmem:[%s1 + $0x8] sm:$0xf]
  %v22 = vld [vmem:[%s1 + $0xc] sm:$0xf]
  %v23 = vld [vmem:[%s1 + $0x10] sm:$0xf]
  %v24 = vld [vmem:[%s1 + $0x14] sm:$0xf]
  %v25 = vld [vmem:[%s1 + $0x18] sm:$0xf]
  %v26 = vld [vmem:[%s1 + $0x1c] sm:$0xf]
  %v27 = vld [vmem:[%s1 + $0x20] sm:$0xf]
  %v28 = vld [vmem:[%s1 + $0x24] sm:$0xf]
  %v29 = vld [vmem:[%s1 + $0x28] sm:$0xf]
  %v30 = vld [vmem:[%s1 + $0x2c] sm:$0xf]
  %v31 = vld [vmem:[%s1 + $0x30] sm:$0xf]
  %v32 = vld [vmem:[%s1 + $0x34] sm:$0xf]
  %v33 = vld [vmem:[%s1 + $0x38] sm:$0xf]
  %v34 = vld [vmem:[%s1 + $0x3c] sm:$0xf]
  %v35 = vld [vmem:[%s2] sm:$0x1]
  %v37 = vlaneseq
  %v38 = vshrl.u32 %v37, 7
  %v39 = vsub.s32 0, %v38
  %v40 = vrot.slane %v35, %v39
  %v46 = vunpack.c.l.b16 %v15
  %v47 = vunpack.c.l.b16 %v16
  %v48 = vunpack.c.l.b16 %v17
  %v49 = vunpack.c.l.b16 %v18
  %v50 = vpack.c.b16 %v47, %v46
  %v51 = vpack.c.b16 %v49, %v48
  %v70 = vunpack.c.l.b16 %v19
  %v71 = vunpack.c.l.b16 %v20
  %v72 = vunpack.c.l.b16 %v21
  %v73 = vunpack.c.l.b16 %v22
  %v74 = vunpack.c.l.b16 %v23
  %v75 = vunpack.c.l.b16 %v24
  %v76 = vunpack.c.l.b16 %v25
  %v77 = vunpack.c.l.b16 %v26
  %v78 = vunpack.c.l.b16 %v27
  %v79 = vunpack.c.l.b16 %v28
  %v80 = vunpack.c.l.b16 %v29
  %v81 = vunpack.c.l.b16 %v30
  %v82 = vunpack.c.l.b16 %v31
  %v83 = vunpack.c.l.b16 %v32
  %v84 = vunpack.c.l.b16 %v33
  %v85 = vunpack.c.l.b16 %v34
  %v86 = vpack.c.b16 %v71, %v70
  %v87 = vpack.c.b16 %v73, %v72
  %v88 = vpack.c.b16 %v75, %v74
  %v89 = vpack.c.b16 %v77, %v76
  %v90 = vpack.c.b16 %v79, %v78
  %v91 = vpack.c.b16 %v81, %v80
  %v92 = vpack.c.b16 %v83, %v82
  %v93 = vpack.c.b16 %v85, %v84
  %102 = vmatprep.subr.bf16.mxu0 0
  %103 = vmatpush1.bf16.msra.mxu0 %v93
  %104 = vmatprep.subr.bf16.mxu0 0
  %105 = vmatpush1.bf16.msra.mxu0 %v92
  %106 = vmatprep.subr.bf16.mxu0 0
  %107 = vmatpush1.bf16.msra.mxu0 %v91
  %108 = vmatprep.subr.bf16.mxu0 0
  %109 = vmatpush1.bf16.msra.mxu0 %v90
  %110 = vmatprep.subr.bf16.mxu0 0
  %111 = vmatpush1.bf16.msra.mxu0 %v89
  %112 = vmatprep.subr.bf16.mxu0 0
  %113 = vmatpush1.bf16.msra.mxu0 %v88
  %114 = vmatprep.subr.bf16.mxu0 0
  %115 = vmatpush1.bf16.msra.mxu0 %v87
  %116 = vmatprep.subr.bf16.mxu0 0
  %117 = vmatpush1.bf16.msra.mxu0 %v86
  %118 = vmatprep.subr.bf16.mxu0 0
  %119 = vmatpush2.bf16.msra.mxu0 0
  %120 = vmatprep.subr.bf16.mxu0 0
  %121 = vmatpush2.bf16.msra.mxu0 0
  %122 = vmatprep.subr.bf16.mxu0 0
  %123 = vmatpush2.bf16.msra.mxu0 0
  %124 = vmatprep.subr.bf16.mxu0 0
  %125 = vmatpush2.bf16.msra.mxu0 0
  %126 = vmatprep.subr.bf16.mxu0 0
  %127 = vmatpush2.bf16.msra.mxu0 0
  %128 = vmatprep.subr.bf16.mxu0 0
  %129 = vmatpush2.bf16.msra.mxu0 0
  %130 = vmatprep.subr.bf16.mxu0 0
  %131 = vmatpush2.bf16.msra.mxu0 0
  %132 = vmatprep.subr.bf16.mxu0 0
  %133 = vmatpush2.bf16.msra.mxu0 0
  %134 = vmatprep.mubr.bf16.mxu0 0
  %135 = vmatmul.mubr.bf16.gmra.mxu0 %v50
  %v136 = vpop.f32.mrf.mxu0
  %v137 = vadd.f32 %v40, %v136
  %v138 = vpop.f32.mrf.mxu0
  %v139 = vpop.f32.mrf.mxu0
  %v140 = vadd.f32 %v40, %v139
  %v141 = vpop.f32.mrf.mxu0
  %142 = vmatprep.mubr.bf16.mxu0 0
  %143 = vmatmul.mubr.bf16.gmra.mxu0 %v51
  %v144 = vpop.f32.mrf.mxu0
  %v145 = vadd.f32 %v40, %v144
  %v146 = vpop.f32.mrf.mxu0
  %v147 = vpop.f32.mrf.mxu0
  %v148 = vadd.f32 %v40, %v147
  %v149 = vpop.f32.mrf.mxu0
  %150 = vdwg.mxu0
  %vm151 = vcmp.gt.f32.partialorder %v137, 0.0
  %vm152 = vcmp.gt.f32.partialorder %v140, 0.0
  %vm153 = vcmp.gt.f32.partialorder %v145, 0.0
  %vm154 = vcmp.gt.f32.partialorder %v148, 0.0
  %v155 = vmul.f32 %v137, 0.1
  %v156 = vmul.f32 %v140, 0.1
  %v157 = vmul.f32 %v145, 0.1
  %v158 = vmul.f32 %v148, 0.1
  %v159 = vsel %vm151, %v137, %v155
  %v160 = vsel %vm152, %v140, %v156
  %v161 = vsel %vm153, %v145, %v157
  %v162 = vsel %vm154, %v148, %v158
  %v163 = vpack.c.bf16 %v160, %v159
  %v164 = vpack.c.bf16 %v162, %v161
  %v167 = vunpack.c.l.b16 %v163
  %v168 = vunpack.c.h.b16 %v163
  %v169 = vunpack.c.l.b16 %v164
  %v170 = vunpack.c.h.b16 %v164
  %v171 = vpack.c.b16 %v167, %v167
  %v172 = vpack.c.b16 %v168, %v168
  %v173 = vpack.c.b16 %v169, %v169
  %v174 = vpack.c.b16 %v170, %v170
  %179 = vst [vmem:[%s3] sm:$0xf] %v171
  %180 = vst [vmem:[%s3 + $0x4] sm:$0xf] %v172
  %181 = vst [vmem:[%s3 + $0x8] sm:$0xf] %v173
  %182 = vst [vmem:[%s3 + $0xc] sm:$0xf] %v174
  // Predicated region
  $region14: #{darknet_forward.12} parent=0 // pred_check
    _
  $region15: #{darknet_forward.12} parent=0 // pred_check_branch
    %184 = sbr.rel (0) target = $region17
  $region16: #{darknet_forward.12} parent=0 // pred_region
    _
  $region17: #{darknet_forward.12} parent=0 // pred_fallthru
    _
  // Predicated region
  $region18: #{darknet_forward.12} parent=0 // pred_check
    _
  $region19: #{darknet_forward.12} parent=0 // pred_check_branch
    %186 = sbr.rel (0) target = $region21
  $region20: #{darknet_forward.12} parent=0 // pred_region
    _
  $region21: #{darknet_forward.12} parent=0 // pred_fallthru
    _

// kernel: darknet_forward.13
$region0: #{darknet_forward.13}
  #allocation0 [shape = 'u32[]', space=smem, size = 0x4, offset = 0x4, fixed_abs, tag = 'smem constant byte address 0x4 - core index']
  #allocation1 [shape = 'u32[144,128]{1,0:T(1,128)}', space=vmem, size = 0x12000, scoped, tag = 'internal scratch']
  %s0 = inlined_call_operand.vmem [shape: bf16[128,128], index: 0, kind: input, shape index: {}]
  %s1 = inlined_call_operand.vmem [shape: bf16[128,128], index: 1, kind: input, shape index: {}]
  %s2 = inlined_call_operand.vmem [shape: f32[1,128], index: 2, kind: input, shape index: {}]
  %s3 = inlined_call_operand.vmem [shape: f32[128,128], index: 3, kind: output, shape index: {}]
  %s4 = sld [smem:[#allocation0]]
  $region22: #{darknet_forward.13} parent=0
    _
  %s6 = ssub.s32 1, %s4
  %s7 = scalar_select 0, %s6, %s4
  // Predicated region
  $region2: #{darknet_forward.13} parent=0 // pred_check
    _
  $region3: #{darknet_forward.13} parent=0 // pred_check_branch
    %9 = sbr.rel (0) target = $region5
  $region4: #{darknet_forward.13} parent=0 // pred_region
    _
  $region5: #{darknet_forward.13} parent=0 // pred_fallthru
    _
  // Predicated region
  $region6: #{darknet_forward.13} parent=0 // pred_check
    _
  $region7: #{darknet_forward.13} parent=0 // pred_check_branch
    %11 = sbr.rel (0) target = $region9
  $region8: #{darknet_forward.13} parent=0 // pred_region
    _
  $region9: #{darknet_forward.13} parent=0 // pred_fallthru
    _
  // Predicated region
  $region10: #{darknet_forward.13} parent=0 // pred_check
    _
  $region11: #{darknet_forward.13} parent=0 // pred_check_branch
    %13 = sbr.rel (0) target = $region13
  $region12: #{darknet_forward.13} parent=0 // pred_region
    _
  $region13: #{darknet_forward.13} parent=0 // pred_fallthru
    _
  %v15 = vld [vmem:[%s0] sm:$0xf]
  %v16 = vld [vmem:[%s0 + $0x4] sm:$0xf]
  %v17 = vld [vmem:[%s0 + $0x8] sm:$0xf]
  %v18 = vld [vmem:[%s0 + $0xc] sm:$0xf]
  %v19 = vld [vmem:[%s0 + $0x10] sm:$0xf]
  %v20 = vld [vmem:[%s0 + $0x14] sm:$0xf]
  %v21 = vld [vmem:[%s0 + $0x18] sm:$0xf]
  %v22 = vld [vmem:[%s0 + $0x1c] sm:$0xf]
  %v23 = vld [vmem:[%s0 + $0x20] sm:$0xf]
  %v24 = vld [vmem:[%s0 + $0x24] sm:$0xf]
  %v25 = vld [vmem:[%s0 + $0x28] sm:$0xf]
  %v26 = vld [vmem:[%s0 + $0x2c] sm:$0xf]
  %v27 = vld [vmem:[%s0 + $0x30] sm:$0xf]
  %v28 = vld [vmem:[%s0 + $0x34] sm:$0xf]
  %v29 = vld [vmem:[%s0 + $0x38] sm:$0xf]
  %v30 = vld [vmem:[%s0 + $0x3c] sm:$0xf]
  %v31 = vld [vmem:[%s1] sm:$0xf]
  %v32 = vld [vmem:[%s1 + $0x4] sm:$0xf]
  %v33 = vld [vmem:[%s1 + $0x8] sm:$0xf]
  %v34 = vld [vmem:[%s1 + $0xc] sm:$0xf]
  %v35 = vld [vmem:[%s1 + $0x10] sm:$0xf]
  %v36 = vld [vmem:[%s1 + $0x14] sm:$0xf]
  %v37 = vld [vmem:[%s1 + $0x18] sm:$0xf]
  %v38 = vld [vmem:[%s1 + $0x1c] sm:$0xf]
  %v39 = vld [vmem:[%s1 + $0x20] sm:$0xf]
  %v40 = vld [vmem:[%s1 + $0x24] sm:$0xf]
  %v41 = vld [vmem:[%s1 + $0x28] sm:$0xf]
  %v42 = vld [vmem:[%s1 + $0x2c] sm:$0xf]
  %v43 = vld [vmem:[%s1 + $0x30] sm:$0xf]
  %v44 = vld [vmem:[%s1 + $0x34] sm:$0xf]
  %v45 = vld [vmem:[%s1 + $0x38] sm:$0xf]
  %v46 = vld [vmem:[%s1 + $0x3c] sm:$0xf]
  %v47 = vld [vmem:[%s2] sm:$0x1]
  %v49 = vlaneseq
  %v50 = vshrl.u32 %v49, 7
  %v51 = vsub.s32 0, %v50
  %v52 = vrot.slane %v47, %v51
  %v70 = vunpack.c.l.b16 %v15
  %v71 = vunpack.c.l.b16 %v16
  %v72 = vunpack.c.l.b16 %v17
  %v73 = vunpack.c.l.b16 %v18
  %v74 = vunpack.c.l.b16 %v19
  %v75 = vunpack.c.l.b16 %v20
  %v76 = vunpack.c.l.b16 %v21
  %v77 = vunpack.c.l.b16 %v22
  %v78 = vunpack.c.l.b16 %v23
  %v79 = vunpack.c.l.b16 %v24
  %v80 = vunpack.c.l.b16 %v25
  %v81 = vunpack.c.l.b16 %v26
  %v82 = vunpack.c.l.b16 %v27
  %v83 = vunpack.c.l.b16 %v28
  %v84 = vunpack.c.l.b16 %v29
  %v85 = vunpack.c.l.b16 %v30
  %v86 = vpack.c.b16 %v71, %v70
  %v87 = vpack.c.b16 %v73, %v72
  %v88 = vpack.c.b16 %v75, %v74
  %v89 = vpack.c.b16 %v77, %v76
  %v90 = vpack.c.b16 %v79, %v78
  %v91 = vpack.c.b16 %v81, %v80
  %v92 = vpack.c.b16 %v83, %v82
  %v93 = vpack.c.b16 %v85, %v84
  %v118 = vunpack.c.l.b16 %v31
  %v119 = vunpack.c.l.b16 %v32
  %v120 = vunpack.c.l.b16 %v33
  %v121 = vunpack.c.l.b16 %v34
  %v122 = vunpack.c.l.b16 %v35
  %v123 = vunpack.c.l.b16 %v36
  %v124 = vunpack.c.l.b16 %v37
  %v125 = vunpack.c.l.b16 %v38
  %v126 = vunpack.c.l.b16 %v39
  %v127 = vunpack.c.l.b16 %v40
  %v128 = vunpack.c.l.b16 %v41
  %v129 = vunpack.c.l.b16 %v42
  %v130 = vunpack.c.l.b16 %v43
  %v131 = vunpack.c.l.b16 %v44
  %v132 = vunpack.c.l.b16 %v45
  %v133 = vunpack.c.l.b16 %v46
  %v134 = vpack.c.b16 %v119, %v118
  %v135 = vpack.c.b16 %v121, %v120
  %v136 = vpack.c.b16 %v123, %v122
  %v137 = vpack.c.b16 %v125, %v124
  %v138 = vpack.c.b16 %v127, %v126
  %v139 = vpack.c.b16 %v129, %v128
  %v140 = vpack.c.b16 %v131, %v130
  %v141 = vpack.c.b16 %v133, %v132
  %150 = vmatprep.subr.bf16.mxu0 0
  %151 = vmatpush1.bf16.msra.mxu0 %v141
  %152 = vmatprep.subr.bf16.mxu0 0
  %153 = vmatpush1.bf16.msra.mxu0 %v140
  %154 = vmatprep.subr.bf16.mxu0 0
  %155 = vmatpush1.bf16.msra.mxu0 %v139
  %156 = vmatprep.subr.bf16.mxu0 0
  %157 = vmatpush1.bf16.msra.mxu0 %v138
  %158 = vmatprep.subr.bf16.mxu0 0
  %159 = vmatpush1.bf16.msra.mxu0 %v137
  %160 = vmatprep.subr.bf16.mxu0 0
  %161 = vmatpush1.bf16.msra.mxu0 %v136
  %162 = vmatprep.subr.bf16.mxu0 0
  %163 = vmatpush1.bf16.msra.mxu0 %v135
  %164 = vmatprep.subr.bf16.mxu0 0
  %165 = vmatpush1.bf16.msra.mxu0 %v134
  %166 = vmatprep.subr.bf16.mxu0 0
  %167 = vmatpush2.bf16.msra.mxu0 0
  %168 = vmatprep.subr.bf16.mxu0 0
  %169 = vmatpush2.bf16.msra.mxu0 0
  %170 = vmatprep.subr.bf16.mxu0 0
  %171 = vmatpush2.bf16.msra.mxu0 0
  %172 = vmatprep.subr.bf16.mxu0 0
  %173 = vmatpush2.bf16.msra.mxu0 0
  %174 = vmatprep.subr.bf16.mxu0 0
  %175 = vmatpush2.bf16.msra.mxu0 0
  %176 = vmatprep.subr.bf16.mxu0 0
  %177 = vmatpush2.bf16.msra.mxu0 0
  %178 = vmatprep.subr.bf16.mxu0 0
  %179 = vmatpush2.bf16.msra.mxu0 0
  %180 = vmatprep.subr.bf16.mxu0 0
  %181 = vmatpush2.bf16.msra.mxu0 0
  %182 = vmatprep.mubr.bf16.mxu0 0
  %183 = vmatmul.mubr.bf16.gmra.mxu0 %v86
  %v184 = vpop.f32.mrf.mxu0
  %v185 = vadd.f32 %v52, %v184
  %v186 = vpop.f32.mrf.mxu0
  %v187 = vpop.f32.mrf.mxu0
  %v188 = vadd.f32 %v52, %v187
  %v189 = vpop.f32.mrf.mxu0
  %190 = vmatprep.mubr.bf16.mxu0 0
  %191 = vmatmul.mubr.bf16.gmra.mxu0 %v87
  %v192 = vpop.f32.mrf.mxu0
  %v193 = vadd.f32 %v52, %v192
  %v194 = vpop.f32.mrf.mxu0
  %v195 = vpop.f32.mrf.mxu0
  %v196 = vadd.f32 %v52, %v195
  %v197 = vpop.f32.mrf.mxu0
  %198 = vmatprep.mubr.bf16.mxu0 0
  %199 = vmatmul.mubr.bf16.gmra.mxu0 %v88
  %v200 = vpop.f32.mrf.mxu0
  %v201 = vadd.f32 %v52, %v200
  %v202 = vpop.f32.mrf.mxu0
  %v203 = vpop.f32.mrf.mxu0
  %v204 = vadd.f32 %v52, %v203
  %v205 = vpop.f32.mrf.mxu0
  %206 = vmatprep.mubr.bf16.mxu0 0
  %207 = vmatmul.mubr.bf16.gmra.mxu0 %v89
  %v208 = vpop.f32.mrf.mxu0
  %v209 = vadd.f32 %v52, %v208
  %v210 = vpop.f32.mrf.mxu0
  %v211 = vpop.f32.mrf.mxu0
  %v212 = vadd.f32 %v52, %v211
  %v213 = vpop.f32.mrf.mxu0
  %214 = vmatprep.mubr.bf16.mxu0 0
  %215 = vmatmul.mubr.bf16.gmra.mxu0 %v90
  %v216 = vpop.f32.mrf.mxu0
  %v217 = vadd.f32 %v52, %v216
  %v218 = vpop.f32.mrf.mxu0
  %v219 = vpop.f32.mrf.mxu0
  %v220 = vadd.f32 %v52, %v219
  %v221 = vpop.f32.mrf.mxu0
  %222 = vmatprep.mubr.bf16.mxu0 0
  %223 = vmatmul.mubr.bf16.gmra.mxu0 %v91
  %v224 = vpop.f32.mrf.mxu0
  %v225 = vadd.f32 %v52, %v224
  %v226 = vpop.f32.mrf.mxu0
  %v227 = vpop.f32.mrf.mxu0
  %v228 = vadd.f32 %v52, %v227
  %v229 = vpop.f32.mrf.mxu0
  %230 = vmatprep.mubr.bf16.mxu0 0
  %231 = vmatmul.mubr.bf16.gmra.mxu0 %v92
  %v232 = vpop.f32.mrf.mxu0
  %v233 = vadd.f32 %v52, %v232
  %v234 = vpop.f32.mrf.mxu0
  %v235 = vpop.f32.mrf.mxu0
  %v236 = vadd.f32 %v52, %v235
  %v237 = vpop.f32.mrf.mxu0
  %238 = vmatprep.mubr.bf16.mxu0 0
  %239 = vmatmul.mubr.bf16.gmra.mxu0 %v93
  %v240 = vpop.f32.mrf.mxu0
  %v241 = vadd.f32 %v52, %v240
  %v242 = vpop.f32.mrf.mxu0
  %v243 = vpop.f32.mrf.mxu0
  %v244 = vadd.f32 %v52, %v243
  %v245 = vpop.f32.mrf.mxu0
  %246 = vdwg.mxu0
  %247 = vst [vmem:[%s3] sm:$0xff] %v185
  %248 = vst [vmem:[%s3 + $0x8] sm:$0xff] %v188
  %249 = vst [vmem:[%s3 + $0x10] sm:$0xff] %v193
  %250 = vst [vmem:[%s3 + $0x18] sm:$0xff] %v196
  %251 = vst [vmem:[%s3 + $0x20] sm:$0xff] %v201
  %252 = vst [vmem:[%s3 + $0x28] sm:$0xff] %v204
  %253 = vst [vmem:[%s3 + $0x30] sm:$0xff] %v209
  %254 = vst [vmem:[%s3 + $0x38] sm:$0xff] %v212
  %255 = vst [vmem:[%s3 + $0x40] sm:$0xff] %v217
  %256 = vst [vmem:[%s3 + $0x48] sm:$0xff] %v220
  %257 = vst [vmem:[%s3 + $0x50] sm:$0xff] %v225
  %258 = vst [vmem:[%s3 + $0x58] sm:$0xff] %v228
  %259 = vst [vmem:[%s3 + $0x60] sm:$0xff] %v233
  %260 = vst [vmem:[%s3 + $0x68] sm:$0xff] %v236
  %261 = vst [vmem:[%s3 + $0x70] sm:$0xff] %v241
  %262 = vst [vmem:[%s3 + $0x78] sm:$0xff] %v244
  // Predicated region
  $region14: #{darknet_forward.13} parent=0 // pred_check
    _
  $region15: #{darknet_forward.13} parent=0 // pred_check_branch
    %264 = sbr.rel (0) target = $region17
  $region16: #{darknet_forward.13} parent=0 // pred_region
    _
  $region17: #{darknet_forward.13} parent=0 // pred_fallthru
    _
  // Predicated region
  $region18: #{darknet_forward.13} parent=0 // pred_check
    _
  $region19: #{darknet_forward.13} parent=0 // pred_check_branch
    %266 = sbr.rel (0) target = $region21
  $region20: #{darknet_forward.13} parent=0 // pred_region
    _
  $region21: #{darknet_forward.13} parent=0 // pred_fallthru
    _

</llo_original>
